<compile_context>
chip_gen: v6e
topology: v6e:2x2x1
jax: 0.10.0
libtpu: 0.0.40
codegen_flags: <defaults>
</compile_context>

<pallas_src>
import functools
import math

import jax
import jax.numpy as jnp
from jax.experimental import pallas as pl
from jax.experimental.pallas import tpu as pltpu

NEG_SLOPE = 0.01   # nn.LeakyReLU() default
BN_EPS = 1e-5      # nn.BatchNorm1d default

# Emo18 architecture constants.
C1, C1P, C2, C3 = 64, 128, 128, 256          # C1 zero-padded to 128 (lane-dense)
K1, K2, K3 = 8, 6, 6
PAD1, PAD2, PAD3 = 3, 2, 2
P1, P2, P3 = 10, 8, 8

G1 = 64                    # pool windows per layer-1 grid step (multiple of 16)
CH1 = G1 * P1              # layer-1 conv rows per grid step
BASE = 16                  # leading rows reserved in the x2 scratch: >= PAD2 and a
                           # multiple of the bf16 sublane tile (16) so every
                           # per-chunk pooled-row store is tile-aligned.
MXU_DTYPE = jnp.bfloat16   # layer-2/3 matmul operand dtype (accumulation is f32)

LAYERS = (
    dict(c_in=1,   c_out=64,  k=K1, pad=PAD1, pool=P1),
    dict(c_in=64,  c_out=128, k=K2, pad=PAD2, pool=P2),
    dict(c_in=128, c_out=256, k=K3, pad=PAD3, pool=P3),
)


def _dims(T):
    """Static per-layer sizes (PyTorch Conv1d / MaxPool1d semantics)."""
    L_out1 = T + 2 * PAD1 - K1 + 1
    L_pool1 = (L_out1 - P1) // P1 + 1
    assert L_pool1 >= 1, "input too short for emo18"
    NCH = -(-L_pool1 // G1)                   # ceil: layer-1 grid chunks
    L_out2 = L_pool1 + 2 * PAD2 - K2 + 1
    L_pool2 = (L_out2 - P2) // P2 + 1
    assert L_pool2 >= 1
    L_out3 = L_pool2 + 2 * PAD3 - K3 + 1
    L_pool3 = (L_out3 - P3) // P3 + 1
    assert L_pool3 >= 1
    return dict(L_use1=L_pool1 * P1, L_pool1=L_pool1, NCH=NCH,
                L_use2=L_pool2 * P2, L_pool2=L_pool2,
                L_use3=L_pool3 * P3, L_pool3=L_pool3)


def _emo18_kernel(xc_ref, w1_ref, t1_ref, w2_ref, t2_ref, w3_ref, t3_ref,
                  o_ref, x2_ref, x3_ref, *,
                  NCH, L_pool1, L_use2, L_pool2, L_use3, L_pool3):
    """Fused emo18 forward for one batch element, chunked over layer-1 rows.

    xc_ref : (CH1, K1)       im2col'd layer-1 input chunk, PHASE-MAJOR:
                             rows [p*G1, (p+1)*G1) are pool-phase p of the
                             chunk's G1 pool windows.
    w1_ref : (K1, C1P)  f32  layer-1 weight (BN scale folded, C_out padded)
    t1_ref : (1, C1P)   f32  layer-1 BN shift (+ conv bias)
    w2_ref : (K2, C1P, C2) bf16  layer-2 weight (BN folded, C_in zero-padded)
    w3_ref : (K3, C2, C3)  bf16  layer-3 weight (BN folded)
    o_ref  : (1, L_pool3, C3) f32
    x2_ref : persistent scratch (bf16): layer-2 zero-padded input, data rows
             start at BASE (leading conv pad lives at rows [BASE-PAD2, BASE)).
    x3_ref : scratch (bf16): layer-3 zero-padded input.
    """
    c = pl.program_id(1)

    @pl.when(c == 0)
    def _():
        # Only the leading pad rows need zeroing: interior rows are fully
        # overwritten by the chunks and the trailing pad is (re)zeroed in the
        # epilogue.  One aligned (BASE, 128) tile store instead of an O(T) sweep.
        x2_ref[pl.ds(0, BASE), :] = jnp.zeros((BASE, C1P), x2_ref.dtype)

    # ---- layer 1: Conv1d(1,64,8) + BN + LeakyReLU + MaxPool1d(10,10) -------
    # Pool phase p covers conv-output rows {g*P1 + p}; max over phases == the
    # max-pool, kept entirely in registers.  Each phase is one small MXU matmul
    # (contraction K1=8); the VPU only does the bias add, LeakyReLU and max.
    w1 = w1_ref[...]                                   # (K1, C1P) f32
    t1 = t1_ref[...]                                   # (1, C1P)  f32
    m1 = None
    for p in range(P1):                                # static unroll (10)
        xp = xc_ref[pl.ds(p * G1, G1), :]              # (G1, K1) contiguous
        y = jnp.dot(xp, w1, preferred_element_type=jnp.float32) + t1
        y = jnp.where(y >= 0, y, NEG_SLOPE * y)        # LeakyReLU
        m1 = y if m1 is None else jnp.maximum(m1, y)
    # Aligned pooled-row store (start = BASE + c*G1 is a multiple of 16).
    i0 = pl.multiple_of(BASE + c * G1, 16)
    x2_ref[pl.ds(i0, G1), :] = m1.astype(x2_ref.dtype)

    # ---- layers 2 + 3: run once, after the last layer-1 chunk --------------
    @pl.when(c == NCH - 1)
    def _():
        # The last chunk may contain padded (garbage) pool windows; restore the
        # trailing conv-padding rows of the layer-2 input.
        x2_ref[pl.ds(BASE + L_pool1, PAD2), :] = jnp.zeros(
            (PAD2, C1P), x2_ref.dtype)

        # layer 2: Conv1d(64->128, k=6) + BN + LeakyReLU + MaxPool1d(8,8)
        # Tap k of conv output row j reads x2 row (BASE - PAD2) + j + k.
        acc2 = jnp.zeros((L_use2, C2), jnp.float32)
        for k in range(K2):                            # MXU, bf16 x bf16 -> f32
            acc2 = acc2 + jnp.dot(
                x2_ref[pl.ds(k + BASE - PAD2, L_use2), :], w2_ref[k],
                preferred_element_type=jnp.float32)
        y2 = acc2 + t2_ref[...]
        y2 = jnp.where(y2 >= 0, y2, NEG_SLOPE * y2)
        # In-register pooling: P2 == 8 == sublane count -> layout-free reshape
        # + one sublane reduce per vreg (no pre-pool scratch round trip).
        m2 = jnp.max(y2.reshape(L_pool2, P2, C2), axis=1)

        # layer-3 zero-padded input (small: L_pool2 + 2*PAD3 rows).
        x3_ref[...] = jnp.zeros_like(x3_ref)
        x3_ref[pl.ds(PAD3, L_pool2), :] = m2.astype(x3_ref.dtype)

        # layer 3: Conv1d(128->256, k=6) + BN + LeakyReLU + MaxPool1d(8,8)
        acc3 = jnp.zeros((L_use3, C3), jnp.float32)
        for k in range(K3):                            # MXU, contraction = 128
            acc3 = acc3 + jnp.dot(x3_ref[pl.ds(k, L_use3), :], w3_ref[k],
                                  preferred_element_type=jnp.float32)
        y3 = acc3 + t3_ref[...]
        y3 = jnp.where(y3 >= 0, y3, NEG_SLOPE * y3)
        m3 = jnp.max(y3.reshape(L_pool3, P3, C3), axis=1)
        o_ref[0] = m3.astype(o_ref.dtype)


def audio_model_forward(x_ncw, params):
    """AudioModel('emo18').forward — input/output in PyTorch NCW layout."""
    B, c_in, T = x_ncw.shape
    assert c_in == 1
    d = _dims(T)
    NCH = d["NCH"]

    # ---- layer-1 im2col (only rows feeding surviving pool windows), padded to
    #      NCH*CH1 rows, then reordered PHASE-MAJOR inside each G1-window chunk
    #      so the kernel reads each pool phase with a contiguous (G1, K1) slice.
    x = x_ncw[:, 0, :].astype(jnp.float32)
    x_pad = jnp.pad(x, ((0, 0), (PAD1, PAD1)))
    cols = [x_pad[:, k:k + d["L_use1"]] for k in range(K1)]
    x_col = jnp.stack(cols, axis=-1)                              # (B, L_use1, K1)
    x_col = jnp.pad(x_col, ((0, 0), (0, NCH * CH1 - d["L_use1"]), (0, 0)))
    x_col = x_col.reshape(B, NCH, G1, P1, K1).transpose(0, 1, 3, 2, 4)
    x_col = x_col.reshape(B * NCH * CH1, K1)

    # ---- fold BN scale into conv weights; transpose to (K, Cin, Cout);
    #      zero-pad layer-1 channels 64 -> 128 (lane-dense).  Layer-2/3 weights
    #      are bf16 (MXU-native); layer 1 stays f32 (precision anchor).
    w1 = params[0]["w"] * params[0]["scale"][:, None, None]       # (64,1,8)
    w2 = params[1]["w"] * params[1]["scale"][:, None, None]       # (128,64,6)
    w3 = params[2]["w"] * params[2]["scale"][:, None, None]       # (256,128,6)
    w1c = jnp.pad(jnp.transpose(w1[:, 0, :], (1, 0)),
                  ((0, 0), (0, C1P - C1))).astype(jnp.float32)    # (8,128)
    t1c = jnp.pad(params[0]["shift"],
                  (0, C1P - C1)).reshape(1, C1P).astype(jnp.float32)
    w2c = jnp.pad(jnp.transpose(w2, (2, 1, 0)),
                  ((0, 0), (0, C1P - C1), (0, 0))).astype(MXU_DTYPE)  # (6,128,128)
    t2c = params[1]["shift"].reshape(1, C2).astype(jnp.float32)
    w3c = jnp.transpose(w3, (2, 1, 0)).astype(MXU_DTYPE)          # (6,128,256)
    t3c = params[2]["shift"].reshape(1, C3).astype(jnp.float32)

    kernel = functools.partial(
        _emo18_kernel, NCH=NCH, L_pool1=d["L_pool1"],
        L_use2=d["L_use2"], L_pool2=d["L_pool2"],
        L_use3=d["L_use3"], L_pool3=d["L_pool3"])

    out_nlc = pl.pallas_call(
        kernel,
        out_shape=jax.ShapeDtypeStruct((B, d["L_pool3"], C3), jnp.float32),
        grid_spec=pltpu.PrefetchScalarGridSpec(
            num_scalar_prefetch=0,
            grid=(B, NCH),
            in_specs=[
                pl.BlockSpec((CH1, K1), lambda b, c: (b * NCH + c, 0)),
                pl.BlockSpec((K1, C1P), lambda b, c: (0, 0)),
                pl.BlockSpec((1, C1P), lambda b, c: (0, 0)),
                pl.BlockSpec((K2, C1P, C2), lambda b, c: (0, 0, 0)),
                pl.BlockSpec((1, C2), lambda b, c: (0, 0)),
                pl.BlockSpec((K3, C2, C3), lambda b, c: (0, 0, 0)),
                pl.BlockSpec((1, C3), lambda b, c: (0, 0)),
            ],
            out_specs=pl.BlockSpec((1, d["L_pool3"], C3),
                                   lambda b, c: (b, 0, 0)),
            scratch_shapes=[
                pltpu.VMEM((BASE + NCH * G1 + PAD2, C1P), MXU_DTYPE),      # x2
                pltpu.VMEM((PAD3 + d["L_pool2"] + PAD3, C2), MXU_DTYPE),   # x3
            ]),
        compiler_params=pltpu.CompilerParams(
            dimension_semantics=("parallel", "arbitrary"),
            vmem_limit_bytes=32 * 1024 * 1024),
    )(x_col, w1c, t1c, w2c, t2c, w3c, t3c)

    return jnp.transpose(out_nlc, (0, 2, 1))              # NLC -> NCW


def init_params(key):
    """Deterministic params matching Base.reset_parameters / BN defaults."""
    params = []
    for cfg in LAYERS:
        key, kw = jax.random.split(key)
        fan_in = cfg["c_in"] * cfg["k"]
        bound = math.sqrt(6.0 / fan_in)     # kaiming_uniform_ (gain=sqrt(2))
        w = jax.random.uniform(kw, (cfg["c_out"], cfg["c_in"], cfg["k"]),
                               jnp.float32, -bound, bound)
        b = jnp.zeros((cfg["c_out"],), jnp.float32)          # conv bias = 0
        gamma = jnp.ones((cfg["c_out"],), jnp.float32)       # BN init
        beta = jnp.zeros((cfg["c_out"],), jnp.float32)
        r_mean = jnp.zeros((cfg["c_out"],), jnp.float32)
        r_var = jnp.ones((cfg["c_out"],), jnp.float32)
        scale = gamma / jnp.sqrt(r_var + BN_EPS)
        shift = beta + (b - r_mean) * scale
        params.append(dict(w=w, scale=scale, shift=shift))
    return params


def reference_forward(x_ncw, params):
    """Pure-JAX f32 reference (NCW) for correctness checking."""
    x = x_ncw
    for cfg, p in zip(LAYERS, params):
        y = jax.lax.conv_general_dilated(
            x, p["w"], window_strides=(1,),
            padding=[(cfg["pad"], cfg["pad"])],
            dimension_numbers=("NCH", "OIH", "NCH"),
            precision=jax.lax.Precision.HIGHEST)
        y = y * p["scale"][None, :, None] + p["shift"][None, :, None]
        y = jnp.where(y >= 0, y, NEG_SLOPE * y)
        y = jax.lax.reduce_window(y, -jnp.inf, jax.lax.max,
                                  (1, 1, cfg["pool"]), (1, 1, cfg["pool"]),
                                  "VALID")
        x = y
    return x


if __name__ == "__main__":
    key = jax.random.PRNGKey(0)
    kx, kp = jax.random.split(key)
    B, T = 2, 801                                # small raw-audio frame
    x = jax.random.normal(kx, (B, 1, T), jnp.float32)   # NCW, like PyTorch
    params = init_params(kp)

    fwd = jax.jit(audio_model_forward)
    out = jax.block_until_ready(fwd(x, params))

    ref = reference_forward(x, params)
    assert out.shape == (B, 256, 1), out.shape   # (B, num_features, L_final)
    err = float(jnp.max(jnp.abs(out - ref)))
    # Tolerance reflects bf16 MXU operands (f32 accumulation) in layers 2/3
    # vs. the all-f32 reference.
    assert jnp.allclose(out, ref, atol=5e-2, rtol=5e-2), f"max abs err {err}"
    print("KERNEL_OK")
</pallas_src>

<mosaic_0001>
module attributes {stable_mosaic.version = 11 : i64} {
  func.func @_emo18_kernel(%arg0: i32, %arg1: i32, %arg2: memref<640x8xf32, #tpu.memory_space<vmem>>, %arg3: memref<8x128xf32, #tpu.memory_space<vmem>>, %arg4: memref<1x128xf32, #tpu.memory_space<vmem>>, %arg5: memref<6x128x128xbf16, #tpu.memory_space<vmem>>, %arg6: memref<1x128xf32, #tpu.memory_space<vmem>>, %arg7: memref<6x128x256xbf16, #tpu.memory_space<vmem>>, %arg8: memref<1x256xf32, #tpu.memory_space<vmem>>, %arg9: memref<1x1x256xf32, #tpu.memory_space<vmem>>, %arg10: memref<146x128xbf16, #tpu.memory_space<vmem>>, %arg11: memref<13x128xbf16, #tpu.memory_space<vmem>>) attributes {dimension_semantics = [#tpu.dimension_semantics<parallel>, #tpu.dimension_semantics<arbitrary>], iteration_bounds = array<i64: 2, 2>, scalar_prefetch = 0 : i64, scratch_operands = 2 : i64, tpu.core_type = #tpu.core_type<tc>, window_params = [{transform_indices = @transform_0, window_bounds = array<i64: 640, 8>}, {pipeline_mode = #tpu.pipeline_mode<synchronous>, transform_indices = @transform_1, window_bounds = array<i64: 8, 128>}, {pipeline_mode = #tpu.pipeline_mode<synchronous>, transform_indices = @transform_2, window_bounds = array<i64: 1, 128>}, {pipeline_mode = #tpu.pipeline_mode<synchronous>, transform_indices = @transform_3, window_bounds = array<i64: 6, 128, 128>}, {pipeline_mode = #tpu.pipeline_mode<synchronous>, transform_indices = @transform_4, window_bounds = array<i64: 1, 128>}, {pipeline_mode = #tpu.pipeline_mode<synchronous>, transform_indices = @transform_5, window_bounds = array<i64: 6, 128, 256>}, {pipeline_mode = #tpu.pipeline_mode<synchronous>, transform_indices = @transform_6, window_bounds = array<i64: 1, 256>}, {transform_indices = @transform_7, window_bounds = array<i64: 1, 1, 256>}]} {
    %c0_i32 = arith.constant 0 : i32
    %0 = arith.cmpi eq, %arg1, %c0_i32 : i32
    %1 = arith.extui %0 : i1 to i32
    %c0_i32_0 = arith.constant 0 : i32
    %2 = arith.cmpi ne, %1, %c0_i32_0 : i32
    scf.if %2 {
      %cst_46 = arith.constant 0.000000e+00 : bf16
      %113 = vector.broadcast %cst_46 : bf16 to vector<16x128xbf16>
      %c0_47 = arith.constant 0 : index
      %c0_48 = arith.constant 0 : index
      %114 = vector.load %arg10[%c0_47, %c0_48] : memref<146x128xbf16, #tpu.memory_space<vmem>>, vector<16x128xbf16>
      tpu.vector_store %arg10[%c0_47, %c0_48], %113 {strides = array<i32>} : memref<146x128xbf16, #tpu.memory_space<vmem>>, vector<16x128xbf16>,
    } else {
    }
    %c0 = arith.constant 0 : index
    %c0_1 = arith.constant 0 : index
    %3 = vector.load %arg3[%c0, %c0_1] : memref<8x128xf32, #tpu.memory_space<vmem>>, vector<8x128xf32>
    %c0_2 = arith.constant 0 : index
    %c0_3 = arith.constant 0 : index
    %4 = vector.load %arg4[%c0_2, %c0_3] : memref<1x128xf32, #tpu.memory_space<vmem>>, vector<1x128xf32>
    %c0_4 = arith.constant 0 : index
    %c0_5 = arith.constant 0 : index
    %5 = vector.load %arg2[%c0_4, %c0_5] : memref<640x8xf32, #tpu.memory_space<vmem>>, vector<64x8xf32>
    %cst = arith.constant dense<0.000000e+00> : vector<64x128xf32>
    %6 = tpu.matmul %5, %3, %cst {dimension_numbers = #tpu.dot_dimension_numbers<[1], [0], [0], [1], [0, 0, 1, 1], [], []>} : vector<64x8xf32>, vector<8x128xf32>, vector<64x128xf32> -> vector<64x128xf32>
    %7 = vector.broadcast %4 : vector<1x128xf32> to vector<64x128xf32>
    %8 = arith.addf %6, %7 : vector<64x128xf32>
    %cst_6 = arith.constant 0.000000e+00 : f32
    %9 = vector.broadcast %cst_6 : f32 to vector<64x128xf32>
    %10 = arith.cmpf oge, %8, %9 : vector<64x128xf32>
    %cst_7 = arith.constant 0.00999999977 : f32
    %11 = vector.broadcast %cst_7 : f32 to vector<64x128xf32>
    %12 = arith.mulf %11, %8 : vector<64x128xf32>
    %13 = arith.select %10, %8, %12 : vector<64x128xi1>, vector<64x128xf32>
    %c64 = arith.constant 64 : index
    %c0_8 = arith.constant 0 : index
    %14 = vector.load %arg2[%c64, %c0_8] : memref<640x8xf32, #tpu.memory_space<vmem>>, vector<64x8xf32>
    %cst_9 = arith.constant dense<0.000000e+00> : vector<64x128xf32>
    %15 = tpu.matmul %14, %3, %cst_9 {dimension_numbers = #tpu.dot_dimension_numbers<[1], [0], [0], [1], [0, 0, 1, 1], [], []>} : vector<64x8xf32>, vector<8x128xf32>, vector<64x128xf32> -> vector<64x128xf32>
    %16 = vector.broadcast %4 : vector<1x128xf32> to vector<64x128xf32>
    %17 = arith.addf %15, %16 : vector<64x128xf32>
    %cst_10 = arith.constant 0.000000e+00 : f32
    %18 = vector.broadcast %cst_10 : f32 to vector<64x128xf32>
    %19 = arith.cmpf oge, %17, %18 : vector<64x128xf32>
    %cst_11 = arith.constant 0.00999999977 : f32
    %20 = vector.broadcast %cst_11 : f32 to vector<64x128xf32>
    %21 = arith.mulf %20, %17 : vector<64x128xf32>
    %22 = arith.select %19, %17, %21 : vector<64x128xi1>, vector<64x128xf32>
    %23 = arith.maximumf %13, %22 : vector<64x128xf32>
    %c128 = arith.constant 128 : index
    %c0_12 = arith.constant 0 : index
    %24 = vector.load %arg2[%c128, %c0_12] : memref<640x8xf32, #tpu.memory_space<vmem>>, vector<64x8xf32>
    %cst_13 = arith.constant dense<0.000000e+00> : vector<64x128xf32>
    %25 = tpu.matmul %24, %3, %cst_13 {dimension_numbers = #tpu.dot_dimension_numbers<[1], [0], [0], [1], [0, 0, 1, 1], [], []>} : vector<64x8xf32>, vector<8x128xf32>, vector<64x128xf32> -> vector<64x128xf32>
    %26 = vector.broadcast %4 : vector<1x128xf32> to vector<64x128xf32>
    %27 = arith.addf %25, %26 : vector<64x128xf32>
    %cst_14 = arith.constant 0.000000e+00 : f32
    %28 = vector.broadcast %cst_14 : f32 to vector<64x128xf32>
    %29 = arith.cmpf oge, %27, %28 : vector<64x128xf32>
    %cst_15 = arith.constant 0.00999999977 : f32
    %30 = vector.broadcast %cst_15 : f32 to vector<64x128xf32>
    %31 = arith.mulf %30, %27 : vector<64x128xf32>
    %32 = arith.select %29, %27, %31 : vector<64x128xi1>, vector<64x128xf32>
    %33 = arith.maximumf %23, %32 : vector<64x128xf32>
    %c192 = arith.constant 192 : index
    %c0_16 = arith.constant 0 : index
    %34 = vector.load %arg2[%c192, %c0_16] : memref<640x8xf32, #tpu.memory_space<vmem>>, vector<64x8xf32>
    %cst_17 = arith.constant dense<0.000000e+00> : vector<64x128xf32>
    %35 = tpu.matmul %34, %3, %cst_17 {dimension_numbers = #tpu.dot_dimension_numbers<[1], [0], [0], [1], [0, 0, 1, 1], [], []>} : vector<64x8xf32>, vector<8x128xf32>, vector<64x128xf32> -> vector<64x128xf32>
    %36 = vector.broadcast %4 : vector<1x128xf32> to vector<64x128xf32>
    %37 = arith.addf %35, %36 : vector<64x128xf32>
    %cst_18 = arith.constant 0.000000e+00 : f32
    %38 = vector.broadcast %cst_18 : f32 to vector<64x128xf32>
    %39 = arith.cmpf oge, %37, %38 : vector<64x128xf32>
    %cst_19 = arith.constant 0.00999999977 : f32
    %40 = vector.broadcast %cst_19 : f32 to vector<64x128xf32>
    %41 = arith.mulf %40, %37 : vector<64x128xf32>
    %42 = arith.select %39, %37, %41 : vector<64x128xi1>, vector<64x128xf32>
    %43 = arith.maximumf %33, %42 : vector<64x128xf32>
    %c256 = arith.constant 256 : index
    %c0_20 = arith.constant 0 : index
    %44 = vector.load %arg2[%c256, %c0_20] : memref<640x8xf32, #tpu.memory_space<vmem>>, vector<64x8xf32>
    %cst_21 = arith.constant dense<0.000000e+00> : vector<64x128xf32>
    %45 = tpu.matmul %44, %3, %cst_21 {dimension_numbers = #tpu.dot_dimension_numbers<[1], [0], [0], [1], [0, 0, 1, 1], [], []>} : vector<64x8xf32>, vector<8x128xf32>, vector<64x128xf32> -> vector<64x128xf32>
    %46 = vector.broadcast %4 : vector<1x128xf32> to vector<64x128xf32>
    %47 = arith.addf %45, %46 : vector<64x128xf32>
    %cst_22 = arith.constant 0.000000e+00 : f32
    %48 = vector.broadcast %cst_22 : f32 to vector<64x128xf32>
    %49 = arith.cmpf oge, %47, %48 : vector<64x128xf32>
    %cst_23 = arith.constant 0.00999999977 : f32
    %50 = vector.broadcast %cst_23 : f32 to vector<64x128xf32>
    %51 = arith.mulf %50, %47 : vector<64x128xf32>
    %52 = arith.select %49, %47, %51 : vector<64x128xi1>, vector<64x128xf32>
    %53 = arith.maximumf %43, %52 : vector<64x128xf32>
    %c320 = arith.constant 320 : index
    %c0_24 = arith.constant 0 : index
    %54 = vector.load %arg2[%c320, %c0_24] : memref<640x8xf32, #tpu.memory_space<vmem>>, vector<64x8xf32>
    %cst_25 = arith.constant dense<0.000000e+00> : vector<64x128xf32>
    %55 = tpu.matmul %54, %3, %cst_25 {dimension_numbers = #tpu.dot_dimension_numbers<[1], [0], [0], [1], [0, 0, 1, 1], [], []>} : vector<64x8xf32>, vector<8x128xf32>, vector<64x128xf32> -> vector<64x128xf32>
    %56 = vector.broadcast %4 : vector<1x128xf32> to vector<64x128xf32>
    %57 = arith.addf %55, %56 : vector<64x128xf32>
    %cst_26 = arith.constant 0.000000e+00 : f32
    %58 = vector.broadcast %cst_26 : f32 to vector<64x128xf32>
    %59 = arith.cmpf oge, %57, %58 : vector<64x128xf32>
    %cst_27 = arith.constant 0.00999999977 : f32
    %60 = vector.broadcast %cst_27 : f32 to vector<64x128xf32>
    %61 = arith.mulf %60, %57 : vector<64x128xf32>
    %62 = arith.select %59, %57, %61 : vector<64x128xi1>, vector<64x128xf32>
    %63 = arith.maximumf %53, %62 : vector<64x128xf32>
    %c384 = arith.constant 384 : index
    %c0_28 = arith.constant 0 : index
    %64 = vector.load %arg2[%c384, %c0_28] : memref<640x8xf32, #tpu.memory_space<vmem>>, vector<64x8xf32>
    %cst_29 = arith.constant dense<0.000000e+00> : vector<64x128xf32>
    %65 = tpu.matmul %64, %3, %cst_29 {dimension_numbers = #tpu.dot_dimension_numbers<[1], [0], [0], [1], [0, 0, 1, 1], [], []>} : vector<64x8xf32>, vector<8x128xf32>, vector<64x128xf32> -> vector<64x128xf32>
    %66 = vector.broadcast %4 : vector<1x128xf32> to vector<64x128xf32>
    %67 = arith.addf %65, %66 : vector<64x128xf32>
    %cst_30 = arith.constant 0.000000e+00 : f32
    %68 = vector.broadcast %cst_30 : f32 to vector<64x128xf32>
    %69 = arith.cmpf oge, %67, %68 : vector<64x128xf32>
    %cst_31 = arith.constant 0.00999999977 : f32
    %70 = vector.broadcast %cst_31 : f32 to vector<64x128xf32>
    %71 = arith.mulf %70, %67 : vector<64x128xf32>
    %72 = arith.select %69, %67, %71 : vector<64x128xi1>, vector<64x128xf32>
    %73 = arith.maximumf %63, %72 : vector<64x128xf32>
    %c448 = arith.constant 448 : index
    %c0_32 = arith.constant 0 : index
    %74 = vector.load %arg2[%c448, %c0_32] : memref<640x8xf32, #tpu.memory_space<vmem>>, vector<64x8xf32>
    %cst_33 = arith.constant dense<0.000000e+00> : vector<64x128xf32>
    %75 = tpu.matmul %74, %3, %cst_33 {dimension_numbers = #tpu.dot_dimension_numbers<[1], [0], [0], [1], [0, 0, 1, 1], [], []>} : vector<64x8xf32>, vector<8x128xf32>, vector<64x128xf32> -> vector<64x128xf32>
    %76 = vector.broadcast %4 : vector<1x128xf32> to vector<64x128xf32>
    %77 = arith.addf %75, %76 : vector<64x128xf32>
    %cst_34 = arith.constant 0.000000e+00 : f32
    %78 = vector.broadcast %cst_34 : f32 to vector<64x128xf32>
    %79 = arith.cmpf oge, %77, %78 : vector<64x128xf32>
    %cst_35 = arith.constant 0.00999999977 : f32
    %80 = vector.broadcast %cst_35 : f32 to vector<64x128xf32>
    %81 = arith.mulf %80, %77 : vector<64x128xf32>
    %82 = arith.select %79, %77, %81 : vector<64x128xi1>, vector<64x128xf32>
    %83 = arith.maximumf %73, %82 : vector<64x128xf32>
    %c512 = arith.constant 512 : index
    %c0_36 = arith.constant 0 : index
    %84 = vector.load %arg2[%c512, %c0_36] : memref<640x8xf32, #tpu.memory_space<vmem>>, vector<64x8xf32>
    %cst_37 = arith.constant dense<0.000000e+00> : vector<64x128xf32>
    %85 = tpu.matmul %84, %3, %cst_37 {dimension_numbers = #tpu.dot_dimension_numbers<[1], [0], [0], [1], [0, 0, 1, 1], [], []>} : vector<64x8xf32>, vector<8x128xf32>, vector<64x128xf32> -> vector<64x128xf32>
    %86 = vector.broadcast %4 : vector<1x128xf32> to vector<64x128xf32>
    %87 = arith.addf %85, %86 : vector<64x128xf32>
    %cst_38 = arith.constant 0.000000e+00 : f32
    %88 = vector.broadcast %cst_38 : f32 to vector<64x128xf32>
    %89 = arith.cmpf oge, %87, %88 : vector<64x128xf32>
    %cst_39 = arith.constant 0.00999999977 : f32
    %90 = vector.broadcast %cst_39 : f32 to vector<64x128xf32>
    %91 = arith.mulf %90, %87 : vector<64x128xf32>
    %92 = arith.select %89, %87, %91 : vector<64x128xi1>, vector<64x128xf32>
    %93 = arith.maximumf %83, %92 : vector<64x128xf32>
    %c576 = arith.constant 576 : index
    %c0_40 = arith.constant 0 : index
    %94 = vector.load %arg2[%c576, %c0_40] : memref<640x8xf32, #tpu.memory_space<vmem>>, vector<64x8xf32>
    %cst_41 = arith.constant dense<0.000000e+00> : vector<64x128xf32>
    %95 = tpu.matmul %94, %3, %cst_41 {dimension_numbers = #tpu.dot_dimension_numbers<[1], [0], [0], [1], [0, 0, 1, 1], [], []>} : vector<64x8xf32>, vector<8x128xf32>, vector<64x128xf32> -> vector<64x128xf32>
    %96 = vector.broadcast %4 : vector<1x128xf32> to vector<64x128xf32>
    %97 = arith.addf %95, %96 : vector<64x128xf32>
    %cst_42 = arith.constant 0.000000e+00 : f32
    %98 = vector.broadcast %cst_42 : f32 to vector<64x128xf32>
    %99 = arith.cmpf oge, %97, %98 : vector<64x128xf32>
    %cst_43 = arith.constant 0.00999999977 : f32
    %100 = vector.broadcast %cst_43 : f32 to vector<64x128xf32>
    %101 = arith.mulf %100, %97 : vector<64x128xf32>
    %102 = arith.select %99, %97, %101 : vector<64x128xi1>, vector<64x128xf32>
    %103 = arith.maximumf %93, %102 : vector<64x128xf32>
    %c64_i32 = arith.constant 64 : i32
    %104 = arith.muli %arg1, %c64_i32 : i32
    %c16_i32 = arith.constant 16 : i32
    %105 = arith.addi %c16_i32, %104 : i32
    %106 = tpu.assume_multiple %105, 16 : i32
    %107 = arith.truncf %103 : vector<64x128xf32> to vector<64x128xbf16>
    %108 = arith.index_cast %106 : i32 to index
    %c0_44 = arith.constant 0 : index
    %109 = vector.load %arg10[%108, %c0_44] : memref<146x128xbf16, #tpu.memory_space<vmem>>, vector<64x128xbf16>
    tpu.vector_store %arg10[%108, %c0_44], %107 {strides = array<i32>} : memref<146x128xbf16, #tpu.memory_space<vmem>>, vector<64x128xbf16>,
    %c1_i32 = arith.constant 1 : i32
    %110 = arith.cmpi eq, %arg1, %c1_i32 : i32
    %111 = arith.extui %110 : i1 to i32
    %c0_i32_45 = arith.constant 0 : i32
    %112 = arith.cmpi ne, %111, %c0_i32_45 : i32
    scf.if %112 {
      %cst_46 = arith.constant 0.000000e+00 : bf16
      %113 = vector.broadcast %cst_46 : bf16 to vector<2x128xbf16>
      %c96 = arith.constant 96 : index
      %c0_47 = arith.constant 0 : index
      %114 = vector.load %arg10[%c96, %c0_47] : memref<146x128xbf16, #tpu.memory_space<vmem>>, vector<2x128xbf16>
      tpu.vector_store %arg10[%c96, %c0_47], %113 {strides = array<i32>} : memref<146x128xbf16, #tpu.memory_space<vmem>>, vector<2x128xbf16>,
      %cst_48 = arith.constant 0.000000e+00 : f32
      %115 = vector.broadcast %cst_48 : f32 to vector<72x128xf32>
      %c14 = arith.constant 14 : index
      %c0_49 = arith.constant 0 : index
      %116 = vector.load %arg10[%c14, %c0_49] : memref<146x128xbf16, #tpu.memory_space<vmem>>, vector<72x128xbf16>
      %c0_50 = arith.constant 0 : index
      %c0_51 = arith.constant 0 : index
      %c0_52 = arith.constant 0 : index
      %117 = vector.load %arg5[%c0_50, %c0_51, %c0_52] : memref<6x128x128xbf16, #tpu.memory_space<vmem>>, vector<1x128x128xbf16>
      %118 = vector.shape_cast %117 : vector<1x128x128xbf16> to vector<128x128xbf16>
      %cst_53 = arith.constant dense<0.000000e+00> : vector<72x128xf32>
      %119 = tpu.matmul %116, %118, %cst_53 {dimension_numbers = #tpu.dot_dimension_numbers<[1], [0], [0], [1], [0, 0, 1, 1], [], []>} : vector<72x128xbf16>, vector<128x128xbf16>, vector<72x128xf32> -> vector<72x128xf32>
      %120 = arith.addf %115, %119 : vector<72x128xf32>
      %c15 = arith.constant 15 : index
      %c0_54 = arith.constant 0 : index
      %121 = vector.load %arg10[%c15, %c0_54] : memref<146x128xbf16, #tpu.memory_space<vmem>>, vector<72x128xbf16>
      %c1 = arith.constant 1 : index
      %c0_55 = arith.constant 0 : index
      %c0_56 = arith.constant 0 : index
      %122 = vector.load %arg5[%c1, %c0_55, %c0_56] : memref<6x128x128xbf16, #tpu.memory_space<vmem>>, vector<1x128x128xbf16>
      %123 = vector.shape_cast %122 : vector<1x128x128xbf16> to vector<128x128xbf16>
      %cst_57 = arith.constant dense<0.000000e+00> : vector<72x128xf32>
      %124 = tpu.matmul %121, %123, %cst_57 {dimension_numbers = #tpu.dot_dimension_numbers<[1], [0], [0], [1], [0, 0, 1, 1], [], []>} : vector<72x128xbf16>, vector<128x128xbf16>, vector<72x128xf32> -> vector<72x128xf32>
      %125 = arith.addf %120, %124 : vector<72x128xf32>
      %c16 = arith.constant 16 : index
      %c0_58 = arith.constant 0 : index
      %126 = vector.load %arg10[%c16, %c0_58] : memref<146x128xbf16, #tpu.memory_space<vmem>>, vector<72x128xbf16>
      %c2 = arith.constant 2 : index
      %c0_59 = arith.constant 0 : index
      %c0_60 = arith.constant 0 : index
      %127 = vector.load %arg5[%c2, %c0_59, %c0_60] : memref<6x128x128xbf16, #tpu.memory_space<vmem>>, vector<1x128x128xbf16>
      %128 = vector.shape_cast %127 : vector<1x128x128xbf16> to vector<128x128xbf16>
      %cst_61 = arith.constant dense<0.000000e+00> : vector<72x128xf32>
      %129 = tpu.matmul %126, %128, %cst_61 {dimension_numbers = #tpu.dot_dimension_numbers<[1], [0], [0], [1], [0, 0, 1, 1], [], []>} : vector<72x128xbf16>, vector<128x128xbf16>, vector<72x128xf32> -> vector<72x128xf32>
      %130 = arith.addf %125, %129 : vector<72x128xf32>
      %c17 = arith.constant 17 : index
      %c0_62 = arith.constant 0 : index
      %131 = vector.load %arg10[%c17, %c0_62] : memref<146x128xbf16, #tpu.memory_space<vmem>>, vector<72x128xbf16>
      %c3 = arith.constant 3 : index
      %c0_63 = arith.constant 0 : index
      %c0_64 = arith.constant 0 : index
      %132 = vector.load %arg5[%c3, %c0_63, %c0_64] : memref<6x128x128xbf16, #tpu.memory_space<vmem>>, vector<1x128x128xbf16>
      %133 = vector.shape_cast %132 : vector<1x128x128xbf16> to vector<128x128xbf16>
      %cst_65 = arith.constant dense<0.000000e+00> : vector<72x128xf32>
      %134 = tpu.matmul %131, %133, %cst_65 {dimension_numbers = #tpu.dot_dimension_numbers<[1], [0], [0], [1], [0, 0, 1, 1], [], []>} : vector<72x128xbf16>, vector<128x128xbf16>, vector<72x128xf32> -> vector<72x128xf32>
      %135 = arith.addf %130, %134 : vector<72x128xf32>
      %c18 = arith.constant 18 : index
      %c0_66 = arith.constant 0 : index
      %136 = vector.load %arg10[%c18, %c0_66] : memref<146x128xbf16, #tpu.memory_space<vmem>>, vector<72x128xbf16>
      %c4 = arith.constant 4 : index
      %c0_67 = arith.constant 0 : index
      %c0_68 = arith.constant 0 : index
      %137 = vector.load %arg5[%c4, %c0_67, %c0_68] : memref<6x128x128xbf16, #tpu.memory_space<vmem>>, vector<1x128x128xbf16>
      %138 = vector.shape_cast %137 : vector<1x128x128xbf16> to vector<128x128xbf16>
      %cst_69 = arith.constant dense<0.000000e+00> : vector<72x128xf32>
      %139 = tpu.matmul %136, %138, %cst_69 {dimension_numbers = #tpu.dot_dimension_numbers<[1], [0], [0], [1], [0, 0, 1, 1], [], []>} : vector<72x128xbf16>, vector<128x128xbf16>, vector<72x128xf32> -> vector<72x128xf32>
      %140 = arith.addf %135, %139 : vector<72x128xf32>
      %c19 = arith.constant 19 : index
      %c0_70 = arith.constant 0 : index
      %141 = vector.load %arg10[%c19, %c0_70] : memref<146x128xbf16, #tpu.memory_space<vmem>>, vector<72x128xbf16>
      %c5 = arith.constant 5 : index
      %c0_71 = arith.constant 0 : index
      %c0_72 = arith.constant 0 : index
      %142 = vector.load %arg5[%c5, %c0_71, %c0_72] : memref<6x128x128xbf16, #tpu.memory_space<vmem>>, vector<1x128x128xbf16>
      %143 = vector.shape_cast %142 : vector<1x128x128xbf16> to vector<128x128xbf16>
      %cst_73 = arith.constant dense<0.000000e+00> : vector<72x128xf32>
      %144 = tpu.matmul %141, %143, %cst_73 {dimension_numbers = #tpu.dot_dimension_numbers<[1], [0], [0], [1], [0, 0, 1, 1], [], []>} : vector<72x128xbf16>, vector<128x128xbf16>, vector<72x128xf32> -> vector<72x128xf32>
      %145 = arith.addf %140, %144 : vector<72x128xf32>
      %c0_74 = arith.constant 0 : index
      %c0_75 = arith.constant 0 : index
      %146 = vector.load %arg6[%c0_74, %c0_75] : memref<1x128xf32, #tpu.memory_space<vmem>>, vector<1x128xf32>
      %147 = vector.broadcast %146 : vector<1x128xf32> to vector<72x128xf32>
      %148 = arith.addf %145, %147 : vector<72x128xf32>
      %cst_76 = arith.constant 0.000000e+00 : f32
      %149 = vector.broadcast %cst_76 : f32 to vector<72x128xf32>
      %150 = arith.cmpf oge, %148, %149 : vector<72x128xf32>
      %cst_77 = arith.constant 0.00999999977 : f32
      %151 = vector.broadcast %cst_77 : f32 to vector<72x128xf32>
      %152 = arith.mulf %151, %148 : vector<72x128xf32>
      %153 = arith.select %150, %148, %152 : vector<72x128xi1>, vector<72x128xf32>
      %154 = vector.shape_cast %153 : vector<72x128xf32> to vector<9x8x128xf32>
      %cst_78 = arith.constant dense<0xFF800000> : vector<9x128xf32>
      %155 = vector.multi_reduction <maximumf>, %154, %cst_78 [1] : vector<9x8x128xf32> to vector<9x128xf32>
      %cst_79 = arith.constant 0.000000e+00 : bf16
      %156 = vector.broadcast %cst_79 : bf16 to vector<13x128xbf16>
      %c0_80 = arith.constant 0 : index
      %c0_81 = arith.constant 0 : index
      %157 = vector.load %arg11[%c0_80, %c0_81] : memref<13x128xbf16, #tpu.memory_space<vmem>>, vector<13x128xbf16>
      tpu.vector_store %arg11[%c0_80, %c0_81], %156 {strides = array<i32>} : memref<13x128xbf16, #tpu.memory_space<vmem>>, vector<13x128xbf16>,
      %158 = arith.truncf %155 : vector<9x128xf32> to vector<9x128xbf16>
      %c2_82 = arith.constant 2 : index
      %c0_83 = arith.constant 0 : index
      %159 = vector.load %arg11[%c2_82, %c0_83] : memref<13x128xbf16, #tpu.memory_space<vmem>>, vector<9x128xbf16>
      tpu.vector_store %arg11[%c2_82, %c0_83], %158 {strides = array<i32>} : memref<13x128xbf16, #tpu.memory_space<vmem>>, vector<9x128xbf16>,
      %cst_84 = arith.constant 0.000000e+00 : f32
      %160 = vector.broadcast %cst_84 : f32 to vector<8x256xf32>
      %c0_85 = arith.constant 0 : index
      %c0_86 = arith.constant 0 : index
      %161 = vector.load %arg11[%c0_85, %c0_86] : memref<13x128xbf16, #tpu.memory_space<vmem>>, vector<8x128xbf16>
      %c0_87 = arith.constant 0 : index
      %c0_88 = arith.constant 0 : index
      %c0_89 = arith.constant 0 : index
      %162 = vector.load %arg7[%c0_87, %c0_88, %c0_89] : memref<6x128x256xbf16, #tpu.memory_space<vmem>>, vector<1x128x256xbf16>
      %163 = vector.shape_cast %162 : vector<1x128x256xbf16> to vector<128x256xbf16>
      %cst_90 = arith.constant dense<0.000000e+00> : vector<8x256xf32>
      %164 = tpu.matmul %161, %163, %cst_90 {dimension_numbers = #tpu.dot_dimension_numbers<[1], [0], [0], [1], [0, 0, 1, 1], [], []>} : vector<8x128xbf16>, vector<128x256xbf16>, vector<8x256xf32> -> vector<8x256xf32>
      %165 = arith.addf %160, %164 : vector<8x256xf32>
      %c1_91 = arith.constant 1 : index
      %c0_92 = arith.constant 0 : index
      %166 = vector.load %arg11[%c1_91, %c0_92] : memref<13x128xbf16, #tpu.memory_space<vmem>>, vector<8x128xbf16>
      %c1_93 = arith.constant 1 : index
      %c0_94 = arith.constant 0 : index
      %c0_95 = arith.constant 0 : index
      %167 = vector.load %arg7[%c1_93, %c0_94, %c0_95] : memref<6x128x256xbf16, #tpu.memory_space<vmem>>, vector<1x128x256xbf16>
      %168 = vector.shape_cast %167 : vector<1x128x256xbf16> to vector<128x256xbf16>
      %cst_96 = arith.constant dense<0.000000e+00> : vector<8x256xf32>
      %169 = tpu.matmul %166, %168, %cst_96 {dimension_numbers = #tpu.dot_dimension_numbers<[1], [0], [0], [1], [0, 0, 1, 1], [], []>} : vector<8x128xbf16>, vector<128x256xbf16>, vector<8x256xf32> -> vector<8x256xf32>
      %170 = arith.addf %165, %169 : vector<8x256xf32>
      %c2_97 = arith.constant 2 : index
      %c0_98 = arith.constant 0 : index
      %171 = vector.load %arg11[%c2_97, %c0_98] : memref<13x128xbf16, #tpu.memory_space<vmem>>, vector<8x128xbf16>
      %c2_99 = arith.constant 2 : index
      %c0_100 = arith.constant 0 : index
      %c0_101 = arith.constant 0 : index
      %172 = vector.load %arg7[%c2_99, %c0_100, %c0_101] : memref<6x128x256xbf16, #tpu.memory_space<vmem>>, vector<1x128x256xbf16>
      %173 = vector.shape_cast %172 : vector<1x128x256xbf16> to vector<128x256xbf16>
      %cst_102 = arith.constant dense<0.000000e+00> : vector<8x256xf32>
      %174 = tpu.matmul %171, %173, %cst_102 {dimension_numbers = #tpu.dot_dimension_numbers<[1], [0], [0], [1], [0, 0, 1, 1], [], []>} : vector<8x128xbf16>, vector<128x256xbf16>, vector<8x256xf32> -> vector<8x256xf32>
      %175 = arith.addf %170, %174 : vector<8x256xf32>
      %c3_103 = arith.constant 3 : index
      %c0_104 = arith.constant 0 : index
      %176 = vector.load %arg11[%c3_103, %c0_104] : memref<13x128xbf16, #tpu.memory_space<vmem>>, vector<8x128xbf16>
      %c3_105 = arith.constant 3 : index
      %c0_106 = arith.constant 0 : index
      %c0_107 = arith.constant 0 : index
      %177 = vector.load %arg7[%c3_105, %c0_106, %c0_107] : memref<6x128x256xbf16, #tpu.memory_space<vmem>>, vector<1x128x256xbf16>
      %178 = vector.shape_cast %177 : vector<1x128x256xbf16> to vector<128x256xbf16>
      %cst_108 = arith.constant dense<0.000000e+00> : vector<8x256xf32>
      %179 = tpu.matmul %176, %178, %cst_108 {dimension_numbers = #tpu.dot_dimension_numbers<[1], [0], [0], [1], [0, 0, 1, 1], [], []>} : vector<8x128xbf16>, vector<128x256xbf16>, vector<8x256xf32> -> vector<8x256xf32>
      %180 = arith.addf %175, %179 : vector<8x256xf32>
      %c4_109 = arith.constant 4 : index
      %c0_110 = arith.constant 0 : index
      %181 = vector.load %arg11[%c4_109, %c0_110] : memref<13x128xbf16, #tpu.memory_space<vmem>>, vector<8x128xbf16>
      %c4_111 = arith.constant 4 : index
      %c0_112 = arith.constant 0 : index
      %c0_113 = arith.constant 0 : index
      %182 = vector.load %arg7[%c4_111, %c0_112, %c0_113] : memref<6x128x256xbf16, #tpu.memory_space<vmem>>, vector<1x128x256xbf16>
      %183 = vector.shape_cast %182 : vector<1x128x256xbf16> to vector<128x256xbf16>
      %cst_114 = arith.constant dense<0.000000e+00> : vector<8x256xf32>
      %184 = tpu.matmul %181, %183, %cst_114 {dimension_numbers = #tpu.dot_dimension_numbers<[1], [0], [0], [1], [0, 0, 1, 1], [], []>} : vector<8x128xbf16>, vector<128x256xbf16>, vector<8x256xf32> -> vector<8x256xf32>
      %185 = arith.addf %180, %184 : vector<8x256xf32>
      %c5_115 = arith.constant 5 : index
      %c0_116 = arith.constant 0 : index
      %186 = vector.load %arg11[%c5_115, %c0_116] : memref<13x128xbf16, #tpu.memory_space<vmem>>, vector<8x128xbf16>
      %c5_117 = arith.constant 5 : index
      %c0_118 = arith.constant 0 : index
      %c0_119 = arith.constant 0 : index
      %187 = vector.load %arg7[%c5_117, %c0_118, %c0_119] : memref<6x128x256xbf16, #tpu.memory_space<vmem>>, vector<1x128x256xbf16>
      %188 = vector.shape_cast %187 : vector<1x128x256xbf16> to vector<128x256xbf16>
      %cst_120 = arith.constant dense<0.000000e+00> : vector<8x256xf32>
      %189 = tpu.matmul %186, %188, %cst_120 {dimension_numbers = #tpu.dot_dimension_numbers<[1], [0], [0], [1], [0, 0, 1, 1], [], []>} : vector<8x128xbf16>, vector<128x256xbf16>, vector<8x256xf32> -> vector<8x256xf32>
      %190 = arith.addf %185, %189 : vector<8x256xf32>
      %c0_121 = arith.constant 0 : index
      %c0_122 = arith.constant 0 : index
      %191 = vector.load %arg8[%c0_121, %c0_122] : memref<1x256xf32, #tpu.memory_space<vmem>>, vector<1x256xf32>
      %192 = vector.broadcast %191 : vector<1x256xf32> to vector<8x256xf32>
      %193 = arith.addf %190, %192 : vector<8x256xf32>
      %cst_123 = arith.constant 0.000000e+00 : f32
      %194 = vector.broadcast %cst_123 : f32 to vector<8x256xf32>
      %195 = arith.cmpf oge, %193, %194 : vector<8x256xf32>
      %cst_124 = arith.constant 0.00999999977 : f32
      %196 = vector.broadcast %cst_124 : f32 to vector<8x256xf32>
      %197 = arith.mulf %196, %193 : vector<8x256xf32>
      %198 = arith.select %195, %193, %197 : vector<8x256xi1>, vector<8x256xf32>
      %199 = vector.shape_cast %198 : vector<8x256xf32> to vector<1x8x256xf32>
      %cst_125 = arith.constant dense<0xFF800000> : vector<1x256xf32>
      %200 = vector.multi_reduction <maximumf>, %199, %cst_125 [1] : vector<1x8x256xf32> to vector<1x256xf32>
      %c0_126 = arith.constant 0 : index
      %c0_127 = arith.constant 0 : index
      %c0_128 = arith.constant 0 : index
      %201 = vector.load %arg9[%c0_126, %c0_127, %c0_128] : memref<1x1x256xf32, #tpu.memory_space<vmem>>, vector<1x1x256xf32>
      %202 = vector.shape_cast %201 : vector<1x1x256xf32> to vector<1x256xf32>
      %203 = vector.shape_cast %200 : vector<1x256xf32> to vector<1x1x256xf32>
      tpu.vector_store %arg9[%c0_126, %c0_127, %c0_128], %203 {strides = array<i32>} : memref<1x1x256xf32, #tpu.memory_space<vmem>>, vector<1x1x256xf32>,
    } else {
    }
    return
  }
  func.func @transform_0(%arg0: i32, %arg1: i32) -> (i32, i32) {
    %c2_i32 = arith.constant 2 : i32
    %0 = arith.muli %arg0, %c2_i32 : i32
    %1 = arith.addi %0, %arg1 : i32
    %c0_i32 = arith.constant 0 : i32
    %c0_i32_0 = arith.constant 0 : i32
    return %1, %c0_i32 : i32, i32
  }
  func.func @transform_1(%arg0: i32, %arg1: i32) -> (i32, i32) {
    %c0_i32 = arith.constant 0 : i32
    %c0_i32_0 = arith.constant 0 : i32
    %c0_i32_1 = arith.constant 0 : i32
    return %c0_i32, %c0_i32_0 : i32, i32
  }
  func.func @transform_2(%arg0: i32, %arg1: i32) -> (i32, i32) {
    %c0_i32 = arith.constant 0 : i32
    %c0_i32_0 = arith.constant 0 : i32
    %c0_i32_1 = arith.constant 0 : i32
    return %c0_i32, %c0_i32_0 : i32, i32
  }
  func.func @transform_3(%arg0: i32, %arg1: i32) -> (i32, i32, i32) {
    %c0_i32 = arith.constant 0 : i32
    %c0_i32_0 = arith.constant 0 : i32
    %c0_i32_1 = arith.constant 0 : i32
    %c0_i32_2 = arith.constant 0 : i32
    return %c0_i32, %c0_i32_0, %c0_i32_1 : i32, i32, i32
  }
  func.func @transform_4(%arg0: i32, %arg1: i32) -> (i32, i32) {
    %c0_i32 = arith.constant 0 : i32
    %c0_i32_0 = arith.constant 0 : i32
    %c0_i32_1 = arith.constant 0 : i32
    return %c0_i32, %c0_i32_0 : i32, i32
  }
  func.func @transform_5(%arg0: i32, %arg1: i32) -> (i32, i32, i32) {
    %c0_i32 = arith.constant 0 : i32
    %c0_i32_0 = arith.constant 0 : i32
    %c0_i32_1 = arith.constant 0 : i32
    %c0_i32_2 = arith.constant 0 : i32
    return %c0_i32, %c0_i32_0, %c0_i32_1 : i32, i32, i32
  }
  func.func @transform_6(%arg0: i32, %arg1: i32) -> (i32, i32) {
    %c0_i32 = arith.constant 0 : i32
    %c0_i32_0 = arith.constant 0 : i32
    %c0_i32_1 = arith.constant 0 : i32
    return %c0_i32, %c0_i32_0 : i32, i32
  }
  func.func @transform_7(%arg0: i32, %arg1: i32) -> (i32, i32, i32) {
    %c0_i32 = arith.constant 0 : i32
    %c0_i32_0 = arith.constant 0 : i32
    %c0_i32_1 = arith.constant 0 : i32
    return %arg0, %c0_i32, %c0_i32_0 : i32, i32, i32
  }
}

</mosaic_0001>

<llo_original>
// kernel: audio_model_forward.1
$region0: #{audio_model_forward.1}
  #allocation0 [shape = 'u32[]', space=smem, size = 0x4, offset = 0x4, fixed_abs, tag = 'smem constant byte address 0x4 - core index']
  #allocation1 [shape = 'u32[144,128]{1,0:T(1,128)}', space=vmem, size = 0x12000, scoped, tag = 'internal scratch']
  #allocation2 [shape = 'bf16[146,128]{1,0:T(8,128)(2,1)}', space=vmem, size = 0x9800, scoped, tag = 'scratch operand']
  #allocation3 [shape = 'bf16[13,128]{1,0:T(8,128)(2,1)}', space=vmem, size = 0x1000, scoped, tag = 'scratch operand']
  %s0 = inlined_call_operand.vmem [shape: f32[2560,8], index: 0, kind: input, shape index: {}]
  %s1 = inlined_call_operand.vmem [shape: f32[8,128], index: 1, kind: input, shape index: {}]
  %s2 = inlined_call_operand.vmem [shape: f32[1,128], index: 2, kind: input, shape index: {}]
  %s3 = inlined_call_operand.vmem [shape: bf16[6,128,128], index: 3, kind: input, shape index: {}]
  %s4 = inlined_call_operand.vmem [shape: f32[1,128], index: 4, kind: input, shape index: {}]
  %s5 = inlined_call_operand.vmem [shape: bf16[6,128,256], index: 5, kind: input, shape index: {}]
  %s6 = inlined_call_operand.vmem [shape: f32[1,256], index: 6, kind: input, shape index: {}]
  %s7 = inlined_call_operand.hbm [shape: f32[2,1,256], index: 7, kind: output, shape index: {}]
  %s8 = sld [smem:[#allocation0]]
  $region69: #{audio_model_forward.1} parent=0
    _
  %s10 = ssub.s32 1, %s8
  %s11 = scalar_select 0, %s10, %s8
  $region1: #{audio_model_forward.1} parent=0
    #allocation4 [shape = 'u8[2048]{0}', space=vmem, size = 0x800, scoped, tag = 'output window, operand 0']
    #allocation5 [shape = 's32[2]{0}', space=sflag, size = 0x8, scoped, tag = 'scoped memory for audio_model_forward.1']
    %12 = vsyncpa [#allocation5], 0
    %s13 = scalar_lea.sflag [#allocation5], 1
    %14 = vsyncpa %s13, 0
    loop: start=0, step=1, limit=6
    $region2: #{audio_model_forward.1} parent=1 // loop_pre_header
      _
    $region3: #{audio_model_forward.1} parent=1 // loop_header
      %s16 = sphi 0, %s20
      %p17 = scmp.ge.s32.totalorder %s16, 6
      %s23 = sphi 0, %s35
      %s24 = sphi 0, %s31
      %s25 = sphi 0, %s23
      %s26 = sphi 0, %s24
      %s27 = sphi 0, %s25
      %s28 = sphi 0, %s26
      %s42 = sphi 0, %s44
      %s45 = sphi 0, %s42
      %s46 = sphi 0, %s45
      %s62 = sphi 0, %s46
      %s66 = sphi 0, %s66
      %s68 = sphi 0, %s66
      %s69 = sphi 0, %s68
      %s83 = sphi 0, %s69
      %s87 = sphi 0, %s87
      %s89 = sphi 0, %s87
      %s90 = sphi 0, %s89
      %s104 = sphi 0, %s90
      %s108 = sphi 0, %s108
      %s110 = sphi 0, %s108
      %s111 = sphi 0, %s110
      %s125 = sphi 0, %s111
      %s129 = sphi 0, %s129
      %s131 = sphi 0, %s129
      %s132 = sphi 0, %s131
      %s146 = sphi 0, %s132
      %s150 = sphi 0, %s150
      %s152 = sphi 0, %s150
      %s153 = sphi 0, %s152
      %s167 = sphi 0, %s153
      %s171 = sphi 0, %s171
      %s173 = sphi 0, %s171
      %s174 = sphi 0, %s173
      %s188 = sphi 0, %s174
      %s194 = sphi 0, %s196
      %s197 = sphi 0, %s194
      %s198 = sphi 0, %s197
      %s214 = sphi 0, %s198
    $region4: #{audio_model_forward.1} parent=1 // loop_header_branch
      %19 = sbr.rel (%p17) target = $region8
    $region5: #{audio_model_forward.1} parent=1 // loop_body
      %s21 = ssub.s32 %s16, 1
      %s22 = ssub.s32 %s16, 2
      %s29 = sadd.s32 1, %s24
      %p30 = scmp.ge.s32.totalorder %s29, 2
      %s31 = scalar_select %p30, 0, %s29
      %s32 = sadd.s32 1, %s23
      %s33 = scalar_select %p30, %s32, %s23
      %p34 = scmp.ge.s32.totalorder %s33, 2
      %s35 = scalar_select %p34, 0, %s33
      %s36 = smul.u32 %s23, 2
      %s37 = sadd.s32 %s36, %s24
      %s38 = smul.u32 %s35, 2
      %s39 = sadd.s32 %s38, %s31
      %s40 = ssub.s32 %s37, %s39
      %p41 = scmp.eq.s32.totalorder %s40, 0
      %s43 = sadd.s32 %s42, 1
      %s44 = scalar_select %p41, %s42, %s43
      %p47 = pneg %p41
      %p48 = scmp.eq.s32.totalorder %s16, 3
      %p49 = por %p47, %p48
      %p50 = scmp.ne.s32.totalorder %s42, %s45
      %p51 = scmp.eq.s32.totalorder %s16, 0
      %p52 = por %p50, %p51
      %p53 = scmp.ne.s32.totalorder %s42, %s45
      %p54 = scmp.eq.s32.totalorder %s21, 3
      %p55 = por %p53, %p54
      %p56 = scmp.ne.s32.totalorder %s45, %s46
      %p57 = scmp.eq.s32.totalorder %s21, 0
      %p58 = por %p56, %p57
      %p59 = scmp.ne.s32.totalorder %s45, %s46
      %p60 = scmp.eq.s32.totalorder %s22, 3
      %p61 = por %p59, %p60
      %p63 = scmp.ne.s32.totalorder %s46, %s62
      %p64 = scmp.eq.s32.totalorder %s22, 0
      %p65 = por %p63, %p64
      %s67 = sadd.s32 %s66, 1
      %p70 = scmp.eq.s32.totalorder %s16, 3
      %p71 = scmp.ne.s32.totalorder %s66, %s68
      %p72 = scmp.eq.s32.totalorder %s16, 0
      %p73 = por %p71, %p72
      %p74 = scmp.ne.s32.totalorder %s66, %s68
      %p75 = scmp.eq.s32.totalorder %s21, 3
      %p76 = por %p74, %p75
      %p77 = scmp.ne.s32.totalorder %s68, %s69
      %p78 = scmp.eq.s32.totalorder %s21, 0
      %p79 = por %p77, %p78
      %p80 = scmp.ne.s32.totalorder %s68, %s69
      %p81 = scmp.eq.s32.totalorder %s22, 3
      %p82 = por %p80, %p81
      %p84 = scmp.ne.s32.totalorder %s69, %s83
      %p85 = scmp.eq.s32.totalorder %s22, 0
      %p86 = por %p84, %p85
      %s88 = sadd.s32 %s87, 1
      %p91 = scmp.eq.s32.totalorder %s16, 3
      %p92 = scmp.ne.s32.totalorder %s87, %s89
      %p93 = scmp.eq.s32.totalorder %s16, 0
      %p94 = por %p92, %p93
      %p95 = scmp.ne.s32.totalorder %s87, %s89
      %p96 = scmp.eq.s32.totalorder %s21, 3
      %p97 = por %p95, %p96
      %p98 = scmp.ne.s32.totalorder %s89, %s90
      %p99 = scmp.eq.s32.totalorder %s21, 0
      %p100 = por %p98, %p99
      %p101 = scmp.ne.s32.totalorder %s89, %s90
      %p102 = scmp.eq.s32.totalorder %s22, 3
      %p103 = por %p101, %p102
      %p105 = scmp.ne.s32.totalorder %s90, %s104
      %p106 = scmp.eq.s32.totalorder %s22, 0
      %p107 = por %p105, %p106
      %s109 = sadd.s32 %s108, 1
      %p112 = scmp.eq.s32.totalorder %s16, 3
      %p113 = scmp.ne.s32.totalorder %s108, %s110
      %p114 = scmp.eq.s32.totalorder %s16, 0
      %p115 = por %p113, %p114
      %p116 = scmp.ne.s32.totalorder %s108, %s110
      %p117 = scmp.eq.s32.totalorder %s21, 3
      %p118 = por %p116, %p117
      %p119 = scmp.ne.s32.totalorder %s110, %s111
      %p120 = scmp.eq.s32.totalorder %s21, 0
      %p121 = por %p119, %p120
      %p122 = scmp.ne.s32.totalorder %s110, %s111
      %p123 = scmp.eq.s32.totalorder %s22, 3
      %p124 = por %p122, %p123
      %p126 = scmp.ne.s32.totalorder %s111, %s125
      %p127 = scmp.eq.s32.totalorder %s22, 0
      %p128 = por %p126, %p127
      %s130 = sadd.s32 %s129, 1
      %p133 = scmp.eq.s32.totalorder %s16, 3
      %p134 = scmp.ne.s32.totalorder %s129, %s131
      %p135 = scmp.eq.s32.totalorder %s16, 0
      %p136 = por %p134, %p135
      %p137 = scmp.ne.s32.totalorder %s129, %s131
      %p138 = scmp.eq.s32.totalorder %s21, 3
      %p139 = por %p137, %p138
      %p140 = scmp.ne.s32.totalorder %s131, %s132
      %p141 = scmp.eq.s32.totalorder %s21, 0
      %p142 = por %p140, %p141
      %p143 = scmp.ne.s32.totalorder %s131, %s132
      %p144 = scmp.eq.s32.totalorder %s22, 3
      %p145 = por %p143, %p144
      %p147 = scmp.ne.s32.totalorder %s132, %s146
      %p148 = scmp.eq.s32.totalorder %s22, 0
      %p149 = por %p147, %p148
      %s151 = sadd.s32 %s150, 1
      %p154 = scmp.eq.s32.totalorder %s16, 3
      %p155 = scmp.ne.s32.totalorder %s150, %s152
      %p156 = scmp.eq.s32.totalorder %s16, 0
      %p157 = por %p155, %p156
      %p158 = scmp.ne.s32.totalorder %s150, %s152
      %p159 = scmp.eq.s32.totalorder %s21, 3
      %p160 = por %p158, %p159
      %p161 = scmp.ne.s32.totalorder %s152, %s153
      %p162 = scmp.eq.s32.totalorder %s21, 0
      %p163 = por %p161, %p162
      %p164 = scmp.ne.s32.totalorder %s152, %s153
      %p165 = scmp.eq.s32.totalorder %s22, 3
      %p166 = por %p164, %p165
      %p168 = scmp.ne.s32.totalorder %s153, %s167
      %p169 = scmp.eq.s32.totalorder %s22, 0
      %p170 = por %p168, %p169
      %s172 = sadd.s32 %s171, 1
      %p175 = scmp.eq.s32.totalorder %s16, 3
      %p176 = scmp.ne.s32.totalorder %s171, %s173
      %p177 = scmp.eq.s32.totalorder %s16, 0
      %p178 = por %p176, %p177
      %p179 = scmp.ne.s32.totalorder %s171, %s173
      %p180 = scmp.eq.s32.totalorder %s21, 3
      %p181 = por %p179, %p180
      %p182 = scmp.ne.s32.totalorder %s173, %s174
      %p183 = scmp.eq.s32.totalorder %s21, 0
      %p184 = por %p182, %p183
      %p185 = scmp.ne.s32.totalorder %s173, %s174
      %p186 = scmp.eq.s32.totalorder %s22, 3
      %p187 = por %p185, %p186
      %p189 = scmp.ne.s32.totalorder %s174, %s188
      %p190 = scmp.eq.s32.totalorder %s22, 0
      %p191 = por %p189, %p190
      %s192 = ssub.s32 %s23, %s35
      %p193 = scmp.eq.s32.totalorder %s192, 0
      %s195 = sadd.s32 %s194, 1
      %s196 = scalar_select %p193, %s194, %s195
      %p199 = pneg %p193
      %p200 = scmp.eq.s32.totalorder %s16, 3
      %p201 = por %p199, %p200
      %p202 = scmp.ne.s32.totalorder %s194, %s197
      %p203 = scmp.eq.s32.totalorder %s16, 0
      %p204 = por %p202, %p203
      %p205 = scmp.ne.s32.totalorder %s194, %s197
      %p206 = scmp.eq.s32.totalorder %s21, 3
      %p207 = por %p205, %p206
      %p208 = scmp.ne.s32.totalorder %s197, %s198
      %p209 = scmp.eq.s32.totalorder %s21, 0
      %p210 = por %p208, %p209
      %p211 = scmp.ne.s32.totalorder %s197, %s198
      %p212 = scmp.eq.s32.totalorder %s22, 3
      %p213 = por %p211, %p212
      %p215 = scmp.ne.s32.totalorder %s198, %s214
      %p216 = scmp.eq.s32.totalorder %s22, 0
      %p217 = por %p215, %p216
      %p218 = scmp.le.s32.totalorder 1, %s16
      %p219 = scmp.lt.s32.totalorder %s16, 5
      %p220 = pnand %p218, %p219
      %p221 = pneg %p220
      // Predicated region
      $region9: #{audio_model_forward.1} parent=5 // pred_check
        _
      $region10: #{audio_model_forward.1} parent=5 // pred_check_branch
        %223 = sbr.rel (%p220) target = $region12
      $region11: #{audio_model_forward.1} parent=5 // pred_region
        %s224 = ssub.s32 %s16, 1
        // Predicated region
        $region13: #{audio_model_forward.1} parent=11 // pred_check
          %p225 = pneg %p79
        $region14: #{audio_model_forward.1} parent=11 // pred_check_branch
          %227 = sbr.rel (%p225) target = $region16
        $region15: #{audio_model_forward.1} parent=11 // pred_region
          _
        $region16: #{audio_model_forward.1} parent=11 // pred_fallthru
          _
        // Predicated region
        $region17: #{audio_model_forward.1} parent=11 // pred_check
          %p228 = pneg %p100
        $region18: #{audio_model_forward.1} parent=11 // pred_check_branch
          %230 = sbr.rel (%p228) target = $region20
        $region19: #{audio_model_forward.1} parent=11 // pred_region
          _
        $region20: #{audio_model_forward.1} parent=11 // pred_fallthru
          _
        // Predicated region
        $region21: #{audio_model_forward.1} parent=11 // pred_check
          %p231 = pneg %p121
        $region22: #{audio_model_forward.1} parent=11 // pred_check_branch
          %233 = sbr.rel (%p231) target = $region24
        $region23: #{audio_model_forward.1} parent=11 // pred_region
          _
        $region24: #{audio_model_forward.1} parent=11 // pred_fallthru
          _
        // Predicated region
        $region25: #{audio_model_forward.1} parent=11 // pred_check
          %p234 = pneg %p142
        $region26: #{audio_model_forward.1} parent=11 // pred_check_branch
          %236 = sbr.rel (%p234) target = $region28
        $region27: #{audio_model_forward.1} parent=11 // pred_region
          _
        $region28: #{audio_model_forward.1} parent=11 // pred_fallthru
          _
        // Predicated region
        $region29: #{audio_model_forward.1} parent=11 // pred_check
          %p237 = pneg %p163
        $region30: #{audio_model_forward.1} parent=11 // pred_check_branch
          %239 = sbr.rel (%p237) target = $region32
        $region31: #{audio_model_forward.1} parent=11 // pred_region
          _
        $region32: #{audio_model_forward.1} parent=11 // pred_fallthru
          _
        // Predicated region
        $region33: #{audio_model_forward.1} parent=11 // pred_check
          %p240 = pneg %p184
        $region34: #{audio_model_forward.1} parent=11 // pred_check_branch
          %242 = sbr.rel (%p240) target = $region36
        $region35: #{audio_model_forward.1} parent=11 // pred_region
          _
        $region36: #{audio_model_forward.1} parent=11 // pred_fallthru
          _
      $region12: #{audio_model_forward.1} parent=5 // pred_fallthru
        _
      %p243 = scmp.lt.s32.totalorder %s16, 4
      // Predicated region
      $region37: #{audio_model_forward.1} parent=5 // pred_check
        %p244 = pneg %p243
      $region38: #{audio_model_forward.1} parent=5 // pred_check_branch
        %246 = sbr.rel (%p244) target = $region40
      $region39: #{audio_model_forward.1} parent=5 // pred_region
        // Predicated region
        $region41: #{audio_model_forward.1} parent=39 // pred_check
          %p247 = pneg %p52
        $region42: #{audio_model_forward.1} parent=39 // pred_check_branch
          %249 = sbr.rel (%p247) target = $region44
        $region43: #{audio_model_forward.1} parent=39 // pred_region
          %s250 = smul.u32 %s23, 2
          %s251 = sadd.s32 %s250, %s24
          %s252 = smul.u32 80, %s251
          %p253 = scmp.lt.s32.totalorder %s252, 319
          %s254 = scalar_select %p253, %s252, 319
          %s255 = smul.addr %s254, 8
          %s256 = scalar_lea.vmem %s0, %s255
          %s257 = smul.u32 %s23, 2
          %s258 = sadd.s32 %s257, %s24
          %s259 = smul.u32 80, %s258
        $region44: #{audio_model_forward.1} parent=39 // pred_fallthru
          _
      $region40: #{audio_model_forward.1} parent=5 // pred_fallthru
        _
      %p260 = scmp.le.s32.totalorder 1, %s16
      %p261 = scmp.lt.s32.totalorder %s16, 5
      %p262 = pnand %p260, %p261
      %p263 = pneg %p262
      // Predicated region
      $region45: #{audio_model_forward.1} parent=5 // pred_check
        _
      $region46: #{audio_model_forward.1} parent=5 // pred_check_branch
        %265 = sbr.rel (%p262) target = $region48
      $region47: #{audio_model_forward.1} parent=5 // pred_region
        %s266 = ssub.s32 %s16, 1
        %s267 = smul.u32 %s25, 2
        %s268 = sadd.s32 %s267, %s26
        %s269 = smul.u32 80, %s268
        %p270 = scmp.lt.s32.totalorder %s269, 319
        %s271 = scalar_select %p270, %s269, 319
        %s272 = smul.addr %s271, 8
        %s273 = scalar_lea.vmem %s0, %s272
        %p274 = pneg %p58
        %p275 = pneg %p55
        %p276 = pneg %p79
        %p277 = pneg %p76
        %p278 = pneg %p100
        %p279 = pneg %p97
        %p280 = pneg %p121
        %p281 = pneg %p118
        %p282 = pneg %p142
        %p283 = pneg %p139
        %p284 = pneg %p163
        %p285 = pneg %p160
        %p286 = pneg %p184
        %p287 = pneg %p181
        %p288 = pneg %p210
        %p289 = pneg %p207
        %s290 = sand.u32 %s197, 1
        %s291 = scalar_lea.sflag [#allocation5], %s290
        %s292 = sand.u32 %s197, 1
        %s293 = smul.addr %s292, 2
        %s294 = scalar_lea.vmem [#allocation4], %s293
        %s295 = smul.u32 %s25, 2
        %s296 = sadd.s32 %s295, %s26
        %s297 = smul.u32 80, %s296
        %p298 = scmp.lt.s32.totalorder %s297, 319
        %s299 = scalar_select %p298, %s297, 319
        %s300 = smul.addr %s299, 8
        %s301 = scalar_lea.vmem %s0, %s300
        %s302 = smul.u32 %s25, 2
        %s303 = sadd.s32 %s302, %s26
        %s304 = smul.u32 80, %s303
        %p306 = scmp.eq.s32.totalorder %s26, 0
        // Predicated region
        $region49: #{audio_model_forward.1} parent=47 // pred_check
          %p307 = pneg %p306
        $region50: #{audio_model_forward.1} parent=47 // pred_check_branch
          %309 = sbr.rel (%p307) target = $region52
        $region51: #{audio_model_forward.1} parent=47 // pred_region
          %310 = vst [vmem:[#allocation2] sm:$0xf] 0
          %311 = vst [vmem:[#allocation2 + $0x4] sm:$0xf] 0
        $region52: #{audio_model_forward.1} parent=47 // pred_fallthru
          _
        %v312 = vld [vmem:[%s1] sm:$0xff]
        %v313 = vld [vmem:[%s2] sm:$0x1]
        %v314 = vld [vmem:[%s301] sm:$0xff]
        %v315 = vld [vmem:[%s301 + $0x8] sm:$0xff]
        %v316 = vld [vmem:[%s301 + $0x10] sm:$0xff]
        %v317 = vld [vmem:[%s301 + $0x18] sm:$0xff]
        %v318 = vld [vmem:[%s301 + $0x20] sm:$0xff]
        %v319 = vld [vmem:[%s301 + $0x28] sm:$0xff]
        %v320 = vld [vmem:[%s301 + $0x30] sm:$0xff]
        %v321 = vld [vmem:[%s301 + $0x38] sm:$0xff]
        %v323 = vlaneseq
        %v324 = vshrl.u32 %v323, 7
        %v325 = vsub.s32 0, %v324
        %v326 = vrot.slane %v313, %v325
        %vm328 = vcmask 64512
        %v330 = vsel %vm328, %v314, 0
        %v333 = vsel %vm328, %v315, 0
        %v336 = vsel %vm328, %v316, 0
        %v339 = vsel %vm328, %v317, 0
        %v342 = vsel %vm328, %v318, 0
        %v345 = vsel %vm328, %v319, 0
        %v348 = vsel %vm328, %v320, 0
        %v351 = vsel %vm328, %v321, 0
        %353 = vmatprep.subr.mxu0 0.0
        %354 = vmatpush1.msra.mxu0 0.0
        %355 = vmatprep.subr.mxu0 0.0
        %356 = vmatpush1.msra.mxu0 0.0
        %357 = vmatprep.subr.mxu0 0.0
        %358 = vmatpush1.msra.mxu0 0.0
        %359 = vmatprep.subr.mxu0 0.0
        %360 = vmatpush1.msra.mxu0 0.0
        %361 = vmatprep.subr.mxu0 0.0
        %362 = vmatpush1.msra.mxu0 0.0
        %363 = vmatprep.subr.mxu0 0.0
        %364 = vmatpush1.msra.mxu0 0.0
        %365 = vmatprep.subr.mxu0 0.0
        %366 = vmatpush1.msra.mxu0 0.0
        %367 = vmatprep.subr.mxu0 0.0
        %368 = vmatpush1.msra.mxu0 0.0
        %369 = vmatprep.subr.mxu0 0.0
        %370 = vmatpush1.msra.mxu0 0.0
        %371 = vmatprep.subr.mxu0 0.0
        %372 = vmatpush1.msra.mxu0 0.0
        %373 = vmatprep.subr.mxu0 0.0
        %374 = vmatpush1.msra.mxu0 0.0
        %375 = vmatprep.subr.mxu0 0.0
        %376 = vmatpush1.msra.mxu0 0.0
        %377 = vmatprep.subr.mxu0 0.0
        %378 = vmatpush1.msra.mxu0 0.0
        %379 = vmatprep.subr.mxu0 0.0
        %380 = vmatpush1.msra.mxu0 0.0
        %381 = vmatprep.subr.mxu0 0.0
        %382 = vmatpush1.msra.mxu0 0.0
        %383 = vmatprep.subr.mxu0 0.0
        %384 = vmatpush1.msra.mxu0 %v312
        %385 = vmatprep.subr.mxu0 0.0
        %386 = vmatpush2.msra.mxu0 0.0
        %387 = vmatprep.subr.mxu0 0.0
        %388 = vmatpush2.msra.mxu0 0.0
        %389 = vmatprep.subr.mxu0 0.0
        %390 = vmatpush2.msra.mxu0 0.0
        %391 = vmatprep.subr.mxu0 0.0
        %392 = vmatpush2.msra.mxu0 0.0
        %393 = vmatprep.subr.mxu0 0.0
        %394 = vmatpush2.msra.mxu0 0.0
        %395 = vmatprep.subr.mxu0 0.0
        %396 = vmatpush2.msra.mxu0 0.0
        %397 = vmatprep.subr.mxu0 0.0
        %398 = vmatpush2.msra.mxu0 0.0
        %399 = vmatprep.subr.mxu0 0.0
        %400 = vmatpush2.msra.mxu0 0.0
        %401 = vmatprep.subr.mxu0 0.0
        %402 = vmatpush2.msra.mxu0 0.0
        %403 = vmatprep.subr.mxu0 0.0
        %404 = vmatpush2.msra.mxu0 0.0
        %405 = vmatprep.subr.mxu0 0.0
        %406 = vmatpush2.msra.mxu0 0.0
        %407 = vmatprep.subr.mxu0 0.0
        %408 = vmatpush2.msra.mxu0 0.0
        %409 = vmatprep.subr.mxu0 0.0
        %410 = vmatpush2.msra.mxu0 0.0
        %411 = vmatprep.subr.mxu0 0.0
        %412 = vmatpush2.msra.mxu0 0.0
        %413 = vmatprep.subr.mxu0 0.0
        %414 = vmatpush2.msra.mxu0 0.0
        %415 = vmatprep.subr.mxu0 0.0
        %416 = vmatpush2.msra.mxu0 0.0
        %417 = vmatprep.mubr.f32.mxu0 0.0
        %418 = vmatmul.mubr.f32.gmra.mxu0 %v330
        %v419 = vpop.f32.mrf.mxu0
        %v420 = vadd.f32 %v326, %v419
        %v421 = vpop.f32.mrf.mxu0
        %422 = vmatprep.mubr.f32.mxu0 0.0
        %423 = vmatmul.mubr.f32.gmra.mxu0 %v333
        %v424 = vpop.f32.mrf.mxu0
        %v425 = vadd.f32 %v326, %v424
        %v426 = vpop.f32.mrf.mxu0
        %427 = vmatprep.mubr.f32.mxu0 0.0
        %428 = vmatmul.mubr.f32.gmra.mxu0 %v336
        %v429 = vpop.f32.mrf.mxu0
        %v430 = vadd.f32 %v326, %v429
        %v431 = vpop.f32.mrf.mxu0
        %432 = vmatprep.mubr.f32.mxu0 0.0
        %433 = vmatmul.mubr.f32.gmra.mxu0 %v339
        %v434 = vpop.f32.mrf.mxu0
        %v435 = vadd.f32 %v326, %v434
        %v436 = vpop.f32.mrf.mxu0
        %437 = vmatprep.mubr.f32.mxu0 0.0
        %438 = vmatmul.mubr.f32.gmra.mxu0 %v342
        %v439 = vpop.f32.mrf.mxu0
        %v440 = vadd.f32 %v326, %v439
        %v441 = vpop.f32.mrf.mxu0
        %442 = vmatprep.mubr.f32.mxu0 0.0
        %443 = vmatmul.mubr.f32.gmra.mxu0 %v345
        %v444 = vpop.f32.mrf.mxu0
        %v445 = vadd.f32 %v326, %v444
        %v446 = vpop.f32.mrf.mxu0
        %447 = vmatprep.mubr.f32.mxu0 0.0
        %448 = vmatmul.mubr.f32.gmra.mxu0 %v348
        %v449 = vpop.f32.mrf.mxu0
        %v450 = vadd.f32 %v326, %v449
        %v451 = vpop.f32.mrf.mxu0
        %452 = vmatprep.mubr.f32.mxu0 0.0
        %453 = vmatmul.mubr.f32.gmra.mxu0 %v351
        %v454 = vpop.f32.mrf.mxu0
        %v455 = vadd.f32 %v326, %v454
        %v456 = vpop.f32.mrf.mxu0
        %457 = vdwg.mxu0
        %vm458 = vcmp.ge.f32.partialorder %v420, 0.0
        %vm459 = vcmp.ge.f32.partialorder %v425, 0.0
        %vm460 = vcmp.ge.f32.partialorder %v430, 0.0
        %vm461 = vcmp.ge.f32.partialorder %v435, 0.0
        %vm462 = vcmp.ge.f32.partialorder %v440, 0.0
        %vm463 = vcmp.ge.f32.partialorder %v445, 0.0
        %vm464 = vcmp.ge.f32.partialorder %v450, 0.0
        %vm465 = vcmp.ge.f32.partialorder %v455, 0.0
        %v466 = vmul.f32 %v420, 0.01
        %v467 = vmul.f32 %v425, 0.01
        %v468 = vmul.f32 %v430, 0.01
        %v469 = vmul.f32 %v435, 0.01
        %v470 = vmul.f32 %v440, 0.01
        %v471 = vmul.f32 %v445, 0.01
        %v472 = vmul.f32 %v450, 0.01
        %v473 = vmul.f32 %v455, 0.01
        %v474 = vsel %vm458, %v420, %v466
        %v475 = vsel %vm459, %v425, %v467
        %v476 = vsel %vm460, %v430, %v468
        %v477 = vsel %vm461, %v435, %v469
        %v478 = vsel %vm462, %v440, %v470
        %v479 = vsel %vm463, %v445, %v471
        %v480 = vsel %vm464, %v450, %v472
        %v481 = vsel %vm465, %v455, %v473
        %v482 = vld [vmem:[%s301 + $0x40] sm:$0xff]
        %v483 = vld [vmem:[%s301 + $0x48] sm:$0xff]
        %v484 = vld [vmem:[%s301 + $0x50] sm:$0xff]
        %v485 = vld [vmem:[%s301 + $0x58] sm:$0xff]
        %v486 = vld [vmem:[%s301 + $0x60] sm:$0xff]
        %v487 = vld [vmem:[%s301 + $0x68] sm:$0xff]
        %v488 = vld [vmem:[%s301 + $0x70] sm:$0xff]
        %v489 = vld [vmem:[%s301 + $0x78] sm:$0xff]
        %v491 = vsel %vm328, %v482, 0
        %v494 = vsel %vm328, %v483, 0
        %v497 = vsel %vm328, %v484, 0
        %v500 = vsel %vm328, %v485, 0
        %v503 = vsel %vm328, %v486, 0
        %v506 = vsel %vm328, %v487, 0
        %v509 = vsel %vm328, %v488, 0
        %v512 = vsel %vm328, %v489, 0
        %514 = vmatprep.subr.mxu0 0.0
        %515 = vmatpush1.msra.mxu0 0.0
        %516 = vmatprep.subr.mxu0 0.0
        %517 = vmatpush1.msra.mxu0 0.0
        %518 = vmatprep.subr.mxu0 0.0
        %519 = vmatpush1.msra.mxu0 0.0
        %520 = vmatprep.subr.mxu0 0.0
        %521 = vmatpush1.msra.mxu0 0.0
        %522 = vmatprep.subr.mxu0 0.0
        %523 = vmatpush1.msra.mxu0 0.0
        %524 = vmatprep.subr.mxu0 0.0
        %525 = vmatpush1.msra.mxu0 0.0
        %526 = vmatprep.subr.mxu0 0.0
        %527 = vmatpush1.msra.mxu0 0.0
        %528 = vmatprep.subr.mxu0 0.0
        %529 = vmatpush1.msra.mxu0 0.0
        %530 = vmatprep.subr.mxu0 0.0
        %531 = vmatpush1.msra.mxu0 0.0
        %532 = vmatprep.subr.mxu0 0.0
        %533 = vmatpush1.msra.mxu0 0.0
        %534 = vmatprep.subr.mxu0 0.0
        %535 = vmatpush1.msra.mxu0 0.0
        %536 = vmatprep.subr.mxu0 0.0
        %537 = vmatpush1.msra.mxu0 0.0
        %538 = vmatprep.subr.mxu0 0.0
        %539 = vmatpush1.msra.mxu0 0.0
        %540 = vmatprep.subr.mxu0 0.0
        %541 = vmatpush1.msra.mxu0 0.0
        %542 = vmatprep.subr.mxu0 0.0
        %543 = vmatpush1.msra.mxu0 0.0
        %544 = vmatprep.subr.mxu0 0.0
        %545 = vmatpush1.msra.mxu0 %v312
        %546 = vmatprep.subr.mxu0 0.0
        %547 = vmatpush2.msra.mxu0 0.0
        %548 = vmatprep.subr.mxu0 0.0
        %549 = vmatpush2.msra.mxu0 0.0
        %550 = vmatprep.subr.mxu0 0.0
        %551 = vmatpush2.msra.mxu0 0.0
        %552 = vmatprep.subr.mxu0 0.0
        %553 = vmatpush2.msra.mxu0 0.0
        %554 = vmatprep.subr.mxu0 0.0
        %555 = vmatpush2.msra.mxu0 0.0
        %556 = vmatprep.subr.mxu0 0.0
        %557 = vmatpush2.msra.mxu0 0.0
        %558 = vmatprep.subr.mxu0 0.0
        %559 = vmatpush2.msra.mxu0 0.0
        %560 = vmatprep.subr.mxu0 0.0
        %561 = vmatpush2.msra.mxu0 0.0
        %562 = vmatprep.subr.mxu0 0.0
        %563 = vmatpush2.msra.mxu0 0.0
        %564 = vmatprep.subr.mxu0 0.0
        %565 = vmatpush2.msra.mxu0 0.0
        %566 = vmatprep.subr.mxu0 0.0
        %567 = vmatpush2.msra.mxu0 0.0
        %568 = vmatprep.subr.mxu0 0.0
        %569 = vmatpush2.msra.mxu0 0.0
        %570 = vmatprep.subr.mxu0 0.0
        %571 = vmatpush2.msra.mxu0 0.0
        %572 = vmatprep.subr.mxu0 0.0
        %573 = vmatpush2.msra.mxu0 0.0
        %574 = vmatprep.subr.mxu0 0.0
        %575 = vmatpush2.msra.mxu0 0.0
        %576 = vmatprep.subr.mxu0 0.0
        %577 = vmatpush2.msra.mxu0 0.0
        %578 = vmatprep.mubr.f32.mxu0 0.0
        %579 = vmatmul.mubr.f32.gmra.mxu0 %v491
        %v580 = vpop.f32.mrf.mxu0
        %v581 = vadd.f32 %v326, %v580
        %v582 = vpop.f32.mrf.mxu0
        %583 = vmatprep.mubr.f32.mxu0 0.0
        %584 = vmatmul.mubr.f32.gmra.mxu0 %v494
        %v585 = vpop.f32.mrf.mxu0
        %v586 = vadd.f32 %v326, %v585
        %v587 = vpop.f32.mrf.mxu0
        %588 = vmatprep.mubr.f32.mxu0 0.0
        %589 = vmatmul.mubr.f32.gmra.mxu0 %v497
        %v590 = vpop.f32.mrf.mxu0
        %v591 = vadd.f32 %v326, %v590
        %v592 = vpop.f32.mrf.mxu0
        %593 = vmatprep.mubr.f32.mxu0 0.0
        %594 = vmatmul.mubr.f32.gmra.mxu0 %v500
        %v595 = vpop.f32.mrf.mxu0
        %v596 = vadd.f32 %v326, %v595
        %v597 = vpop.f32.mrf.mxu0
        %598 = vmatprep.mubr.f32.mxu0 0.0
        %599 = vmatmul.mubr.f32.gmra.mxu0 %v503
        %v600 = vpop.f32.mrf.mxu0
        %v601 = vadd.f32 %v326, %v600
        %v602 = vpop.f32.mrf.mxu0
        %603 = vmatprep.mubr.f32.mxu0 0.0
        %604 = vmatmul.mubr.f32.gmra.mxu0 %v506
        %v605 = vpop.f32.mrf.mxu0
        %v606 = vadd.f32 %v326, %v605
        %v607 = vpop.f32.mrf.mxu0
        %608 = vmatprep.mubr.f32.mxu0 0.0
        %609 = vmatmul.mubr.f32.gmra.mxu0 %v509
        %v610 = vpop.f32.mrf.mxu0
        %v611 = vadd.f32 %v326, %v610
        %v612 = vpop.f32.mrf.mxu0
        %613 = vmatprep.mubr.f32.mxu0 0.0
        %614 = vmatmul.mubr.f32.gmra.mxu0 %v512
        %v615 = vpop.f32.mrf.mxu0
        %v616 = vadd.f32 %v326, %v615
        %v617 = vpop.f32.mrf.mxu0
        %618 = vdwg.mxu0
        %vm619 = vcmp.ge.f32.partialorder %v581, 0.0
        %vm620 = vcmp.ge.f32.partialorder %v586, 0.0
        %vm621 = vcmp.ge.f32.partialorder %v591, 0.0
        %vm622 = vcmp.ge.f32.partialorder %v596, 0.0
        %vm623 = vcmp.ge.f32.partialorder %v601, 0.0
        %vm624 = vcmp.ge.f32.partialorder %v606, 0.0
        %vm625 = vcmp.ge.f32.partialorder %v611, 0.0
        %vm626 = vcmp.ge.f32.partialorder %v616, 0.0
        %v627 = vmul.f32 %v581, 0.01
        %v628 = vmul.f32 %v586, 0.01
        %v629 = vmul.f32 %v591, 0.01
        %v630 = vmul.f32 %v596, 0.01
        %v631 = vmul.f32 %v601, 0.01
        %v632 = vmul.f32 %v606, 0.01
        %v633 = vmul.f32 %v611, 0.01
        %v634 = vmul.f32 %v616, 0.01
        %v635 = vsel %vm619, %v581, %v627
        %v636 = vsel %vm620, %v586, %v628
        %v637 = vsel %vm621, %v591, %v629
        %v638 = vsel %vm622, %v596, %v630
        %v639 = vsel %vm623, %v601, %v631
        %v640 = vsel %vm624, %v606, %v632
        %v641 = vsel %vm625, %v611, %v633
        %v642 = vsel %vm626, %v616, %v634
        %v643 = vmax.f32 %v474, %v635
        %v644 = vmax.f32 %v475, %v636
        %v645 = vmax.f32 %v476, %v637
        %v646 = vmax.f32 %v477, %v638
        %v647 = vmax.f32 %v478, %v639
        %v648 = vmax.f32 %v479, %v640
        %v649 = vmax.f32 %v480, %v641
        %v650 = vmax.f32 %v481, %v642
        %v651 = vld [vmem:[%s301 + $0x80] sm:$0xff]
        %v652 = vld [vmem:[%s301 + $0x88] sm:$0xff]
        %v653 = vld [vmem:[%s301 + $0x90] sm:$0xff]
        %v654 = vld [vmem:[%s301 + $0x98] sm:$0xff]
        %v655 = vld [vmem:[%s301 + $0xa0] sm:$0xff]
        %v656 = vld [vmem:[%s301 + $0xa8] sm:$0xff]
        %v657 = vld [vmem:[%s301 + $0xb0] sm:$0xff]
        %v658 = vld [vmem:[%s301 + $0xb8] sm:$0xff]
        %v660 = vsel %vm328, %v651, 0
        %v663 = vsel %vm328, %v652, 0
        %v666 = vsel %vm328, %v653, 0
        %v669 = vsel %vm328, %v654, 0
        %v672 = vsel %vm328, %v655, 0
        %v675 = vsel %vm328, %v656, 0
        %v678 = vsel %vm328, %v657, 0
        %v681 = vsel %vm328, %v658, 0
        %683 = vmatprep.subr.mxu0 0.0
        %684 = vmatpush1.msra.mxu0 0.0
        %685 = vmatprep.subr.mxu0 0.0
        %686 = vmatpush1.msra.mxu0 0.0
        %687 = vmatprep.subr.mxu0 0.0
        %688 = vmatpush1.msra.mxu0 0.0
        %689 = vmatprep.subr.mxu0 0.0
        %690 = vmatpush1.msra.mxu0 0.0
        %691 = vmatprep.subr.mxu0 0.0
        %692 = vmatpush1.msra.mxu0 0.0
        %693 = vmatprep.subr.mxu0 0.0
        %694 = vmatpush1.msra.mxu0 0.0
        %695 = vmatprep.subr.mxu0 0.0
        %696 = vmatpush1.msra.mxu0 0.0
        %697 = vmatprep.subr.mxu0 0.0
        %698 = vmatpush1.msra.mxu0 0.0
        %699 = vmatprep.subr.mxu0 0.0
        %700 = vmatpush1.msra.mxu0 0.0
        %701 = vmatprep.subr.mxu0 0.0
        %702 = vmatpush1.msra.mxu0 0.0
        %703 = vmatprep.subr.mxu0 0.0
        %704 = vmatpush1.msra.mxu0 0.0
        %705 = vmatprep.subr.mxu0 0.0
        %706 = vmatpush1.msra.mxu0 0.0
        %707 = vmatprep.subr.mxu0 0.0
        %708 = vmatpush1.msra.mxu0 0.0
        %709 = vmatprep.subr.mxu0 0.0
        %710 = vmatpush1.msra.mxu0 0.0
        %711 = vmatprep.subr.mxu0 0.0
        %712 = vmatpush1.msra.mxu0 0.0
        %713 = vmatprep.subr.mxu0 0.0
        %714 = vmatpush1.msra.mxu0 %v312
        %715 = vmatprep.subr.mxu0 0.0
        %716 = vmatpush2.msra.mxu0 0.0
        %717 = vmatprep.subr.mxu0 0.0
        %718 = vmatpush2.msra.mxu0 0.0
        %719 = vmatprep.subr.mxu0 0.0
        %720 = vmatpush2.msra.mxu0 0.0
        %721 = vmatprep.subr.mxu0 0.0
        %722 = vmatpush2.msra.mxu0 0.0
        %723 = vmatprep.subr.mxu0 0.0
        %724 = vmatpush2.msra.mxu0 0.0
        %725 = vmatprep.subr.mxu0 0.0
        %726 = vmatpush2.msra.mxu0 0.0
        %727 = vmatprep.subr.mxu0 0.0
        %728 = vmatpush2.msra.mxu0 0.0
        %729 = vmatprep.subr.mxu0 0.0
        %730 = vmatpush2.msra.mxu0 0.0
        %731 = vmatprep.subr.mxu0 0.0
        %732 = vmatpush2.msra.mxu0 0.0
        %733 = vmatprep.subr.mxu0 0.0
        %734 = vmatpush2.msra.mxu0 0.0
        %735 = vmatprep.subr.mxu0 0.0
        %736 = vmatpush2.msra.mxu0 0.0
        %737 = vmatprep.subr.mxu0 0.0
        %738 = vmatpush2.msra.mxu0 0.0
        %739 = vmatprep.subr.mxu0 0.0
        %740 = vmatpush2.msra.mxu0 0.0
        %741 = vmatprep.subr.mxu0 0.0
        %742 = vmatpush2.msra.mxu0 0.0
        %743 = vmatprep.subr.mxu0 0.0
        %744 = vmatpush2.msra.mxu0 0.0
        %745 = vmatprep.subr.mxu0 0.0
        %746 = vmatpush2.msra.mxu0 0.0
        %747 = vmatprep.mubr.f32.mxu0 0.0
        %748 = vmatmul.mubr.f32.gmra.mxu0 %v660
        %v749 = vpop.f32.mrf.mxu0
        %v750 = vadd.f32 %v326, %v749
        %v751 = vpop.f32.mrf.mxu0
        %752 = vmatprep.mubr.f32.mxu0 0.0
        %753 = vmatmul.mubr.f32.gmra.mxu0 %v663
        %v754 = vpop.f32.mrf.mxu0
        %v755 = vadd.f32 %v326, %v754
        %v756 = vpop.f32.mrf.mxu0
        %757 = vmatprep.mubr.f32.mxu0 0.0
        %758 = vmatmul.mubr.f32.gmra.mxu0 %v666
        %v759 = vpop.f32.mrf.mxu0
        %v760 = vadd.f32 %v326, %v759
        %v761 = vpop.f32.mrf.mxu0
        %762 = vmatprep.mubr.f32.mxu0 0.0
        %763 = vmatmul.mubr.f32.gmra.mxu0 %v669
        %v764 = vpop.f32.mrf.mxu0
        %v765 = vadd.f32 %v326, %v764
        %v766 = vpop.f32.mrf.mxu0
        %767 = vmatprep.mubr.f32.mxu0 0.0
        %768 = vmatmul.mubr.f32.gmra.mxu0 %v672
        %v769 = vpop.f32.mrf.mxu0
        %v770 = vadd.f32 %v326, %v769
        %v771 = vpop.f32.mrf.mxu0
        %772 = vmatprep.mubr.f32.mxu0 0.0
        %773 = vmatmul.mubr.f32.gmra.mxu0 %v675
        %v774 = vpop.f32.mrf.mxu0
        %v775 = vadd.f32 %v326, %v774
        %v776 = vpop.f32.mrf.mxu0
        %777 = vmatprep.mubr.f32.mxu0 0.0
        %778 = vmatmul.mubr.f32.gmra.mxu0 %v678
        %v779 = vpop.f32.mrf.mxu0
        %v780 = vadd.f32 %v326, %v779
        %v781 = vpop.f32.mrf.mxu0
        %782 = vmatprep.mubr.f32.mxu0 0.0
        %783 = vmatmul.mubr.f32.gmra.mxu0 %v681
        %v784 = vpop.f32.mrf.mxu0
        %v785 = vadd.f32 %v326, %v784
        %v786 = vpop.f32.mrf.mxu0
        %787 = vdwg.mxu0
        %vm788 = vcmp.ge.f32.partialorder %v750, 0.0
        %vm789 = vcmp.ge.f32.partialorder %v755, 0.0
        %vm790 = vcmp.ge.f32.partialorder %v760, 0.0
        %vm791 = vcmp.ge.f32.partialorder %v765, 0.0
        %vm792 = vcmp.ge.f32.partialorder %v770, 0.0
        %vm793 = vcmp.ge.f32.partialorder %v775, 0.0
        %vm794 = vcmp.ge.f32.partialorder %v780, 0.0
        %vm795 = vcmp.ge.f32.partialorder %v785, 0.0
        %v796 = vmul.f32 %v750, 0.01
        %v797 = vmul.f32 %v755, 0.01
        %v798 = vmul.f32 %v760, 0.01
        %v799 = vmul.f32 %v765, 0.01
        %v800 = vmul.f32 %v770, 0.01
        %v801 = vmul.f32 %v775, 0.01
        %v802 = vmul.f32 %v780, 0.01
        %v803 = vmul.f32 %v785, 0.01
        %v804 = vsel %vm788, %v750, %v796
        %v805 = vsel %vm789, %v755, %v797
        %v806 = vsel %vm790, %v760, %v798
        %v807 = vsel %vm791, %v765, %v799
        %v808 = vsel %vm792, %v770, %v800
        %v809 = vsel %vm793, %v775, %v801
        %v810 = vsel %vm794, %v780, %v802
        %v811 = vsel %vm795, %v785, %v803
        %v812 = vmax.f32 %v643, %v804
        %v813 = vmax.f32 %v644, %v805
        %v814 = vmax.f32 %v645, %v806
        %v815 = vmax.f32 %v646, %v807
        %v816 = vmax.f32 %v647, %v808
        %v817 = vmax.f32 %v648, %v809
        %v818 = vmax.f32 %v649, %v810
        %v819 = vmax.f32 %v650, %v811
        %v820 = vld [vmem:[%s301 + $0xc0] sm:$0xff]
        %v821 = vld [vmem:[%s301 + $0xc8] sm:$0xff]
        %v822 = vld [vmem:[%s301 + $0xd0] sm:$0xff]
        %v823 = vld [vmem:[%s301 + $0xd8] sm:$0xff]
        %v824 = vld [vmem:[%s301 + $0xe0] sm:$0xff]
        %v825 = vld [vmem:[%s301 + $0xe8] sm:$0xff]
        %v826 = vld [vmem:[%s301 + $0xf0] sm:$0xff]
        %v827 = vld [vmem:[%s301 + $0xf8] sm:$0xff]
        %v829 = vsel %vm328, %v820, 0
        %v832 = vsel %vm328, %v821, 0
        %v835 = vsel %vm328, %v822, 0
        %v838 = vsel %vm328, %v823, 0
        %v841 = vsel %vm328, %v824, 0
        %v844 = vsel %vm328, %v825, 0
        %v847 = vsel %vm328, %v826, 0
        %v850 = vsel %vm328, %v827, 0
        %852 = vmatprep.subr.mxu0 0.0
        %853 = vmatpush1.msra.mxu0 0.0
        %854 = vmatprep.subr.mxu0 0.0
        %855 = vmatpush1.msra.mxu0 0.0
        %856 = vmatprep.subr.mxu0 0.0
        %857 = vmatpush1.msra.mxu0 0.0
        %858 = vmatprep.subr.mxu0 0.0
        %859 = vmatpush1.msra.mxu0 0.0
        %860 = vmatprep.subr.mxu0 0.0
        %861 = vmatpush1.msra.mxu0 0.0
        %862 = vmatprep.subr.mxu0 0.0
        %863 = vmatpush1.msra.mxu0 0.0
        %864 = vmatprep.subr.mxu0 0.0
        %865 = vmatpush1.msra.mxu0 0.0
        %866 = vmatprep.subr.mxu0 0.0
        %867 = vmatpush1.msra.mxu0 0.0
        %868 = vmatprep.subr.mxu0 0.0
        %869 = vmatpush1.msra.mxu0 0.0
        %870 = vmatprep.subr.mxu0 0.0
        %871 = vmatpush1.msra.mxu0 0.0
        %872 = vmatprep.subr.mxu0 0.0
        %873 = vmatpush1.msra.mxu0 0.0
        %874 = vmatprep.subr.mxu0 0.0
        %875 = vmatpush1.msra.mxu0 0.0
        %876 = vmatprep.subr.mxu0 0.0
        %877 = vmatpush1.msra.mxu0 0.0
        %878 = vmatprep.subr.mxu0 0.0
        %879 = vmatpush1.msra.mxu0 0.0
        %880 = vmatprep.subr.mxu0 0.0
        %881 = vmatpush1.msra.mxu0 0.0
        %882 = vmatprep.subr.mxu0 0.0
        %883 = vmatpush1.msra.mxu0 %v312
        %884 = vmatprep.subr.mxu0 0.0
        %885 = vmatpush2.msra.mxu0 0.0
        %886 = vmatprep.subr.mxu0 0.0
        %887 = vmatpush2.msra.mxu0 0.0
        %888 = vmatprep.subr.mxu0 0.0
        %889 = vmatpush2.msra.mxu0 0.0
        %890 = vmatprep.subr.mxu0 0.0
        %891 = vmatpush2.msra.mxu0 0.0
        %892 = vmatprep.subr.mxu0 0.0
        %893 = vmatpush2.msra.mxu0 0.0
        %894 = vmatprep.subr.mxu0 0.0
        %895 = vmatpush2.msra.mxu0 0.0
        %896 = vmatprep.subr.mxu0 0.0
        %897 = vmatpush2.msra.mxu0 0.0
        %898 = vmatprep.subr.mxu0 0.0
        %899 = vmatpush2.msra.mxu0 0.0
        %900 = vmatprep.subr.mxu0 0.0
        %901 = vmatpush2.msra.mxu0 0.0
        %902 = vmatprep.subr.mxu0 0.0
        %903 = vmatpush2.msra.mxu0 0.0
        %904 = vmatprep.subr.mxu0 0.0
        %905 = vmatpush2.msra.mxu0 0.0
        %906 = vmatprep.subr.mxu0 0.0
        %907 = vmatpush2.msra.mxu0 0.0
        %908 = vmatprep.subr.mxu0 0.0
        %909 = vmatpush2.msra.mxu0 0.0
        %910 = vmatprep.subr.mxu0 0.0
        %911 = vmatpush2.msra.mxu0 0.0
        %912 = vmatprep.subr.mxu0 0.0
        %913 = vmatpush2.msra.mxu0 0.0
        %914 = vmatprep.subr.mxu0 0.0
        %915 = vmatpush2.msra.mxu0 0.0
        %916 = vmatprep.mubr.f32.mxu0 0.0
        %917 = vmatmul.mubr.f32.gmra.mxu0 %v829
        %v918 = vpop.f32.mrf.mxu0
        %v919 = vadd.f32 %v326, %v918
        %v920 = vpop.f32.mrf.mxu0
        %921 = vmatprep.mubr.f32.mxu0 0.0
        %922 = vmatmul.mubr.f32.gmra.mxu0 %v832
        %v923 = vpop.f32.mrf.mxu0
        %v924 = vadd.f32 %v326, %v923
        %v925 = vpop.f32.mrf.mxu0
        %926 = vmatprep.mubr.f32.mxu0 0.0
        %927 = vmatmul.mubr.f32.gmra.mxu0 %v835
        %v928 = vpop.f32.mrf.mxu0
        %v929 = vadd.f32 %v326, %v928
        %v930 = vpop.f32.mrf.mxu0
        %931 = vmatprep.mubr.f32.mxu0 0.0
        %932 = vmatmul.mubr.f32.gmra.mxu0 %v838
        %v933 = vpop.f32.mrf.mxu0
        %v934 = vadd.f32 %v326, %v933
        %v935 = vpop.f32.mrf.mxu0
        %936 = vmatprep.mubr.f32.mxu0 0.0
        %937 = vmatmul.mubr.f32.gmra.mxu0 %v841
        %v938 = vpop.f32.mrf.mxu0
        %v939 = vadd.f32 %v326, %v938
        %v940 = vpop.f32.mrf.mxu0
        %941 = vmatprep.mubr.f32.mxu0 0.0
        %942 = vmatmul.mubr.f32.gmra.mxu0 %v844
        %v943 = vpop.f32.mrf.mxu0
        %v944 = vadd.f32 %v326, %v943
        %v945 = vpop.f32.mrf.mxu0
        %946 = vmatprep.mubr.f32.mxu0 0.0
        %947 = vmatmul.mubr.f32.gmra.mxu0 %v847
        %v948 = vpop.f32.mrf.mxu0
        %v949 = vadd.f32 %v326, %v948
        %v950 = vpop.f32.mrf.mxu0
        %951 = vmatprep.mubr.f32.mxu0 0.0
        %952 = vmatmul.mubr.f32.gmra.mxu0 %v850
        %v953 = vpop.f32.mrf.mxu0
        %v954 = vadd.f32 %v326, %v953
        %v955 = vpop.f32.mrf.mxu0
        %956 = vdwg.mxu0
        %vm957 = vcmp.ge.f32.partialorder %v919, 0.0
        %vm958 = vcmp.ge.f32.partialorder %v924, 0.0
        %vm959 = vcmp.ge.f32.partialorder %v929, 0.0
        %vm960 = vcmp.ge.f32.partialorder %v934, 0.0
        %vm961 = vcmp.ge.f32.partialorder %v939, 0.0
        %vm962 = vcmp.ge.f32.partialorder %v944, 0.0
        %vm963 = vcmp.ge.f32.partialorder %v949, 0.0
        %vm964 = vcmp.ge.f32.partialorder %v954, 0.0
        %v965 = vmul.f32 %v919, 0.01
        %v966 = vmul.f32 %v924, 0.01
        %v967 = vmul.f32 %v929, 0.01
        %v968 = vmul.f32 %v934, 0.01
        %v969 = vmul.f32 %v939, 0.01
        %v970 = vmul.f32 %v944, 0.01
        %v971 = vmul.f32 %v949, 0.01
        %v972 = vmul.f32 %v954, 0.01
        %v973 = vsel %vm957, %v919, %v965
        %v974 = vsel %vm958, %v924, %v966
        %v975 = vsel %vm959, %v929, %v967
        %v976 = vsel %vm960, %v934, %v968
        %v977 = vsel %vm961, %v939, %v969
        %v978 = vsel %vm962, %v944, %v970
        %v979 = vsel %vm963, %v949, %v971
        %v980 = vsel %vm964, %v954, %v972
        %v981 = vmax.f32 %v812, %v973
        %v982 = vmax.f32 %v813, %v974
        %v983 = vmax.f32 %v814, %v975
        %v984 = vmax.f32 %v815, %v976
        %v985 = vmax.f32 %v816, %v977
        %v986 = vmax.f32 %v817, %v978
        %v987 = vmax.f32 %v818, %v979
        %v988 = vmax.f32 %v819, %v980
        %v989 = vld [vmem:[%s301 + $0x100] sm:$0xff]
        %v990 = vld [vmem:[%s301 + $0x108] sm:$0xff]
        %v991 = vld [vmem:[%s301 + $0x110] sm:$0xff]
        %v992 = vld [vmem:[%s301 + $0x118] sm:$0xff]
        %v993 = vld [vmem:[%s301 + $0x120] sm:$0xff]
        %v994 = vld [vmem:[%s301 + $0x128] sm:$0xff]
        %v995 = vld [vmem:[%s301 + $0x130] sm:$0xff]
        %v996 = vld [vmem:[%s301 + $0x138] sm:$0xff]
        %v998 = vsel %vm328, %v989, 0
        %v1001 = vsel %vm328, %v990, 0
        %v1004 = vsel %vm328, %v991, 0
        %v1007 = vsel %vm328, %v992, 0
        %v1010 = vsel %vm328, %v993, 0
        %v1013 = vsel %vm328, %v994, 0
        %v1016 = vsel %vm328, %v995, 0
        %v1019 = vsel %vm328, %v996, 0
        %1021 = vmatprep.subr.mxu0 0.0
        %1022 = vmatpush1.msra.mxu0 0.0
        %1023 = vmatprep.subr.mxu0 0.0
        %1024 = vmatpush1.msra.mxu0 0.0
        %1025 = vmatprep.subr.mxu0 0.0
        %1026 = vmatpush1.msra.mxu0 0.0
        %1027 = vmatprep.subr.mxu0 0.0
        %1028 = vmatpush1.msra.mxu0 0.0
        %1029 = vmatprep.subr.mxu0 0.0
        %1030 = vmatpush1.msra.mxu0 0.0
        %1031 = vmatprep.subr.mxu0 0.0
        %1032 = vmatpush1.msra.mxu0 0.0
        %1033 = vmatprep.subr.mxu0 0.0
        %1034 = vmatpush1.msra.mxu0 0.0
        %1035 = vmatprep.subr.mxu0 0.0
        %1036 = vmatpush1.msra.mxu0 0.0
        %1037 = vmatprep.subr.mxu0 0.0
        %1038 = vmatpush1.msra.mxu0 0.0
        %1039 = vmatprep.subr.mxu0 0.0
        %1040 = vmatpush1.msra.mxu0 0.0
        %1041 = vmatprep.subr.mxu0 0.0
        %1042 = vmatpush1.msra.mxu0 0.0
        %1043 = vmatprep.subr.mxu0 0.0
        %1044 = vmatpush1.msra.mxu0 0.0
        %1045 = vmatprep.subr.mxu0 0.0
        %1046 = vmatpush1.msra.mxu0 0.0
        %1047 = vmatprep.subr.mxu0 0.0
        %1048 = vmatpush1.msra.mxu0 0.0
        %1049 = vmatprep.subr.mxu0 0.0
        %1050 = vmatpush1.msra.mxu0 0.0
        %1051 = vmatprep.subr.mxu0 0.0
        %1052 = vmatpush1.msra.mxu0 %v312
        %1053 = vmatprep.subr.mxu0 0.0
        %1054 = vmatpush2.msra.mxu0 0.0
        %1055 = vmatprep.subr.mxu0 0.0
        %1056 = vmatpush2.msra.mxu0 0.0
        %1057 = vmatprep.subr.mxu0 0.0
        %1058 = vmatpush2.msra.mxu0 0.0
        %1059 = vmatprep.subr.mxu0 0.0
        %1060 = vmatpush2.msra.mxu0 0.0
        %1061 = vmatprep.subr.mxu0 0.0
        %1062 = vmatpush2.msra.mxu0 0.0
        %1063 = vmatprep.subr.mxu0 0.0
        %1064 = vmatpush2.msra.mxu0 0.0
        %1065 = vmatprep.subr.mxu0 0.0
        %1066 = vmatpush2.msra.mxu0 0.0
        %1067 = vmatprep.subr.mxu0 0.0
        %1068 = vmatpush2.msra.mxu0 0.0
        %1069 = vmatprep.subr.mxu0 0.0
        %1070 = vmatpush2.msra.mxu0 0.0
        %1071 = vmatprep.subr.mxu0 0.0
        %1072 = vmatpush2.msra.mxu0 0.0
        %1073 = vmatprep.subr.mxu0 0.0
        %1074 = vmatpush2.msra.mxu0 0.0
        %1075 = vmatprep.subr.mxu0 0.0
        %1076 = vmatpush2.msra.mxu0 0.0
        %1077 = vmatprep.subr.mxu0 0.0
        %1078 = vmatpush2.msra.mxu0 0.0
        %1079 = vmatprep.subr.mxu0 0.0
        %1080 = vmatpush2.msra.mxu0 0.0
        %1081 = vmatprep.subr.mxu0 0.0
        %1082 = vmatpush2.msra.mxu0 0.0
        %1083 = vmatprep.subr.mxu0 0.0
        %1084 = vmatpush2.msra.mxu0 0.0
        %1085 = vmatprep.mubr.f32.mxu0 0.0
        %1086 = vmatmul.mubr.f32.gmra.mxu0 %v998
        %v1087 = vpop.f32.mrf.mxu0
        %v1088 = vadd.f32 %v326, %v1087
        %v1089 = vpop.f32.mrf.mxu0
        %1090 = vmatprep.mubr.f32.mxu0 0.0
        %1091 = vmatmul.mubr.f32.gmra.mxu0 %v1001
        %v1092 = vpop.f32.mrf.mxu0
        %v1093 = vadd.f32 %v326, %v1092
        %v1094 = vpop.f32.mrf.mxu0
        %1095 = vmatprep.mubr.f32.mxu0 0.0
        %1096 = vmatmul.mubr.f32.gmra.mxu0 %v1004
        %v1097 = vpop.f32.mrf.mxu0
        %v1098 = vadd.f32 %v326, %v1097
        %v1099 = vpop.f32.mrf.mxu0
        %1100 = vmatprep.mubr.f32.mxu0 0.0
        %1101 = vmatmul.mubr.f32.gmra.mxu0 %v1007
        %v1102 = vpop.f32.mrf.mxu0
        %v1103 = vadd.f32 %v326, %v1102
        %v1104 = vpop.f32.mrf.mxu0
        %1105 = vmatprep.mubr.f32.mxu0 0.0
        %1106 = vmatmul.mubr.f32.gmra.mxu0 %v1010
        %v1107 = vpop.f32.mrf.mxu0
        %v1108 = vadd.f32 %v326, %v1107
        %v1109 = vpop.f32.mrf.mxu0
        %1110 = vmatprep.mubr.f32.mxu0 0.0
        %1111 = vmatmul.mubr.f32.gmra.mxu0 %v1013
        %v1112 = vpop.f32.mrf.mxu0
        %v1113 = vadd.f32 %v326, %v1112
        %v1114 = vpop.f32.mrf.mxu0
        %1115 = vmatprep.mubr.f32.mxu0 0.0
        %1116 = vmatmul.mubr.f32.gmra.mxu0 %v1016
        %v1117 = vpop.f32.mrf.mxu0
        %v1118 = vadd.f32 %v326, %v1117
        %v1119 = vpop.f32.mrf.mxu0
        %1120 = vmatprep.mubr.f32.mxu0 0.0
        %1121 = vmatmul.mubr.f32.gmra.mxu0 %v1019
        %v1122 = vpop.f32.mrf.mxu0
        %v1123 = vadd.f32 %v326, %v1122
        %v1124 = vpop.f32.mrf.mxu0
        %1125 = vdwg.mxu0
        %vm1126 = vcmp.ge.f32.partialorder %v1088, 0.0
        %vm1127 = vcmp.ge.f32.partialorder %v1093, 0.0
        %vm1128 = vcmp.ge.f32.partialorder %v1098, 0.0
        %vm1129 = vcmp.ge.f32.partialorder %v1103, 0.0
        %vm1130 = vcmp.ge.f32.partialorder %v1108, 0.0
        %vm1131 = vcmp.ge.f32.partialorder %v1113, 0.0
        %vm1132 = vcmp.ge.f32.partialorder %v1118, 0.0
        %vm1133 = vcmp.ge.f32.partialorder %v1123, 0.0
        %v1134 = vmul.f32 %v1088, 0.01
        %v1135 = vmul.f32 %v1093, 0.01
        %v1136 = vmul.f32 %v1098, 0.01
        %v1137 = vmul.f32 %v1103, 0.01
        %v1138 = vmul.f32 %v1108, 0.01
        %v1139 = vmul.f32 %v1113, 0.01
        %v1140 = vmul.f32 %v1118, 0.01
        %v1141 = vmul.f32 %v1123, 0.01
        %v1142 = vsel %vm1126, %v1088, %v1134
        %v1143 = vsel %vm1127, %v1093, %v1135
        %v1144 = vsel %vm1128, %v1098, %v1136
        %v1145 = vsel %vm1129, %v1103, %v1137
        %v1146 = vsel %vm1130, %v1108, %v1138
        %v1147 = vsel %vm1131, %v1113, %v1139
        %v1148 = vsel %vm1132, %v1118, %v1140
        %v1149 = vsel %vm1133, %v1123, %v1141
        %v1150 = vmax.f32 %v981, %v1142
        %v1151 = vmax.f32 %v982, %v1143
        %v1152 = vmax.f32 %v983, %v1144
        %v1153 = vmax.f32 %v984, %v1145
        %v1154 = vmax.f32 %v985, %v1146
        %v1155 = vmax.f32 %v986, %v1147
        %v1156 = vmax.f32 %v987, %v1148
        %v1157 = vmax.f32 %v988, %v1149
        %v1158 = vld [vmem:[%s301 + $0x140] sm:$0xff]
        %v1159 = vld [vmem:[%s301 + $0x148] sm:$0xff]
        %v1160 = vld [vmem:[%s301 + $0x150] sm:$0xff]
        %v1161 = vld [vmem:[%s301 + $0x158] sm:$0xff]
        %v1162 = vld [vmem:[%s301 + $0x160] sm:$0xff]
        %v1163 = vld [vmem:[%s301 + $0x168] sm:$0xff]
        %v1164 = vld [vmem:[%s301 + $0x170] sm:$0xff]
        %v1165 = vld [vmem:[%s301 + $0x178] sm:$0xff]
        %v1167 = vsel %vm328, %v1158, 0
        %v1170 = vsel %vm328, %v1159, 0
        %v1173 = vsel %vm328, %v1160, 0
        %v1176 = vsel %vm328, %v1161, 0
        %v1179 = vsel %vm328, %v1162, 0
        %v1182 = vsel %vm328, %v1163, 0
        %v1185 = vsel %vm328, %v1164, 0
        %v1188 = vsel %vm328, %v1165, 0
        %1190 = vmatprep.subr.mxu0 0.0
        %1191 = vmatpush1.msra.mxu0 0.0
        %1192 = vmatprep.subr.mxu0 0.0
        %1193 = vmatpush1.msra.mxu0 0.0
        %1194 = vmatprep.subr.mxu0 0.0
        %1195 = vmatpush1.msra.mxu0 0.0
        %1196 = vmatprep.subr.mxu0 0.0
        %1197 = vmatpush1.msra.mxu0 0.0
        %1198 = vmatprep.subr.mxu0 0.0
        %1199 = vmatpush1.msra.mxu0 0.0
        %1200 = vmatprep.subr.mxu0 0.0
        %1201 = vmatpush1.msra.mxu0 0.0
        %1202 = vmatprep.subr.mxu0 0.0
        %1203 = vmatpush1.msra.mxu0 0.0
        %1204 = vmatprep.subr.mxu0 0.0
        %1205 = vmatpush1.msra.mxu0 0.0
        %1206 = vmatprep.subr.mxu0 0.0
        %1207 = vmatpush1.msra.mxu0 0.0
        %1208 = vmatprep.subr.mxu0 0.0
        %1209 = vmatpush1.msra.mxu0 0.0
        %1210 = vmatprep.subr.mxu0 0.0
        %1211 = vmatpush1.msra.mxu0 0.0
        %1212 = vmatprep.subr.mxu0 0.0
        %1213 = vmatpush1.msra.mxu0 0.0
        %1214 = vmatprep.subr.mxu0 0.0
        %1215 = vmatpush1.msra.mxu0 0.0
        %1216 = vmatprep.subr.mxu0 0.0
        %1217 = vmatpush1.msra.mxu0 0.0
        %1218 = vmatprep.subr.mxu0 0.0
        %1219 = vmatpush1.msra.mxu0 0.0
        %1220 = vmatprep.subr.mxu0 0.0
        %1221 = vmatpush1.msra.mxu0 %v312
        %1222 = vmatprep.subr.mxu0 0.0
        %1223 = vmatpush2.msra.mxu0 0.0
        %1224 = vmatprep.subr.mxu0 0.0
        %1225 = vmatpush2.msra.mxu0 0.0
        %1226 = vmatprep.subr.mxu0 0.0
        %1227 = vmatpush2.msra.mxu0 0.0
        %1228 = vmatprep.subr.mxu0 0.0
        %1229 = vmatpush2.msra.mxu0 0.0
        %1230 = vmatprep.subr.mxu0 0.0
        %1231 = vmatpush2.msra.mxu0 0.0
        %1232 = vmatprep.subr.mxu0 0.0
        %1233 = vmatpush2.msra.mxu0 0.0
        %1234 = vmatprep.subr.mxu0 0.0
        %1235 = vmatpush2.msra.mxu0 0.0
        %1236 = vmatprep.subr.mxu0 0.0
        %1237 = vmatpush2.msra.mxu0 0.0
        %1238 = vmatprep.subr.mxu0 0.0
        %1239 = vmatpush2.msra.mxu0 0.0
        %1240 = vmatprep.subr.mxu0 0.0
        %1241 = vmatpush2.msra.mxu0 0.0
        %1242 = vmatprep.subr.mxu0 0.0
        %1243 = vmatpush2.msra.mxu0 0.0
        %1244 = vmatprep.subr.mxu0 0.0
        %1245 = vmatpush2.msra.mxu0 0.0
        %1246 = vmatprep.subr.mxu0 0.0
        %1247 = vmatpush2.msra.mxu0 0.0
        %1248 = vmatprep.subr.mxu0 0.0
        %1249 = vmatpush2.msra.mxu0 0.0
        %1250 = vmatprep.subr.mxu0 0.0
        %1251 = vmatpush2.msra.mxu0 0.0
        %1252 = vmatprep.subr.mxu0 0.0
        %1253 = vmatpush2.msra.mxu0 0.0
        %1254 = vmatprep.mubr.f32.mxu0 0.0
        %1255 = vmatmul.mubr.f32.gmra.mxu0 %v1167
        %v1256 = vpop.f32.mrf.mxu0
        %v1257 = vadd.f32 %v326, %v1256
        %v1258 = vpop.f32.mrf.mxu0
        %1259 = vmatprep.mubr.f32.mxu0 0.0
        %1260 = vmatmul.mubr.f32.gmra.mxu0 %v1170
        %v1261 = vpop.f32.mrf.mxu0
        %v1262 = vadd.f32 %v326, %v1261
        %v1263 = vpop.f32.mrf.mxu0
        %1264 = vmatprep.mubr.f32.mxu0 0.0
        %1265 = vmatmul.mubr.f32.gmra.mxu0 %v1173
        %v1266 = vpop.f32.mrf.mxu0
        %v1267 = vadd.f32 %v326, %v1266
        %v1268 = vpop.f32.mrf.mxu0
        %1269 = vmatprep.mubr.f32.mxu0 0.0
        %1270 = vmatmul.mubr.f32.gmra.mxu0 %v1176
        %v1271 = vpop.f32.mrf.mxu0
        %v1272 = vadd.f32 %v326, %v1271
        %v1273 = vpop.f32.mrf.mxu0
        %1274 = vmatprep.mubr.f32.mxu0 0.0
        %1275 = vmatmul.mubr.f32.gmra.mxu0 %v1179
        %v1276 = vpop.f32.mrf.mxu0
        %v1277 = vadd.f32 %v326, %v1276
        %v1278 = vpop.f32.mrf.mxu0
        %1279 = vmatprep.mubr.f32.mxu0 0.0
        %1280 = vmatmul.mubr.f32.gmra.mxu0 %v1182
        %v1281 = vpop.f32.mrf.mxu0
        %v1282 = vadd.f32 %v326, %v1281
        %v1283 = vpop.f32.mrf.mxu0
        %1284 = vmatprep.mubr.f32.mxu0 0.0
        %1285 = vmatmul.mubr.f32.gmra.mxu0 %v1185
        %v1286 = vpop.f32.mrf.mxu0
        %v1287 = vadd.f32 %v326, %v1286
        %v1288 = vpop.f32.mrf.mxu0
        %1289 = vmatprep.mubr.f32.mxu0 0.0
        %1290 = vmatmul.mubr.f32.gmra.mxu0 %v1188
        %v1291 = vpop.f32.mrf.mxu0
        %v1292 = vadd.f32 %v326, %v1291
        %v1293 = vpop.f32.mrf.mxu0
        %1294 = vdwg.mxu0
        %vm1295 = vcmp.ge.f32.partialorder %v1257, 0.0
        %vm1296 = vcmp.ge.f32.partialorder %v1262, 0.0
        %vm1297 = vcmp.ge.f32.partialorder %v1267, 0.0
        %vm1298 = vcmp.ge.f32.partialorder %v1272, 0.0
        %vm1299 = vcmp.ge.f32.partialorder %v1277, 0.0
        %vm1300 = vcmp.ge.f32.partialorder %v1282, 0.0
        %vm1301 = vcmp.ge.f32.partialorder %v1287, 0.0
        %vm1302 = vcmp.ge.f32.partialorder %v1292, 0.0
        %v1303 = vmul.f32 %v1257, 0.01
        %v1304 = vmul.f32 %v1262, 0.01
        %v1305 = vmul.f32 %v1267, 0.01
        %v1306 = vmul.f32 %v1272, 0.01
        %v1307 = vmul.f32 %v1277, 0.01
        %v1308 = vmul.f32 %v1282, 0.01
        %v1309 = vmul.f32 %v1287, 0.01
        %v1310 = vmul.f32 %v1292, 0.01
        %v1311 = vsel %vm1295, %v1257, %v1303
        %v1312 = vsel %vm1296, %v1262, %v1304
        %v1313 = vsel %vm1297, %v1267, %v1305
        %v1314 = vsel %vm1298, %v1272, %v1306
        %v1315 = vsel %vm1299, %v1277, %v1307
        %v1316 = vsel %vm1300, %v1282, %v1308
        %v1317 = vsel %vm1301, %v1287, %v1309
        %v1318 = vsel %vm1302, %v1292, %v1310
        %v1319 = vmax.f32 %v1150, %v1311
        %v1320 = vmax.f32 %v1151, %v1312
        %v1321 = vmax.f32 %v1152, %v1313
        %v1322 = vmax.f32 %v1153, %v1314
        %v1323 = vmax.f32 %v1154, %v1315
        %v1324 = vmax.f32 %v1155, %v1316
        %v1325 = vmax.f32 %v1156, %v1317
        %v1326 = vmax.f32 %v1157, %v1318
        %v1327 = vld [vmem:[%s301 + $0x180] sm:$0xff]
        %v1328 = vld [vmem:[%s301 + $0x188] sm:$0xff]
        %v1329 = vld [vmem:[%s301 + $0x190] sm:$0xff]
        %v1330 = vld [vmem:[%s301 + $0x198] sm:$0xff]
        %v1331 = vld [vmem:[%s301 + $0x1a0] sm:$0xff]
        %v1332 = vld [vmem:[%s301 + $0x1a8] sm:$0xff]
        %v1333 = vld [vmem:[%s301 + $0x1b0] sm:$0xff]
        %v1334 = vld [vmem:[%s301 + $0x1b8] sm:$0xff]
        %v1336 = vsel %vm328, %v1327, 0
        %v1339 = vsel %vm328, %v1328, 0
        %v1342 = vsel %vm328, %v1329, 0
        %v1345 = vsel %vm328, %v1330, 0
        %v1348 = vsel %vm328, %v1331, 0
        %v1351 = vsel %vm328, %v1332, 0
        %v1354 = vsel %vm328, %v1333, 0
        %v1357 = vsel %vm328, %v1334, 0
        %1359 = vmatprep.subr.mxu0 0.0
        %1360 = vmatpush1.msra.mxu0 0.0
        %1361 = vmatprep.subr.mxu0 0.0
        %1362 = vmatpush1.msra.mxu0 0.0
        %1363 = vmatprep.subr.mxu0 0.0
        %1364 = vmatpush1.msra.mxu0 0.0
        %1365 = vmatprep.subr.mxu0 0.0
        %1366 = vmatpush1.msra.mxu0 0.0
        %1367 = vmatprep.subr.mxu0 0.0
        %1368 = vmatpush1.msra.mxu0 0.0
        %1369 = vmatprep.subr.mxu0 0.0
        %1370 = vmatpush1.msra.mxu0 0.0
        %1371 = vmatprep.subr.mxu0 0.0
        %1372 = vmatpush1.msra.mxu0 0.0
        %1373 = vmatprep.subr.mxu0 0.0
        %1374 = vmatpush1.msra.mxu0 0.0
        %1375 = vmatprep.subr.mxu0 0.0
        %1376 = vmatpush1.msra.mxu0 0.0
        %1377 = vmatprep.subr.mxu0 0.0
        %1378 = vmatpush1.msra.mxu0 0.0
        %1379 = vmatprep.subr.mxu0 0.0
        %1380 = vmatpush1.msra.mxu0 0.0
        %1381 = vmatprep.subr.mxu0 0.0
        %1382 = vmatpush1.msra.mxu0 0.0
        %1383 = vmatprep.subr.mxu0 0.0
        %1384 = vmatpush1.msra.mxu0 0.0
        %1385 = vmatprep.subr.mxu0 0.0
        %1386 = vmatpush1.msra.mxu0 0.0
        %1387 = vmatprep.subr.mxu0 0.0
        %1388 = vmatpush1.msra.mxu0 0.0
        %1389 = vmatprep.subr.mxu0 0.0
        %1390 = vmatpush1.msra.mxu0 %v312
        %1391 = vmatprep.subr.mxu0 0.0
        %1392 = vmatpush2.msra.mxu0 0.0
        %1393 = vmatprep.subr.mxu0 0.0
        %1394 = vmatpush2.msra.mxu0 0.0
        %1395 = vmatprep.subr.mxu0 0.0
        %1396 = vmatpush2.msra.mxu0 0.0
        %1397 = vmatprep.subr.mxu0 0.0
        %1398 = vmatpush2.msra.mxu0 0.0
        %1399 = vmatprep.subr.mxu0 0.0
        %1400 = vmatpush2.msra.mxu0 0.0
        %1401 = vmatprep.subr.mxu0 0.0
        %1402 = vmatpush2.msra.mxu0 0.0
        %1403 = vmatprep.subr.mxu0 0.0
        %1404 = vmatpush2.msra.mxu0 0.0
        %1405 = vmatprep.subr.mxu0 0.0
        %1406 = vmatpush2.msra.mxu0 0.0
        %1407 = vmatprep.subr.mxu0 0.0
        %1408 = vmatpush2.msra.mxu0 0.0
        %1409 = vmatprep.subr.mxu0 0.0
        %1410 = vmatpush2.msra.mxu0 0.0
        %1411 = vmatprep.subr.mxu0 0.0
        %1412 = vmatpush2.msra.mxu0 0.0
        %1413 = vmatprep.subr.mxu0 0.0
        %1414 = vmatpush2.msra.mxu0 0.0
        %1415 = vmatprep.subr.mxu0 0.0
        %1416 = vmatpush2.msra.mxu0 0.0
        %1417 = vmatprep.subr.mxu0 0.0
        %1418 = vmatpush2.msra.mxu0 0.0
        %1419 = vmatprep.subr.mxu0 0.0
        %1420 = vmatpush2.msra.mxu0 0.0
        %1421 = vmatprep.subr.mxu0 0.0
        %1422 = vmatpush2.msra.mxu0 0.0
        %1423 = vmatprep.mubr.f32.mxu0 0.0
        %1424 = vmatmul.mubr.f32.gmra.mxu0 %v1336
        %v1425 = vpop.f32.mrf.mxu0
        %v1426 = vadd.f32 %v326, %v1425
        %v1427 = vpop.f32.mrf.mxu0
        %1428 = vmatprep.mubr.f32.mxu0 0.0
        %1429 = vmatmul.mubr.f32.gmra.mxu0 %v1339
        %v1430 = vpop.f32.mrf.mxu0
        %v1431 = vadd.f32 %v326, %v1430
        %v1432 = vpop.f32.mrf.mxu0
        %1433 = vmatprep.mubr.f32.mxu0 0.0
        %1434 = vmatmul.mubr.f32.gmra.mxu0 %v1342
        %v1435 = vpop.f32.mrf.mxu0
        %v1436 = vadd.f32 %v326, %v1435
        %v1437 = vpop.f32.mrf.mxu0
        %1438 = vmatprep.mubr.f32.mxu0 0.0
        %1439 = vmatmul.mubr.f32.gmra.mxu0 %v1345
        %v1440 = vpop.f32.mrf.mxu0
        %v1441 = vadd.f32 %v326, %v1440
        %v1442 = vpop.f32.mrf.mxu0
        %1443 = vmatprep.mubr.f32.mxu0 0.0
        %1444 = vmatmul.mubr.f32.gmra.mxu0 %v1348
        %v1445 = vpop.f32.mrf.mxu0
        %v1446 = vadd.f32 %v326, %v1445
        %v1447 = vpop.f32.mrf.mxu0
        %1448 = vmatprep.mubr.f32.mxu0 0.0
        %1449 = vmatmul.mubr.f32.gmra.mxu0 %v1351
        %v1450 = vpop.f32.mrf.mxu0
        %v1451 = vadd.f32 %v326, %v1450
        %v1452 = vpop.f32.mrf.mxu0
        %1453 = vmatprep.mubr.f32.mxu0 0.0
        %1454 = vmatmul.mubr.f32.gmra.mxu0 %v1354
        %v1455 = vpop.f32.mrf.mxu0
        %v1456 = vadd.f32 %v326, %v1455
        %v1457 = vpop.f32.mrf.mxu0
        %1458 = vmatprep.mubr.f32.mxu0 0.0
        %1459 = vmatmul.mubr.f32.gmra.mxu0 %v1357
        %v1460 = vpop.f32.mrf.mxu0
        %v1461 = vadd.f32 %v326, %v1460
        %v1462 = vpop.f32.mrf.mxu0
        %1463 = vdwg.mxu0
        %vm1464 = vcmp.ge.f32.partialorder %v1426, 0.0
        %vm1465 = vcmp.ge.f32.partialorder %v1431, 0.0
        %vm1466 = vcmp.ge.f32.partialorder %v1436, 0.0
        %vm1467 = vcmp.ge.f32.partialorder %v1441, 0.0
        %vm1468 = vcmp.ge.f32.partialorder %v1446, 0.0
        %vm1469 = vcmp.ge.f32.partialorder %v1451, 0.0
        %vm1470 = vcmp.ge.f32.partialorder %v1456, 0.0
        %vm1471 = vcmp.ge.f32.partialorder %v1461, 0.0
        %v1472 = vmul.f32 %v1426, 0.01
        %v1473 = vmul.f32 %v1431, 0.01
        %v1474 = vmul.f32 %v1436, 0.01
        %v1475 = vmul.f32 %v1441, 0.01
        %v1476 = vmul.f32 %v1446, 0.01
        %v1477 = vmul.f32 %v1451, 0.01
        %v1478 = vmul.f32 %v1456, 0.01
        %v1479 = vmul.f32 %v1461, 0.01
        %v1480 = vsel %vm1464, %v1426, %v1472
        %v1481 = vsel %vm1465, %v1431, %v1473
        %v1482 = vsel %vm1466, %v1436, %v1474
        %v1483 = vsel %vm1467, %v1441, %v1475
        %v1484 = vsel %vm1468, %v1446, %v1476
        %v1485 = vsel %vm1469, %v1451, %v1477
        %v1486 = vsel %vm1470, %v1456, %v1478
        %v1487 = vsel %vm1471, %v1461, %v1479
        %v1488 = vmax.f32 %v1319, %v1480
        %v1489 = vmax.f32 %v1320, %v1481
        %v1490 = vmax.f32 %v1321, %v1482
        %v1491 = vmax.f32 %v1322, %v1483
        %v1492 = vmax.f32 %v1323, %v1484
        %v1493 = vmax.f32 %v1324, %v1485
        %v1494 = vmax.f32 %v1325, %v1486
        %v1495 = vmax.f32 %v1326, %v1487
        %v1496 = vld [vmem:[%s301 + $0x1c0] sm:$0xff]
        %v1497 = vld [vmem:[%s301 + $0x1c8] sm:$0xff]
        %v1498 = vld [vmem:[%s301 + $0x1d0] sm:$0xff]
        %v1499 = vld [vmem:[%s301 + $0x1d8] sm:$0xff]
        %v1500 = vld [vmem:[%s301 + $0x1e0] sm:$0xff]
        %v1501 = vld [vmem:[%s301 + $0x1e8] sm:$0xff]
        %v1502 = vld [vmem:[%s301 + $0x1f0] sm:$0xff]
        %v1503 = vld [vmem:[%s301 + $0x1f8] sm:$0xff]
        %v1505 = vsel %vm328, %v1496, 0
        %v1508 = vsel %vm328, %v1497, 0
        %v1511 = vsel %vm328, %v1498, 0
        %v1514 = vsel %vm328, %v1499, 0
        %v1517 = vsel %vm328, %v1500, 0
        %v1520 = vsel %vm328, %v1501, 0
        %v1523 = vsel %vm328, %v1502, 0
        %v1526 = vsel %vm328, %v1503, 0
        %1528 = vmatprep.subr.mxu0 0.0
        %1529 = vmatpush1.msra.mxu0 0.0
        %1530 = vmatprep.subr.mxu0 0.0
        %1531 = vmatpush1.msra.mxu0 0.0
        %1532 = vmatprep.subr.mxu0 0.0
        %1533 = vmatpush1.msra.mxu0 0.0
        %1534 = vmatprep.subr.mxu0 0.0
        %1535 = vmatpush1.msra.mxu0 0.0
        %1536 = vmatprep.subr.mxu0 0.0
        %1537 = vmatpush1.msra.mxu0 0.0
        %1538 = vmatprep.subr.mxu0 0.0
        %1539 = vmatpush1.msra.mxu0 0.0
        %1540 = vmatprep.subr.mxu0 0.0
        %1541 = vmatpush1.msra.mxu0 0.0
        %1542 = vmatprep.subr.mxu0 0.0
        %1543 = vmatpush1.msra.mxu0 0.0
        %1544 = vmatprep.subr.mxu0 0.0
        %1545 = vmatpush1.msra.mxu0 0.0
        %1546 = vmatprep.subr.mxu0 0.0
        %1547 = vmatpush1.msra.mxu0 0.0
        %1548 = vmatprep.subr.mxu0 0.0
        %1549 = vmatpush1.msra.mxu0 0.0
        %1550 = vmatprep.subr.mxu0 0.0
        %1551 = vmatpush1.msra.mxu0 0.0
        %1552 = vmatprep.subr.mxu0 0.0
        %1553 = vmatpush1.msra.mxu0 0.0
        %1554 = vmatprep.subr.mxu0 0.0
        %1555 = vmatpush1.msra.mxu0 0.0
        %1556 = vmatprep.subr.mxu0 0.0
        %1557 = vmatpush1.msra.mxu0 0.0
        %1558 = vmatprep.subr.mxu0 0.0
        %1559 = vmatpush1.msra.mxu0 %v312
        %1560 = vmatprep.subr.mxu0 0.0
        %1561 = vmatpush2.msra.mxu0 0.0
        %1562 = vmatprep.subr.mxu0 0.0
        %1563 = vmatpush2.msra.mxu0 0.0
        %1564 = vmatprep.subr.mxu0 0.0
        %1565 = vmatpush2.msra.mxu0 0.0
        %1566 = vmatprep.subr.mxu0 0.0
        %1567 = vmatpush2.msra.mxu0 0.0
        %1568 = vmatprep.subr.mxu0 0.0
        %1569 = vmatpush2.msra.mxu0 0.0
        %1570 = vmatprep.subr.mxu0 0.0
        %1571 = vmatpush2.msra.mxu0 0.0
        %1572 = vmatprep.subr.mxu0 0.0
        %1573 = vmatpush2.msra.mxu0 0.0
        %1574 = vmatprep.subr.mxu0 0.0
        %1575 = vmatpush2.msra.mxu0 0.0
        %1576 = vmatprep.subr.mxu0 0.0
        %1577 = vmatpush2.msra.mxu0 0.0
        %1578 = vmatprep.subr.mxu0 0.0
        %1579 = vmatpush2.msra.mxu0 0.0
        %1580 = vmatprep.subr.mxu0 0.0
        %1581 = vmatpush2.msra.mxu0 0.0
        %1582 = vmatprep.subr.mxu0 0.0
        %1583 = vmatpush2.msra.mxu0 0.0
        %1584 = vmatprep.subr.mxu0 0.0
        %1585 = vmatpush2.msra.mxu0 0.0
        %1586 = vmatprep.subr.mxu0 0.0
        %1587 = vmatpush2.msra.mxu0 0.0
        %1588 = vmatprep.subr.mxu0 0.0
        %1589 = vmatpush2.msra.mxu0 0.0
        %1590 = vmatprep.subr.mxu0 0.0
        %1591 = vmatpush2.msra.mxu0 0.0
        %1592 = vmatprep.mubr.f32.mxu0 0.0
        %1593 = vmatmul.mubr.f32.gmra.mxu0 %v1505
        %v1594 = vpop.f32.mrf.mxu0
        %v1595 = vadd.f32 %v326, %v1594
        %v1596 = vpop.f32.mrf.mxu0
        %1597 = vmatprep.mubr.f32.mxu0 0.0
        %1598 = vmatmul.mubr.f32.gmra.mxu0 %v1508
        %v1599 = vpop.f32.mrf.mxu0
        %v1600 = vadd.f32 %v326, %v1599
        %v1601 = vpop.f32.mrf.mxu0
        %1602 = vmatprep.mubr.f32.mxu0 0.0
        %1603 = vmatmul.mubr.f32.gmra.mxu0 %v1511
        %v1604 = vpop.f32.mrf.mxu0
        %v1605 = vadd.f32 %v326, %v1604
        %v1606 = vpop.f32.mrf.mxu0
        %1607 = vmatprep.mubr.f32.mxu0 0.0
        %1608 = vmatmul.mubr.f32.gmra.mxu0 %v1514
        %v1609 = vpop.f32.mrf.mxu0
        %v1610 = vadd.f32 %v326, %v1609
        %v1611 = vpop.f32.mrf.mxu0
        %1612 = vmatprep.mubr.f32.mxu0 0.0
        %1613 = vmatmul.mubr.f32.gmra.mxu0 %v1517
        %v1614 = vpop.f32.mrf.mxu0
        %v1615 = vadd.f32 %v326, %v1614
        %v1616 = vpop.f32.mrf.mxu0
        %1617 = vmatprep.mubr.f32.mxu0 0.0
        %1618 = vmatmul.mubr.f32.gmra.mxu0 %v1520
        %v1619 = vpop.f32.mrf.mxu0
        %v1620 = vadd.f32 %v326, %v1619
        %v1621 = vpop.f32.mrf.mxu0
        %1622 = vmatprep.mubr.f32.mxu0 0.0
        %1623 = vmatmul.mubr.f32.gmra.mxu0 %v1523
        %v1624 = vpop.f32.mrf.mxu0
        %v1625 = vadd.f32 %v326, %v1624
        %v1626 = vpop.f32.mrf.mxu0
        %1627 = vmatprep.mubr.f32.mxu0 0.0
        %1628 = vmatmul.mubr.f32.gmra.mxu0 %v1526
        %v1629 = vpop.f32.mrf.mxu0
        %v1630 = vadd.f32 %v326, %v1629
        %v1631 = vpop.f32.mrf.mxu0
        %1632 = vdwg.mxu0
        %vm1633 = vcmp.ge.f32.partialorder %v1595, 0.0
        %vm1634 = vcmp.ge.f32.partialorder %v1600, 0.0
        %vm1635 = vcmp.ge.f32.partialorder %v1605, 0.0
        %vm1636 = vcmp.ge.f32.partialorder %v1610, 0.0
        %vm1637 = vcmp.ge.f32.partialorder %v1615, 0.0
        %vm1638 = vcmp.ge.f32.partialorder %v1620, 0.0
        %vm1639 = vcmp.ge.f32.partialorder %v1625, 0.0
        %vm1640 = vcmp.ge.f32.partialorder %v1630, 0.0
        %v1641 = vmul.f32 %v1595, 0.01
        %v1642 = vmul.f32 %v1600, 0.01
        %v1643 = vmul.f32 %v1605, 0.01
        %v1644 = vmul.f32 %v1610, 0.01
        %v1645 = vmul.f32 %v1615, 0.01
        %v1646 = vmul.f32 %v1620, 0.01
        %v1647 = vmul.f32 %v1625, 0.01
        %v1648 = vmul.f32 %v1630, 0.01
        %v1649 = vsel %vm1633, %v1595, %v1641
        %v1650 = vsel %vm1634, %v1600, %v1642
        %v1651 = vsel %vm1635, %v1605, %v1643
        %v1652 = vsel %vm1636, %v1610, %v1644
        %v1653 = vsel %vm1637, %v1615, %v1645
        %v1654 = vsel %vm1638, %v1620, %v1646
        %v1655 = vsel %vm1639, %v1625, %v1647
        %v1656 = vsel %vm1640, %v1630, %v1648
        %v1657 = vmax.f32 %v1488, %v1649
        %v1658 = vmax.f32 %v1489, %v1650
        %v1659 = vmax.f32 %v1490, %v1651
        %v1660 = vmax.f32 %v1491, %v1652
        %v1661 = vmax.f32 %v1492, %v1653
        %v1662 = vmax.f32 %v1493, %v1654
        %v1663 = vmax.f32 %v1494, %v1655
        %v1664 = vmax.f32 %v1495, %v1656
        %v1665 = vld [vmem:[%s301 + $0x200] sm:$0xff]
        %v1666 = vld [vmem:[%s301 + $0x208] sm:$0xff]
        %v1667 = vld [vmem:[%s301 + $0x210] sm:$0xff]
        %v1668 = vld [vmem:[%s301 + $0x218] sm:$0xff]
        %v1669 = vld [vmem:[%s301 + $0x220] sm:$0xff]
        %v1670 = vld [vmem:[%s301 + $0x228] sm:$0xff]
        %v1671 = vld [vmem:[%s301 + $0x230] sm:$0xff]
        %v1672 = vld [vmem:[%s301 + $0x238] sm:$0xff]
        %v1674 = vsel %vm328, %v1665, 0
        %v1677 = vsel %vm328, %v1666, 0
        %v1680 = vsel %vm328, %v1667, 0
        %v1683 = vsel %vm328, %v1668, 0
        %v1686 = vsel %vm328, %v1669, 0
        %v1689 = vsel %vm328, %v1670, 0
        %v1692 = vsel %vm328, %v1671, 0
        %v1695 = vsel %vm328, %v1672, 0
        %1697 = vmatprep.subr.mxu0 0.0
        %1698 = vmatpush1.msra.mxu0 0.0
        %1699 = vmatprep.subr.mxu0 0.0
        %1700 = vmatpush1.msra.mxu0 0.0
        %1701 = vmatprep.subr.mxu0 0.0
        %1702 = vmatpush1.msra.mxu0 0.0
        %1703 = vmatprep.subr.mxu0 0.0
        %1704 = vmatpush1.msra.mxu0 0.0
        %1705 = vmatprep.subr.mxu0 0.0
        %1706 = vmatpush1.msra.mxu0 0.0
        %1707 = vmatprep.subr.mxu0 0.0
        %1708 = vmatpush1.msra.mxu0 0.0
        %1709 = vmatprep.subr.mxu0 0.0
        %1710 = vmatpush1.msra.mxu0 0.0
        %1711 = vmatprep.subr.mxu0 0.0
        %1712 = vmatpush1.msra.mxu0 0.0
        %1713 = vmatprep.subr.mxu0 0.0
        %1714 = vmatpush1.msra.mxu0 0.0
        %1715 = vmatprep.subr.mxu0 0.0
        %1716 = vmatpush1.msra.mxu0 0.0
        %1717 = vmatprep.subr.mxu0 0.0
        %1718 = vmatpush1.msra.mxu0 0.0
        %1719 = vmatprep.subr.mxu0 0.0
        %1720 = vmatpush1.msra.mxu0 0.0
        %1721 = vmatprep.subr.mxu0 0.0
        %1722 = vmatpush1.msra.mxu0 0.0
        %1723 = vmatprep.subr.mxu0 0.0
        %1724 = vmatpush1.msra.mxu0 0.0
        %1725 = vmatprep.subr.mxu0 0.0
        %1726 = vmatpush1.msra.mxu0 0.0
        %1727 = vmatprep.subr.mxu0 0.0
        %1728 = vmatpush1.msra.mxu0 %v312
        %1729 = vmatprep.subr.mxu0 0.0
        %1730 = vmatpush2.msra.mxu0 0.0
        %1731 = vmatprep.subr.mxu0 0.0
        %1732 = vmatpush2.msra.mxu0 0.0
        %1733 = vmatprep.subr.mxu0 0.0
        %1734 = vmatpush2.msra.mxu0 0.0
        %1735 = vmatprep.subr.mxu0 0.0
        %1736 = vmatpush2.msra.mxu0 0.0
        %1737 = vmatprep.subr.mxu0 0.0
        %1738 = vmatpush2.msra.mxu0 0.0
        %1739 = vmatprep.subr.mxu0 0.0
        %1740 = vmatpush2.msra.mxu0 0.0
        %1741 = vmatprep.subr.mxu0 0.0
        %1742 = vmatpush2.msra.mxu0 0.0
        %1743 = vmatprep.subr.mxu0 0.0
        %1744 = vmatpush2.msra.mxu0 0.0
        %1745 = vmatprep.subr.mxu0 0.0
        %1746 = vmatpush2.msra.mxu0 0.0
        %1747 = vmatprep.subr.mxu0 0.0
        %1748 = vmatpush2.msra.mxu0 0.0
        %1749 = vmatprep.subr.mxu0 0.0
        %1750 = vmatpush2.msra.mxu0 0.0
        %1751 = vmatprep.subr.mxu0 0.0
        %1752 = vmatpush2.msra.mxu0 0.0
        %1753 = vmatprep.subr.mxu0 0.0
        %1754 = vmatpush2.msra.mxu0 0.0
        %1755 = vmatprep.subr.mxu0 0.0
        %1756 = vmatpush2.msra.mxu0 0.0
        %1757 = vmatprep.subr.mxu0 0.0
        %1758 = vmatpush2.msra.mxu0 0.0
        %1759 = vmatprep.subr.mxu0 0.0
        %1760 = vmatpush2.msra.mxu0 0.0
        %1761 = vmatprep.mubr.f32.mxu0 0.0
        %1762 = vmatmul.mubr.f32.gmra.mxu0 %v1674
        %v1763 = vpop.f32.mrf.mxu0
        %v1764 = vadd.f32 %v326, %v1763
        %v1765 = vpop.f32.mrf.mxu0
        %1766 = vmatprep.mubr.f32.mxu0 0.0
        %1767 = vmatmul.mubr.f32.gmra.mxu0 %v1677
        %v1768 = vpop.f32.mrf.mxu0
        %v1769 = vadd.f32 %v326, %v1768
        %v1770 = vpop.f32.mrf.mxu0
        %1771 = vmatprep.mubr.f32.mxu0 0.0
        %1772 = vmatmul.mubr.f32.gmra.mxu0 %v1680
        %v1773 = vpop.f32.mrf.mxu0
        %v1774 = vadd.f32 %v326, %v1773
        %v1775 = vpop.f32.mrf.mxu0
        %1776 = vmatprep.mubr.f32.mxu0 0.0
        %1777 = vmatmul.mubr.f32.gmra.mxu0 %v1683
        %v1778 = vpop.f32.mrf.mxu0
        %v1779 = vadd.f32 %v326, %v1778
        %v1780 = vpop.f32.mrf.mxu0
        %1781 = vmatprep.mubr.f32.mxu0 0.0
        %1782 = vmatmul.mubr.f32.gmra.mxu0 %v1686
        %v1783 = vpop.f32.mrf.mxu0
        %v1784 = vadd.f32 %v326, %v1783
        %v1785 = vpop.f32.mrf.mxu0
        %1786 = vmatprep.mubr.f32.mxu0 0.0
        %1787 = vmatmul.mubr.f32.gmra.mxu0 %v1689
        %v1788 = vpop.f32.mrf.mxu0
        %v1789 = vadd.f32 %v326, %v1788
        %v1790 = vpop.f32.mrf.mxu0
        %1791 = vmatprep.mubr.f32.mxu0 0.0
        %1792 = vmatmul.mubr.f32.gmra.mxu0 %v1692
        %v1793 = vpop.f32.mrf.mxu0
        %v1794 = vadd.f32 %v326, %v1793
        %v1795 = vpop.f32.mrf.mxu0
        %1796 = vmatprep.mubr.f32.mxu0 0.0
        %1797 = vmatmul.mubr.f32.gmra.mxu0 %v1695
        %v1798 = vpop.f32.mrf.mxu0
        %v1799 = vadd.f32 %v326, %v1798
        %v1800 = vpop.f32.mrf.mxu0
        %1801 = vdwg.mxu0
        %vm1802 = vcmp.ge.f32.partialorder %v1764, 0.0
        %vm1803 = vcmp.ge.f32.partialorder %v1769, 0.0
        %vm1804 = vcmp.ge.f32.partialorder %v1774, 0.0
        %vm1805 = vcmp.ge.f32.partialorder %v1779, 0.0
        %vm1806 = vcmp.ge.f32.partialorder %v1784, 0.0
        %vm1807 = vcmp.ge.f32.partialorder %v1789, 0.0
        %vm1808 = vcmp.ge.f32.partialorder %v1794, 0.0
        %vm1809 = vcmp.ge.f32.partialorder %v1799, 0.0
        %v1810 = vmul.f32 %v1764, 0.01
        %v1811 = vmul.f32 %v1769, 0.01
        %v1812 = vmul.f32 %v1774, 0.01
        %v1813 = vmul.f32 %v1779, 0.01
        %v1814 = vmul.f32 %v1784, 0.01
        %v1815 = vmul.f32 %v1789, 0.01
        %v1816 = vmul.f32 %v1794, 0.01
        %v1817 = vmul.f32 %v1799, 0.01
        %v1818 = vsel %vm1802, %v1764, %v1810
        %v1819 = vsel %vm1803, %v1769, %v1811
        %v1820 = vsel %vm1804, %v1774, %v1812
        %v1821 = vsel %vm1805, %v1779, %v1813
        %v1822 = vsel %vm1806, %v1784, %v1814
        %v1823 = vsel %vm1807, %v1789, %v1815
        %v1824 = vsel %vm1808, %v1794, %v1816
        %v1825 = vsel %vm1809, %v1799, %v1817
        %v1826 = vmax.f32 %v1657, %v1818
        %v1827 = vmax.f32 %v1658, %v1819
        %v1828 = vmax.f32 %v1659, %v1820
        %v1829 = vmax.f32 %v1660, %v1821
        %v1830 = vmax.f32 %v1661, %v1822
        %v1831 = vmax.f32 %v1662, %v1823
        %v1832 = vmax.f32 %v1663, %v1824
        %v1833 = vmax.f32 %v1664, %v1825
        %v1834 = vld [vmem:[%s301 + $0x240] sm:$0xff]
        %v1835 = vld [vmem:[%s301 + $0x248] sm:$0xff]
        %v1836 = vld [vmem:[%s301 + $0x250] sm:$0xff]
        %v1837 = vld [vmem:[%s301 + $0x258] sm:$0xff]
        %v1838 = vld [vmem:[%s301 + $0x260] sm:$0xff]
        %v1839 = vld [vmem:[%s301 + $0x268] sm:$0xff]
        %v1840 = vld [vmem:[%s301 + $0x270] sm:$0xff]
        %v1841 = vld [vmem:[%s301 + $0x278] sm:$0xff]
        %v1843 = vsel %vm328, %v1834, 0
        %v1846 = vsel %vm328, %v1835, 0
        %v1849 = vsel %vm328, %v1836, 0
        %v1852 = vsel %vm328, %v1837, 0
        %v1855 = vsel %vm328, %v1838, 0
        %v1858 = vsel %vm328, %v1839, 0
        %v1861 = vsel %vm328, %v1840, 0
        %v1864 = vsel %vm328, %v1841, 0
        %1866 = vmatprep.subr.mxu0 0.0
        %1867 = vmatpush1.msra.mxu0 0.0
        %1868 = vmatprep.subr.mxu0 0.0
        %1869 = vmatpush1.msra.mxu0 0.0
        %1870 = vmatprep.subr.mxu0 0.0
        %1871 = vmatpush1.msra.mxu0 0.0
        %1872 = vmatprep.subr.mxu0 0.0
        %1873 = vmatpush1.msra.mxu0 0.0
        %1874 = vmatprep.subr.mxu0 0.0
        %1875 = vmatpush1.msra.mxu0 0.0
        %1876 = vmatprep.subr.mxu0 0.0
        %1877 = vmatpush1.msra.mxu0 0.0
        %1878 = vmatprep.subr.mxu0 0.0
        %1879 = vmatpush1.msra.mxu0 0.0
        %1880 = vmatprep.subr.mxu0 0.0
        %1881 = vmatpush1.msra.mxu0 0.0
        %1882 = vmatprep.subr.mxu0 0.0
        %1883 = vmatpush1.msra.mxu0 0.0
        %1884 = vmatprep.subr.mxu0 0.0
        %1885 = vmatpush1.msra.mxu0 0.0
        %1886 = vmatprep.subr.mxu0 0.0
        %1887 = vmatpush1.msra.mxu0 0.0
        %1888 = vmatprep.subr.mxu0 0.0
        %1889 = vmatpush1.msra.mxu0 0.0
        %1890 = vmatprep.subr.mxu0 0.0
        %1891 = vmatpush1.msra.mxu0 0.0
        %1892 = vmatprep.subr.mxu0 0.0
        %1893 = vmatpush1.msra.mxu0 0.0
        %1894 = vmatprep.subr.mxu0 0.0
        %1895 = vmatpush1.msra.mxu0 0.0
        %1896 = vmatprep.subr.mxu0 0.0
        %1897 = vmatpush1.msra.mxu0 %v312
        %1898 = vmatprep.subr.mxu0 0.0
        %1899 = vmatpush2.msra.mxu0 0.0
        %1900 = vmatprep.subr.mxu0 0.0
        %1901 = vmatpush2.msra.mxu0 0.0
        %1902 = vmatprep.subr.mxu0 0.0
        %1903 = vmatpush2.msra.mxu0 0.0
        %1904 = vmatprep.subr.mxu0 0.0
        %1905 = vmatpush2.msra.mxu0 0.0
        %1906 = vmatprep.subr.mxu0 0.0
        %1907 = vmatpush2.msra.mxu0 0.0
        %1908 = vmatprep.subr.mxu0 0.0
        %1909 = vmatpush2.msra.mxu0 0.0
        %1910 = vmatprep.subr.mxu0 0.0
        %1911 = vmatpush2.msra.mxu0 0.0
        %1912 = vmatprep.subr.mxu0 0.0
        %1913 = vmatpush2.msra.mxu0 0.0
        %1914 = vmatprep.subr.mxu0 0.0
        %1915 = vmatpush2.msra.mxu0 0.0
        %1916 = vmatprep.subr.mxu0 0.0
        %1917 = vmatpush2.msra.mxu0 0.0
        %1918 = vmatprep.subr.mxu0 0.0
        %1919 = vmatpush2.msra.mxu0 0.0
        %1920 = vmatprep.subr.mxu0 0.0
        %1921 = vmatpush2.msra.mxu0 0.0
        %1922 = vmatprep.subr.mxu0 0.0
        %1923 = vmatpush2.msra.mxu0 0.0
        %1924 = vmatprep.subr.mxu0 0.0
        %1925 = vmatpush2.msra.mxu0 0.0
        %1926 = vmatprep.subr.mxu0 0.0
        %1927 = vmatpush2.msra.mxu0 0.0
        %1928 = vmatprep.subr.mxu0 0.0
        %1929 = vmatpush2.msra.mxu0 0.0
        %1930 = vmatprep.mubr.f32.mxu0 0.0
        %1931 = vmatmul.mubr.f32.gmra.mxu0 %v1843
        %v1932 = vpop.f32.mrf.mxu0
        %v1933 = vadd.f32 %v326, %v1932
        %v1934 = vpop.f32.mrf.mxu0
        %1935 = vmatprep.mubr.f32.mxu0 0.0
        %1936 = vmatmul.mubr.f32.gmra.mxu0 %v1846
        %v1937 = vpop.f32.mrf.mxu0
        %v1938 = vadd.f32 %v326, %v1937
        %v1939 = vpop.f32.mrf.mxu0
        %1940 = vmatprep.mubr.f32.mxu0 0.0
        %1941 = vmatmul.mubr.f32.gmra.mxu0 %v1849
        %v1942 = vpop.f32.mrf.mxu0
        %v1943 = vadd.f32 %v326, %v1942
        %v1944 = vpop.f32.mrf.mxu0
        %1945 = vmatprep.mubr.f32.mxu0 0.0
        %1946 = vmatmul.mubr.f32.gmra.mxu0 %v1852
        %v1947 = vpop.f32.mrf.mxu0
        %v1948 = vadd.f32 %v326, %v1947
        %v1949 = vpop.f32.mrf.mxu0
        %1950 = vmatprep.mubr.f32.mxu0 0.0
        %1951 = vmatmul.mubr.f32.gmra.mxu0 %v1855
        %v1952 = vpop.f32.mrf.mxu0
        %v1953 = vadd.f32 %v326, %v1952
        %v1954 = vpop.f32.mrf.mxu0
        %1955 = vmatprep.mubr.f32.mxu0 0.0
        %1956 = vmatmul.mubr.f32.gmra.mxu0 %v1858
        %v1957 = vpop.f32.mrf.mxu0
        %v1958 = vadd.f32 %v326, %v1957
        %v1959 = vpop.f32.mrf.mxu0
        %1960 = vmatprep.mubr.f32.mxu0 0.0
        %1961 = vmatmul.mubr.f32.gmra.mxu0 %v1861
        %v1962 = vpop.f32.mrf.mxu0
        %v1963 = vadd.f32 %v326, %v1962
        %v1964 = vpop.f32.mrf.mxu0
        %1965 = vmatprep.mubr.f32.mxu0 0.0
        %1966 = vmatmul.mubr.f32.gmra.mxu0 %v1864
        %v1967 = vpop.f32.mrf.mxu0
        %v1968 = vadd.f32 %v326, %v1967
        %v1969 = vpop.f32.mrf.mxu0
        %1970 = vdwg.mxu0
        %vm1971 = vcmp.ge.f32.partialorder %v1933, 0.0
        %vm1972 = vcmp.ge.f32.partialorder %v1938, 0.0
        %vm1973 = vcmp.ge.f32.partialorder %v1943, 0.0
        %vm1974 = vcmp.ge.f32.partialorder %v1948, 0.0
        %vm1975 = vcmp.ge.f32.partialorder %v1953, 0.0
        %vm1976 = vcmp.ge.f32.partialorder %v1958, 0.0
        %vm1977 = vcmp.ge.f32.partialorder %v1963, 0.0
        %vm1978 = vcmp.ge.f32.partialorder %v1968, 0.0
        %v1979 = vmul.f32 %v1933, 0.01
        %v1980 = vmul.f32 %v1938, 0.01
        %v1981 = vmul.f32 %v1943, 0.01
        %v1982 = vmul.f32 %v1948, 0.01
        %v1983 = vmul.f32 %v1953, 0.01
        %v1984 = vmul.f32 %v1958, 0.01
        %v1985 = vmul.f32 %v1963, 0.01
        %v1986 = vmul.f32 %v1968, 0.01
        %v1987 = vsel %vm1971, %v1933, %v1979
        %v1988 = vsel %vm1972, %v1938, %v1980
        %v1989 = vsel %vm1973, %v1943, %v1981
        %v1990 = vsel %vm1974, %v1948, %v1982
        %v1991 = vsel %vm1975, %v1953, %v1983
        %v1992 = vsel %vm1976, %v1958, %v1984
        %v1993 = vsel %vm1977, %v1963, %v1985
        %v1994 = vsel %vm1978, %v1968, %v1986
        %v1995 = vmax.f32 %v1826, %v1987
        %v1996 = vmax.f32 %v1827, %v1988
        %v1997 = vmax.f32 %v1828, %v1989
        %v1998 = vmax.f32 %v1829, %v1990
        %v1999 = vmax.f32 %v1830, %v1991
        %v2000 = vmax.f32 %v1831, %v1992
        %v2001 = vmax.f32 %v1832, %v1993
        %v2002 = vmax.f32 %v1833, %v1994
        %s2003 = smul.u32 %s26, 64
        %s2004 = sadd.s32 %s2003, 16
        %v2005 = vpack.c.bf16 %v1996, %v1995
        %v2006 = vpack.c.bf16 %v1998, %v1997
        %v2007 = vpack.c.bf16 %v2000, %v1999
        %v2008 = vpack.c.bf16 %v2002, %v2001
        %v2013 = vunpack.c.l.b16 %v2005
        %v2014 = vunpack.c.h.b16 %v2005
        %v2015 = vunpack.c.l.b16 %v2006
        %v2016 = vunpack.c.h.b16 %v2006
        %v2017 = vunpack.c.l.b16 %v2007
        %v2018 = vunpack.c.h.b16 %v2007
        %v2019 = vunpack.c.l.b16 %v2008
        %v2020 = vunpack.c.h.b16 %v2008
        %v2021 = vpack.c.b16 %v2013, %v2013
        %v2022 = vpack.c.b16 %v2014, %v2014
        %v2023 = vpack.c.b16 %v2015, %v2015
        %v2024 = vpack.c.b16 %v2016, %v2016
        %v2025 = vpack.c.b16 %v2017, %v2017
        %v2026 = vpack.c.b16 %v2018, %v2018
        %v2027 = vpack.c.b16 %v2019, %v2019
        %v2028 = vpack.c.b16 %v2020, %v2020
        %s2037 = sshra.s32 %s2004, 3
        %s2038 = sand.u32 %s2004, 7
        %s2039 = smul.addr %s2037, 4
        %s2040 = scalar_lea.vmem [#allocation2], %s2039
        %2041 = vst [vmem:[%s2040] sm:$0xf] %v2021
        %2042 = vst [vmem:[%s2040 + $0x4] sm:$0xf] %v2022
        %2043 = vst [vmem:[%s2040 + $0x8] sm:$0xf] %v2023
        %2044 = vst [vmem:[%s2040 + $0xc] sm:$0xf] %v2024
        %2045 = vst [vmem:[%s2040 + $0x10] sm:$0xf] %v2025
        %2046 = vst [vmem:[%s2040 + $0x14] sm:$0xf] %v2026
        %2047 = vst [vmem:[%s2040 + $0x18] sm:$0xf] %v2027
        %2048 = vst [vmem:[%s2040 + $0x1c] sm:$0xf] %v2028
        %p2049 = scmp.eq.s32.totalorder %s26, 1
        // Predicated region
        $region53: #{audio_model_forward.1} parent=47 // pred_check
          %p2050 = pneg %p2049
        $region54: #{audio_model_forward.1} parent=47 // pred_check_branch
          %2052 = sbr.rel (%p2050) target = $region56
        $region55: #{audio_model_forward.1} parent=47 // pred_region
          %2053 = vst [vmem:[#allocation2 + $0x30] sm:$0x1] 0
          %v2054 = vld [vmem:[#allocation2 + $0x4] sm:$0x8]
          %v2055 = vld [vmem:[#allocation2 + $0x8] sm:$0xf]
          %v2056 = vld [vmem:[#allocation2 + $0xc] sm:$0xf]
          %v2057 = vld [vmem:[#allocation2 + $0x10] sm:$0xf]
          %v2058 = vld [vmem:[#allocation2 + $0x14] sm:$0xf]
          %v2059 = vld [vmem:[#allocation2 + $0x18] sm:$0xf]
          %v2060 = vld [vmem:[#allocation2 + $0x1c] sm:$0xf]
          %v2061 = vld [vmem:[#allocation2 + $0x20] sm:$0xf]
          %v2062 = vld [vmem:[#allocation2 + $0x24] sm:$0xf]
          %v2063 = vld [vmem:[#allocation2 + $0x28] sm:$0x7]
          %v2064 = vld [vmem:[%s3] sm:$0xf]
          %v2065 = vld [vmem:[%s3 + $0x4] sm:$0xf]
          %v2066 = vld [vmem:[%s3 + $0x8] sm:$0xf]
          %v2067 = vld [vmem:[%s3 + $0xc] sm:$0xf]
          %v2068 = vld [vmem:[%s3 + $0x10] sm:$0xf]
          %v2069 = vld [vmem:[%s3 + $0x14] sm:$0xf]
          %v2070 = vld [vmem:[%s3 + $0x18] sm:$0xf]
          %v2071 = vld [vmem:[%s3 + $0x1c] sm:$0xf]
          %v2072 = vld [vmem:[%s3 + $0x20] sm:$0xf]
          %v2073 = vld [vmem:[%s3 + $0x24] sm:$0xf]
          %v2074 = vld [vmem:[%s3 + $0x28] sm:$0xf]
          %v2075 = vld [vmem:[%s3 + $0x2c] sm:$0xf]
          %v2076 = vld [vmem:[%s3 + $0x30] sm:$0xf]
          %v2077 = vld [vmem:[%s3 + $0x34] sm:$0xf]
          %v2078 = vld [vmem:[%s3 + $0x38] sm:$0xf]
          %v2079 = vld [vmem:[%s3 + $0x3c] sm:$0xf]
          %v2080 = vld [vmem:[#allocation2 + $0x28] sm:$0xf]
          %s2081 = scalar_lea.vmem %s3, 64
          %v2082 = vld [vmem:[%s2081] sm:$0xf]
          %v2083 = vld [vmem:[%s2081 + $0x4] sm:$0xf]
          %v2084 = vld [vmem:[%s2081 + $0x8] sm:$0xf]
          %v2085 = vld [vmem:[%s2081 + $0xc] sm:$0xf]
          %v2086 = vld [vmem:[%s2081 + $0x10] sm:$0xf]
          %v2087 = vld [vmem:[%s2081 + $0x14] sm:$0xf]
          %v2088 = vld [vmem:[%s2081 + $0x18] sm:$0xf]
          %v2089 = vld [vmem:[%s2081 + $0x1c] sm:$0xf]
          %v2090 = vld [vmem:[%s2081 + $0x20] sm:$0xf]
          %v2091 = vld [vmem:[%s2081 + $0x24] sm:$0xf]
          %v2092 = vld [vmem:[%s2081 + $0x28] sm:$0xf]
          %v2093 = vld [vmem:[%s2081 + $0x2c] sm:$0xf]
          %v2094 = vld [vmem:[%s2081 + $0x30] sm:$0xf]
          %v2095 = vld [vmem:[%s2081 + $0x34] sm:$0xf]
          %v2096 = vld [vmem:[%s2081 + $0x38] sm:$0xf]
          %v2097 = vld [vmem:[%s2081 + $0x3c] sm:$0xf]
          %v2108 = vunpack.c.l.b16 %v2054
          %v2109 = vunpack.c.l.b16 %v2055
          %v2110 = vunpack.c.l.b16 %v2056
          %v2111 = vunpack.c.l.b16 %v2057
          %v2112 = vunpack.c.l.b16 %v2058
          %v2113 = vunpack.c.l.b16 %v2059
          %v2114 = vunpack.c.l.b16 %v2060
          %v2115 = vunpack.c.l.b16 %v2061
          %v2116 = vunpack.c.l.b16 %v2062
          %v2117 = vunpack.c.l.b16 %v2080
          %v2118 = vpack.c.b16 %v2109, %v2108
          %v2119 = vpack.c.b16 %v2111, %v2110
          %v2120 = vpack.c.b16 %v2113, %v2112
          %v2121 = vpack.c.b16 %v2115, %v2114
          %v2122 = vpack.c.b16 %v2117, %v2116
          %vm2123 = vsmask.f32 4352
          %v2125 = vshrl.u32 %v2118, 16
          %v2127 = vrot.slane %v2125, 3
          %v2128 = vshll.u32 %v2118, 16
          %v2130 = vrot.slane %v2128, 4
          %v2131 = vor.u32 %v2127, %v2130
          %v2133 = vshrl.u32 %v2119, 16
          %v2135 = vrot.slane %v2133, 3
          %v2136 = vshll.u32 %v2119, 16
          %v2138 = vrot.slane %v2136, 4
          %v2139 = vor.u32 %v2135, %v2138
          %v2140 = vsel %vm2123, %v2131, %v2139
          %v2142 = vshrl.u32 %v2120, 16
          %v2144 = vrot.slane %v2142, 3
          %v2145 = vshll.u32 %v2120, 16
          %v2147 = vrot.slane %v2145, 4
          %v2148 = vor.u32 %v2144, %v2147
          %v2149 = vsel %vm2123, %v2139, %v2148
          %v2151 = vshrl.u32 %v2121, 16
          %v2153 = vrot.slane %v2151, 3
          %v2154 = vshll.u32 %v2121, 16
          %v2156 = vrot.slane %v2154, 4
          %v2157 = vor.u32 %v2153, %v2156
          %v2158 = vsel %vm2123, %v2148, %v2157
          %v2160 = vshrl.u32 %v2122, 16
          %v2162 = vrot.slane %v2160, 3
          %v2163 = vshll.u32 %v2122, 16
          %v2165 = vrot.slane %v2163, 4
          %v2166 = vor.u32 %v2162, %v2165
          %v2167 = vsel %vm2123, %v2157, %v2166
          %v2189 = vunpack.c.l.b16 %v2082
          %v2190 = vunpack.c.l.b16 %v2083
          %v2191 = vunpack.c.l.b16 %v2084
          %v2192 = vunpack.c.l.b16 %v2085
          %v2193 = vunpack.c.l.b16 %v2086
          %v2194 = vunpack.c.l.b16 %v2087
          %v2195 = vunpack.c.l.b16 %v2088
          %v2196 = vunpack.c.l.b16 %v2089
          %v2197 = vunpack.c.l.b16 %v2090
          %v2198 = vunpack.c.l.b16 %v2091
          %v2199 = vunpack.c.l.b16 %v2092
          %v2200 = vunpack.c.l.b16 %v2093
          %v2201 = vunpack.c.l.b16 %v2094
          %v2202 = vunpack.c.l.b16 %v2095
          %v2203 = vunpack.c.l.b16 %v2096
          %v2204 = vunpack.c.l.b16 %v2097
          %v2205 = vpack.c.b16 %v2190, %v2189
          %v2206 = vpack.c.b16 %v2192, %v2191
          %v2207 = vpack.c.b16 %v2194, %v2193
          %v2208 = vpack.c.b16 %v2196, %v2195
          %v2209 = vpack.c.b16 %v2198, %v2197
          %v2210 = vpack.c.b16 %v2200, %v2199
          %v2211 = vpack.c.b16 %v2202, %v2201
          %v2212 = vpack.c.b16 %v2204, %v2203
          %2221 = vmatprep.subr.bf16.mxu0 0
          %2222 = vmatpush1.bf16.msra.mxu0 %v2212
          %2223 = vmatprep.subr.bf16.mxu0 0
          %2224 = vmatpush1.bf16.msra.mxu0 %v2211
          %2225 = vmatprep.subr.bf16.mxu0 0
          %2226 = vmatpush1.bf16.msra.mxu0 %v2210
          %2227 = vmatprep.subr.bf16.mxu0 0
          %2228 = vmatpush1.bf16.msra.mxu0 %v2209
          %2229 = vmatprep.subr.bf16.mxu0 0
          %2230 = vmatpush1.bf16.msra.mxu0 %v2208
          %2231 = vmatprep.subr.bf16.mxu0 0
          %2232 = vmatpush1.bf16.msra.mxu0 %v2207
          %2233 = vmatprep.subr.bf16.mxu0 0
          %2234 = vmatpush1.bf16.msra.mxu0 %v2206
          %2235 = vmatprep.subr.bf16.mxu0 0
          %2236 = vmatpush1.bf16.msra.mxu0 %v2205
          %2237 = vmatprep.subr.bf16.mxu0 0
          %2238 = vmatpush2.bf16.msra.mxu0 0
          %2239 = vmatprep.subr.bf16.mxu0 0
          %2240 = vmatpush2.bf16.msra.mxu0 0
          %2241 = vmatprep.subr.bf16.mxu0 0
          %2242 = vmatpush2.bf16.msra.mxu0 0
          %2243 = vmatprep.subr.bf16.mxu0 0
          %2244 = vmatpush2.bf16.msra.mxu0 0
          %2245 = vmatprep.subr.bf16.mxu0 0
          %2246 = vmatpush2.bf16.msra.mxu0 0
          %2247 = vmatprep.subr.bf16.mxu0 0
          %2248 = vmatpush2.bf16.msra.mxu0 0
          %2249 = vmatprep.subr.bf16.mxu0 0
          %2250 = vmatpush2.bf16.msra.mxu0 0
          %2251 = vmatprep.subr.bf16.mxu0 0
          %2252 = vmatpush2.bf16.msra.mxu0 0
          %2253 = vmatprep.mubr.bf16.mxu0 0
          %2254 = vmatmul.mubr.bf16.gmra.mxu0 %v2140
          %v2255 = vpop.f32.mrf.mxu0
          %v2256 = vadd.f32 0.0, %v2255
          %v2257 = vpop.f32.mrf.mxu0
          %v2258 = vpop.f32.mrf.mxu0
          %v2259 = vadd.f32 0.0, %v2258
          %v2260 = vpop.f32.mrf.mxu0
          %2261 = vmatprep.mubr.bf16.mxu0 0
          %2262 = vmatmul.mubr.bf16.gmra.mxu0 %v2149
          %v2263 = vpop.f32.mrf.mxu0
          %v2264 = vadd.f32 0.0, %v2263
          %v2265 = vpop.f32.mrf.mxu0
          %v2266 = vpop.f32.mrf.mxu0
          %v2267 = vadd.f32 0.0, %v2266
          %v2268 = vpop.f32.mrf.mxu0
          %2269 = vmatprep.mubr.bf16.mxu0 0
          %2270 = vmatmul.mubr.bf16.gmra.mxu0 %v2158
          %v2271 = vpop.f32.mrf.mxu0
          %v2272 = vadd.f32 0.0, %v2271
          %v2273 = vpop.f32.mrf.mxu0
          %v2274 = vpop.f32.mrf.mxu0
          %v2275 = vadd.f32 0.0, %v2274
          %v2276 = vpop.f32.mrf.mxu0
          %2277 = vmatprep.mubr.bf16.mxu0 0
          %2278 = vmatmul.mubr.bf16.gmra.mxu0 %v2167
          %v2279 = vpop.f32.mrf.mxu0
          %v2280 = vadd.f32 0.0, %v2279
          %v2281 = vpop.f32.mrf.mxu0
          %v2282 = vpop.f32.mrf.mxu0
          %v2283 = vadd.f32 0.0, %v2282
          %v2284 = vpop.f32.mrf.mxu0
          %2285 = vmatprep.mubr.bf16.mxu0 0
          %2286 = vmatmul.mubr.bf16.gmra.mxu0 %v2166
          %v2287 = vpop.f32.mrf.mxu0
          %v2288 = vadd.f32 0.0, %v2287
          %v2289 = vpop.f32.mrf.mxu0
          %v2290 = vpop.f32.mrf.mxu0
          %v2291 = vpop.f32.mrf.mxu0
          %2292 = vdwg.mxu0
          %v2294 = vunpack.c.l.b16 %v2063
          %v2295 = vpack.c.b16 %v2294, %v2116
          %vm2296 = vcmask 1044480
          %v2297 = vrot.slane %v2118, 3
          %v2298 = vrot.slane %v2119, 3
          %v2299 = vsel %vm2296, %v2297, %v2298
          %v2300 = vrot.slane %v2120, 3
          %v2301 = vsel %vm2296, %v2298, %v2300
          %v2302 = vrot.slane %v2121, 3
          %v2303 = vsel %vm2296, %v2300, %v2302
          %v2304 = vrot.slane %v2295, 3
          %v2305 = vsel %vm2296, %v2302, %v2304
          %v2327 = vunpack.c.l.b16 %v2064
          %v2328 = vunpack.c.l.b16 %v2065
          %v2329 = vunpack.c.l.b16 %v2066
          %v2330 = vunpack.c.l.b16 %v2067
          %v2331 = vunpack.c.l.b16 %v2068
          %v2332 = vunpack.c.l.b16 %v2069
          %v2333 = vunpack.c.l.b16 %v2070
          %v2334 = vunpack.c.l.b16 %v2071
          %v2335 = vunpack.c.l.b16 %v2072
          %v2336 = vunpack.c.l.b16 %v2073
          %v2337 = vunpack.c.l.b16 %v2074
          %v2338 = vunpack.c.l.b16 %v2075
          %v2339 = vunpack.c.l.b16 %v2076
          %v2340 = vunpack.c.l.b16 %v2077
          %v2341 = vunpack.c.l.b16 %v2078
          %v2342 = vunpack.c.l.b16 %v2079
          %v2343 = vpack.c.b16 %v2328, %v2327
          %v2344 = vpack.c.b16 %v2330, %v2329
          %v2345 = vpack.c.b16 %v2332, %v2331
          %v2346 = vpack.c.b16 %v2334, %v2333
          %v2347 = vpack.c.b16 %v2336, %v2335
          %v2348 = vpack.c.b16 %v2338, %v2337
          %v2349 = vpack.c.b16 %v2340, %v2339
          %v2350 = vpack.c.b16 %v2342, %v2341
          %2359 = vmatprep.subr.bf16.mxu0 0
          %2360 = vmatpush1.bf16.msra.mxu0 %v2350
          %2361 = vmatprep.subr.bf16.mxu0 0
          %2362 = vmatpush1.bf16.msra.mxu0 %v2349
          %2363 = vmatprep.subr.bf16.mxu0 0
          %2364 = vmatpush1.bf16.msra.mxu0 %v2348
          %2365 = vmatprep.subr.bf16.mxu0 0
          %2366 = vmatpush1.bf16.msra.mxu0 %v2347
          %2367 = vmatprep.subr.bf16.mxu0 0
          %2368 = vmatpush1.bf16.msra.mxu0 %v2346
          %2369 = vmatprep.subr.bf16.mxu0 0
          %2370 = vmatpush1.bf16.msra.mxu0 %v2345
          %2371 = vmatprep.subr.bf16.mxu0 0
          %2372 = vmatpush1.bf16.msra.mxu0 %v2344
          %2373 = vmatprep.subr.bf16.mxu0 0
          %2374 = vmatpush1.bf16.msra.mxu0 %v2343
          %2375 = vmatprep.subr.bf16.mxu0 0
          %2376 = vmatpush2.bf16.msra.mxu0 0
          %2377 = vmatprep.subr.bf16.mxu0 0
          %2378 = vmatpush2.bf16.msra.mxu0 0
          %2379 = vmatprep.subr.bf16.mxu0 0
          %2380 = vmatpush2.bf16.msra.mxu0 0
          %2381 = vmatprep.subr.bf16.mxu0 0
          %2382 = vmatpush2.bf16.msra.mxu0 0
          %2383 = vmatprep.subr.bf16.mxu0 0
          %2384 = vmatpush2.bf16.msra.mxu0 0
          %2385 = vmatprep.subr.bf16.mxu0 0
          %2386 = vmatpush2.bf16.msra.mxu0 0
          %2387 = vmatprep.subr.bf16.mxu0 0
          %2388 = vmatpush2.bf16.msra.mxu0 0
          %2389 = vmatprep.subr.bf16.mxu0 0
          %2390 = vmatpush2.bf16.msra.mxu0 0
          %2391 = vmatprep.mubr.bf16.mxu0 0
          %2392 = vmatmul.mubr.bf16.gmra.mxu0 %v2299
          %v2393 = vpop.f32.mrf.mxu0
          %v2394 = vadd.f32 %v2256, %v2393
          %v2395 = vpop.f32.mrf.mxu0
          %v2396 = vpop.f32.mrf.mxu0
          %v2397 = vadd.f32 %v2259, %v2396
          %v2398 = vpop.f32.mrf.mxu0
          %2399 = vmatprep.mubr.bf16.mxu0 0
          %2400 = vmatmul.mubr.bf16.gmra.mxu0 %v2301
          %v2401 = vpop.f32.mrf.mxu0
          %v2402 = vadd.f32 %v2264, %v2401
          %v2403 = vpop.f32.mrf.mxu0
          %v2404 = vpop.f32.mrf.mxu0
          %v2405 = vadd.f32 %v2267, %v2404
          %v2406 = vpop.f32.mrf.mxu0
          %2407 = vmatprep.mubr.bf16.mxu0 0
          %2408 = vmatmul.mubr.bf16.gmra.mxu0 %v2303
          %v2409 = vpop.f32.mrf.mxu0
          %v2410 = vadd.f32 %v2272, %v2409
          %v2411 = vpop.f32.mrf.mxu0
          %v2412 = vpop.f32.mrf.mxu0
          %v2413 = vadd.f32 %v2275, %v2412
          %v2414 = vpop.f32.mrf.mxu0
          %2415 = vmatprep.mubr.bf16.mxu0 0
          %2416 = vmatmul.mubr.bf16.gmra.mxu0 %v2305
          %v2417 = vpop.f32.mrf.mxu0
          %v2418 = vadd.f32 %v2280, %v2417
          %v2419 = vpop.f32.mrf.mxu0
          %v2420 = vpop.f32.mrf.mxu0
          %v2421 = vadd.f32 %v2283, %v2420
          %v2422 = vpop.f32.mrf.mxu0
          %2423 = vmatprep.mubr.bf16.mxu0 0
          %2424 = vmatmul.mubr.bf16.gmra.mxu0 %v2304
          %v2425 = vpop.f32.mrf.mxu0
          %v2426 = vadd.f32 %v2288, %v2425
          %v2427 = vpop.f32.mrf.mxu0
          %v2428 = vpop.f32.mrf.mxu0
          %v2429 = vpop.f32.mrf.mxu0
          %2430 = vdwg.mxu0
          %s2431 = scalar_lea.vmem %s3, 128
          %v2432 = vld [vmem:[%s2431] sm:$0xf]
          %v2433 = vld [vmem:[%s2431 + $0x4] sm:$0xf]
          %v2434 = vld [vmem:[%s2431 + $0x8] sm:$0xf]
          %v2435 = vld [vmem:[%s2431 + $0xc] sm:$0xf]
          %v2436 = vld [vmem:[%s2431 + $0x10] sm:$0xf]
          %v2437 = vld [vmem:[%s2431 + $0x14] sm:$0xf]
          %v2438 = vld [vmem:[%s2431 + $0x18] sm:$0xf]
          %v2439 = vld [vmem:[%s2431 + $0x1c] sm:$0xf]
          %v2440 = vld [vmem:[%s2431 + $0x20] sm:$0xf]
          %v2441 = vld [vmem:[%s2431 + $0x24] sm:$0xf]
          %v2442 = vld [vmem:[%s2431 + $0x28] sm:$0xf]
          %v2443 = vld [vmem:[%s2431 + $0x2c] sm:$0xf]
          %v2444 = vld [vmem:[%s2431 + $0x30] sm:$0xf]
          %v2445 = vld [vmem:[%s2431 + $0x34] sm:$0xf]
          %v2446 = vld [vmem:[%s2431 + $0x38] sm:$0xf]
          %v2447 = vld [vmem:[%s2431 + $0x3c] sm:$0xf]
          %v2448 = vpack.c.b16 %v2110, %v2109
          %v2449 = vpack.c.b16 %v2112, %v2111
          %v2450 = vpack.c.b16 %v2114, %v2113
          %v2451 = vpack.c.b16 %v2116, %v2115
          %v2452 = vpack.c.b16 %v2117, %v2117
          %v2474 = vunpack.c.l.b16 %v2432
          %v2475 = vunpack.c.l.b16 %v2433
          %v2476 = vunpack.c.l.b16 %v2434
          %v2477 = vunpack.c.l.b16 %v2435
          %v2478 = vunpack.c.l.b16 %v2436
          %v2479 = vunpack.c.l.b16 %v2437
          %v2480 = vunpack.c.l.b16 %v2438
          %v2481 = vunpack.c.l.b16 %v2439
          %v2482 = vunpack.c.l.b16 %v2440
          %v2483 = vunpack.c.l.b16 %v2441
          %v2484 = vunpack.c.l.b16 %v2442
          %v2485 = vunpack.c.l.b16 %v2443
          %v2486 = vunpack.c.l.b16 %v2444
          %v2487 = vunpack.c.l.b16 %v2445
          %v2488 = vunpack.c.l.b16 %v2446
          %v2489 = vunpack.c.l.b16 %v2447
          %v2490 = vpack.c.b16 %v2475, %v2474
          %v2491 = vpack.c.b16 %v2477, %v2476
          %v2492 = vpack.c.b16 %v2479, %v2478
          %v2493 = vpack.c.b16 %v2481, %v2480
          %v2494 = vpack.c.b16 %v2483, %v2482
          %v2495 = vpack.c.b16 %v2485, %v2484
          %v2496 = vpack.c.b16 %v2487, %v2486
          %v2497 = vpack.c.b16 %v2489, %v2488
          %2506 = vmatprep.subr.bf16.mxu0 0
          %2507 = vmatpush1.bf16.msra.mxu0 %v2497
          %2508 = vmatprep.subr.bf16.mxu0 0
          %2509 = vmatpush1.bf16.msra.mxu0 %v2496
          %2510 = vmatprep.subr.bf16.mxu0 0
          %2511 = vmatpush1.bf16.msra.mxu0 %v2495
          %2512 = vmatprep.subr.bf16.mxu0 0
          %2513 = vmatpush1.bf16.msra.mxu0 %v2494
          %2514 = vmatprep.subr.bf16.mxu0 0
          %2515 = vmatpush1.bf16.msra.mxu0 %v2493
          %2516 = vmatprep.subr.bf16.mxu0 0
          %2517 = vmatpush1.bf16.msra.mxu0 %v2492
          %2518 = vmatprep.subr.bf16.mxu0 0
          %2519 = vmatpush1.bf16.msra.mxu0 %v2491
          %2520 = vmatprep.subr.bf16.mxu0 0
          %2521 = vmatpush1.bf16.msra.mxu0 %v2490
          %2522 = vmatprep.subr.bf16.mxu0 0
          %2523 = vmatpush2.bf16.msra.mxu0 0
          %2524 = vmatprep.subr.bf16.mxu0 0
          %2525 = vmatpush2.bf16.msra.mxu0 0
          %2526 = vmatprep.subr.bf16.mxu0 0
          %2527 = vmatpush2.bf16.msra.mxu0 0
          %2528 = vmatprep.subr.bf16.mxu0 0
          %2529 = vmatpush2.bf16.msra.mxu0 0
          %2530 = vmatprep.subr.bf16.mxu0 0
          %2531 = vmatpush2.bf16.msra.mxu0 0
          %2532 = vmatprep.subr.bf16.mxu0 0
          %2533 = vmatpush2.bf16.msra.mxu0 0
          %2534 = vmatprep.subr.bf16.mxu0 0
          %2535 = vmatpush2.bf16.msra.mxu0 0
          %2536 = vmatprep.subr.bf16.mxu0 0
          %2537 = vmatpush2.bf16.msra.mxu0 0
          %2538 = vmatprep.mubr.bf16.mxu0 0
          %2539 = vmatmul.mubr.bf16.gmra.mxu0 %v2448
          %v2540 = vpop.f32.mrf.mxu0
          %v2541 = vadd.f32 0.0, %v2540
          %v2542 = vpop.f32.mrf.mxu0
          %v2543 = vpop.f32.mrf.mxu0
          %v2544 = vadd.f32 0.0, %v2543
          %v2545 = vpop.f32.mrf.mxu0
          %2546 = vmatprep.mubr.bf16.mxu0 0
          %2547 = vmatmul.mubr.bf16.gmra.mxu0 %v2449
          %v2548 = vpop.f32.mrf.mxu0
          %v2549 = vadd.f32 0.0, %v2548
          %v2550 = vpop.f32.mrf.mxu0
          %v2551 = vpop.f32.mrf.mxu0
          %v2552 = vadd.f32 0.0, %v2551
          %v2553 = vpop.f32.mrf.mxu0
          %2554 = vmatprep.mubr.bf16.mxu0 0
          %2555 = vmatmul.mubr.bf16.gmra.mxu0 %v2450
          %v2556 = vpop.f32.mrf.mxu0
          %v2557 = vadd.f32 0.0, %v2556
          %v2558 = vpop.f32.mrf.mxu0
          %v2559 = vpop.f32.mrf.mxu0
          %v2560 = vadd.f32 0.0, %v2559
          %v2561 = vpop.f32.mrf.mxu0
          %2562 = vmatprep.mubr.bf16.mxu0 0
          %2563 = vmatmul.mubr.bf16.gmra.mxu0 %v2451
          %v2564 = vpop.f32.mrf.mxu0
          %v2565 = vadd.f32 0.0, %v2564
          %v2566 = vpop.f32.mrf.mxu0
          %v2567 = vpop.f32.mrf.mxu0
          %v2568 = vadd.f32 0.0, %v2567
          %v2569 = vpop.f32.mrf.mxu0
          %2570 = vmatprep.mubr.bf16.mxu0 0
          %2571 = vmatmul.mubr.bf16.gmra.mxu0 %v2452
          %v2572 = vpop.f32.mrf.mxu0
          %v2573 = vadd.f32 0.0, %v2572
          %v2574 = vpop.f32.mrf.mxu0
          %v2575 = vpop.f32.mrf.mxu0
          %v2576 = vpop.f32.mrf.mxu0
          %2577 = vdwg.mxu0
          %v2578 = vadd.f32 %v2394, %v2541
          %v2579 = vadd.f32 %v2397, %v2544
          %v2580 = vadd.f32 %v2402, %v2549
          %v2581 = vadd.f32 %v2405, %v2552
          %v2582 = vadd.f32 %v2410, %v2557
          %v2583 = vadd.f32 %v2413, %v2560
          %v2584 = vadd.f32 %v2418, %v2565
          %v2585 = vadd.f32 %v2421, %v2568
          %v2586 = vadd.f32 %v2426, %v2573
          %v2587 = vld [vmem:[#allocation2 + $0x8] sm:$0xf]
          %v2588 = vld [vmem:[#allocation2 + $0xc] sm:$0xf]
          %v2589 = vld [vmem:[#allocation2 + $0x10] sm:$0xf]
          %v2590 = vld [vmem:[#allocation2 + $0x14] sm:$0xf]
          %v2591 = vld [vmem:[#allocation2 + $0x18] sm:$0xf]
          %v2592 = vld [vmem:[#allocation2 + $0x1c] sm:$0xf]
          %v2593 = vld [vmem:[#allocation2 + $0x20] sm:$0xf]
          %v2594 = vld [vmem:[#allocation2 + $0x24] sm:$0xf]
          %v2595 = vld [vmem:[#allocation2 + $0x28] sm:$0xf]
          %v2596 = vld [vmem:[#allocation2 + $0x2c] sm:$0x1]
          %s2597 = scalar_lea.vmem %s3, 192
          %v2598 = vld [vmem:[%s2597] sm:$0xf]
          %v2599 = vld [vmem:[%s2597 + $0x4] sm:$0xf]
          %v2600 = vld [vmem:[%s2597 + $0x8] sm:$0xf]
          %v2601 = vld [vmem:[%s2597 + $0xc] sm:$0xf]
          %v2602 = vld [vmem:[%s2597 + $0x10] sm:$0xf]
          %v2603 = vld [vmem:[%s2597 + $0x14] sm:$0xf]
          %v2604 = vld [vmem:[%s2597 + $0x18] sm:$0xf]
          %v2605 = vld [vmem:[%s2597 + $0x1c] sm:$0xf]
          %v2606 = vld [vmem:[%s2597 + $0x20] sm:$0xf]
          %v2607 = vld [vmem:[%s2597 + $0x24] sm:$0xf]
          %v2608 = vld [vmem:[%s2597 + $0x28] sm:$0xf]
          %v2609 = vld [vmem:[%s2597 + $0x2c] sm:$0xf]
          %v2610 = vld [vmem:[%s2597 + $0x30] sm:$0xf]
          %v2611 = vld [vmem:[%s2597 + $0x34] sm:$0xf]
          %v2612 = vld [vmem:[%s2597 + $0x38] sm:$0xf]
          %v2613 = vld [vmem:[%s2597 + $0x3c] sm:$0xf]
          %v2624 = vunpack.c.l.b16 %v2587
          %v2625 = vunpack.c.l.b16 %v2588
          %v2626 = vunpack.c.l.b16 %v2589
          %v2627 = vunpack.c.l.b16 %v2590
          %v2628 = vunpack.c.l.b16 %v2591
          %v2629 = vunpack.c.l.b16 %v2592
          %v2630 = vunpack.c.l.b16 %v2593
          %v2631 = vunpack.c.l.b16 %v2594
          %v2632 = vunpack.c.l.b16 %v2595
          %v2633 = vunpack.c.l.b16 %v2596
          %v2634 = vpack.c.b16 %v2625, %v2624
          %v2635 = vpack.c.b16 %v2627, %v2626
          %v2636 = vpack.c.b16 %v2629, %v2628
          %v2637 = vpack.c.b16 %v2631, %v2630
          %v2638 = vpack.c.b16 %v2633, %v2632
          %vm2639 = vsmask.f32 7424
          %v2641 = vshrl.u32 %v2634, 16
          %v2643 = vshll.u32 %v2634, 16
          %v2645 = vrot.slane %v2643, 1
          %v2646 = vor.u32 %v2641, %v2645
          %v2648 = vshll.u32 %v2635, 16
          %v2650 = vrot.slane %v2648, 1
          %v2651 = vsel %vm2639, %v2646, %v2650
          %v2652 = vshrl.u32 %v2635, 16
          %v2654 = vor.u32 %v2652, %v2650
          %v2656 = vshll.u32 %v2636, 16
          %v2658 = vrot.slane %v2656, 1
          %v2659 = vsel %vm2639, %v2654, %v2658
          %v2660 = vshrl.u32 %v2636, 16
          %v2662 = vor.u32 %v2660, %v2658
          %v2664 = vshll.u32 %v2637, 16
          %v2666 = vrot.slane %v2664, 1
          %v2667 = vsel %vm2639, %v2662, %v2666
          %v2668 = vshrl.u32 %v2637, 16
          %v2670 = vor.u32 %v2668, %v2666
          %v2672 = vshll.u32 %v2638, 16
          %v2674 = vrot.slane %v2672, 1
          %v2675 = vsel %vm2639, %v2670, %v2674
          %v2676 = vshrl.u32 %v2638, 16
          %v2678 = vor.u32 %v2676, %v2674
          %v2700 = vunpack.c.l.b16 %v2598
          %v2701 = vunpack.c.l.b16 %v2599
          %v2702 = vunpack.c.l.b16 %v2600
          %v2703 = vunpack.c.l.b16 %v2601
          %v2704 = vunpack.c.l.b16 %v2602
          %v2705 = vunpack.c.l.b16 %v2603
          %v2706 = vunpack.c.l.b16 %v2604
          %v2707 = vunpack.c.l.b16 %v2605
          %v2708 = vunpack.c.l.b16 %v2606
          %v2709 = vunpack.c.l.b16 %v2607
          %v2710 = vunpack.c.l.b16 %v2608
          %v2711 = vunpack.c.l.b16 %v2609
          %v2712 = vunpack.c.l.b16 %v2610
          %v2713 = vunpack.c.l.b16 %v2611
          %v2714 = vunpack.c.l.b16 %v2612
          %v2715 = vunpack.c.l.b16 %v2613
          %v2716 = vpack.c.b16 %v2701, %v2700
          %v2717 = vpack.c.b16 %v2703, %v2702
          %v2718 = vpack.c.b16 %v2705, %v2704
          %v2719 = vpack.c.b16 %v2707, %v2706
          %v2720 = vpack.c.b16 %v2709, %v2708
          %v2721 = vpack.c.b16 %v2711, %v2710
          %v2722 = vpack.c.b16 %v2713, %v2712
          %v2723 = vpack.c.b16 %v2715, %v2714
          %2732 = vmatprep.subr.bf16.mxu0 0
          %2733 = vmatpush1.bf16.msra.mxu0 %v2723
          %2734 = vmatprep.subr.bf16.mxu0 0
          %2735 = vmatpush1.bf16.msra.mxu0 %v2722
          %2736 = vmatprep.subr.bf16.mxu0 0
          %2737 = vmatpush1.bf16.msra.mxu0 %v2721
          %2738 = vmatprep.subr.bf16.mxu0 0
          %2739 = vmatpush1.bf16.msra.mxu0 %v2720
          %2740 = vmatprep.subr.bf16.mxu0 0
          %2741 = vmatpush1.bf16.msra.mxu0 %v2719
          %2742 = vmatprep.subr.bf16.mxu0 0
          %2743 = vmatpush1.bf16.msra.mxu0 %v2718
          %2744 = vmatprep.subr.bf16.mxu0 0
          %2745 = vmatpush1.bf16.msra.mxu0 %v2717
          %2746 = vmatprep.subr.bf16.mxu0 0
          %2747 = vmatpush1.bf16.msra.mxu0 %v2716
          %2748 = vmatprep.subr.bf16.mxu0 0
          %2749 = vmatpush2.bf16.msra.mxu0 0
          %2750 = vmatprep.subr.bf16.mxu0 0
          %2751 = vmatpush2.bf16.msra.mxu0 0
          %2752 = vmatprep.subr.bf16.mxu0 0
          %2753 = vmatpush2.bf16.msra.mxu0 0
          %2754 = vmatprep.subr.bf16.mxu0 0
          %2755 = vmatpush2.bf16.msra.mxu0 0
          %2756 = vmatprep.subr.bf16.mxu0 0
          %2757 = vmatpush2.bf16.msra.mxu0 0
          %2758 = vmatprep.subr.bf16.mxu0 0
          %2759 = vmatpush2.bf16.msra.mxu0 0
          %2760 = vmatprep.subr.bf16.mxu0 0
          %2761 = vmatpush2.bf16.msra.mxu0 0
          %2762 = vmatprep.subr.bf16.mxu0 0
          %2763 = vmatpush2.bf16.msra.mxu0 0
          %2764 = vmatprep.mubr.bf16.mxu0 0
          %2765 = vmatmul.mubr.bf16.gmra.mxu0 %v2651
          %v2766 = vpop.f32.mrf.mxu0
          %v2767 = vadd.f32 0.0, %v2766
          %v2768 = vpop.f32.mrf.mxu0
          %v2769 = vpop.f32.mrf.mxu0
          %v2770 = vadd.f32 0.0, %v2769
          %v2771 = vpop.f32.mrf.mxu0
          %2772 = vmatprep.mubr.bf16.mxu0 0
          %2773 = vmatmul.mubr.bf16.gmra.mxu0 %v2659
          %v2774 = vpop.f32.mrf.mxu0
          %v2775 = vadd.f32 0.0, %v2774
          %v2776 = vpop.f32.mrf.mxu0
          %v2777 = vpop.f32.mrf.mxu0
          %v2778 = vadd.f32 0.0, %v2777
          %v2779 = vpop.f32.mrf.mxu0
          %2780 = vmatprep.mubr.bf16.mxu0 0
          %2781 = vmatmul.mubr.bf16.gmra.mxu0 %v2667
          %v2782 = vpop.f32.mrf.mxu0
          %v2783 = vadd.f32 0.0, %v2782
          %v2784 = vpop.f32.mrf.mxu0
          %v2785 = vpop.f32.mrf.mxu0
          %v2786 = vadd.f32 0.0, %v2785
          %v2787 = vpop.f32.mrf.mxu0
          %2788 = vmatprep.mubr.bf16.mxu0 0
          %2789 = vmatmul.mubr.bf16.gmra.mxu0 %v2675
          %v2790 = vpop.f32.mrf.mxu0
          %v2791 = vadd.f32 0.0, %v2790
          %v2792 = vpop.f32.mrf.mxu0
          %v2793 = vpop.f32.mrf.mxu0
          %v2794 = vadd.f32 0.0, %v2793
          %v2795 = vpop.f32.mrf.mxu0
          %2796 = vmatprep.mubr.bf16.mxu0 0
          %2797 = vmatmul.mubr.bf16.gmra.mxu0 %v2678
          %v2798 = vpop.f32.mrf.mxu0
          %v2799 = vadd.f32 0.0, %v2798
          %v2800 = vpop.f32.mrf.mxu0
          %v2801 = vpop.f32.mrf.mxu0
          %v2802 = vpop.f32.mrf.mxu0
          %2803 = vdwg.mxu0
          %v2804 = vadd.f32 %v2578, %v2767
          %v2805 = vadd.f32 %v2579, %v2770
          %v2806 = vadd.f32 %v2580, %v2775
          %v2807 = vadd.f32 %v2581, %v2778
          %v2808 = vadd.f32 %v2582, %v2783
          %v2809 = vadd.f32 %v2583, %v2786
          %v2810 = vadd.f32 %v2584, %v2791
          %v2811 = vadd.f32 %v2585, %v2794
          %v2812 = vadd.f32 %v2586, %v2799
          %v2813 = vld [vmem:[#allocation2 + $0x8] sm:$0xe]
          %s2814 = scalar_lea.vmem %s3, 256
          %v2815 = vld [vmem:[%s2814] sm:$0xf]
          %v2816 = vld [vmem:[%s2814 + $0x4] sm:$0xf]
          %v2817 = vld [vmem:[%s2814 + $0x8] sm:$0xf]
          %v2818 = vld [vmem:[%s2814 + $0xc] sm:$0xf]
          %v2819 = vld [vmem:[%s2814 + $0x10] sm:$0xf]
          %v2820 = vld [vmem:[%s2814 + $0x14] sm:$0xf]
          %v2821 = vld [vmem:[%s2814 + $0x18] sm:$0xf]
          %v2822 = vld [vmem:[%s2814 + $0x1c] sm:$0xf]
          %v2823 = vld [vmem:[%s2814 + $0x20] sm:$0xf]
          %v2824 = vld [vmem:[%s2814 + $0x24] sm:$0xf]
          %v2825 = vld [vmem:[%s2814 + $0x28] sm:$0xf]
          %v2826 = vld [vmem:[%s2814 + $0x2c] sm:$0xf]
          %v2827 = vld [vmem:[%s2814 + $0x30] sm:$0xf]
          %v2828 = vld [vmem:[%s2814 + $0x34] sm:$0xf]
          %v2829 = vld [vmem:[%s2814 + $0x38] sm:$0xf]
          %v2830 = vld [vmem:[%s2814 + $0x3c] sm:$0xf]
          %v2832 = vunpack.c.l.b16 %v2813
          %v2833 = vpack.c.b16 %v2625, %v2832
          %vm2834 = vcmask 1046528
          %v2835 = vrot.slane %v2833, 1
          %v2836 = vrot.slane %v2635, 1
          %v2837 = vsel %vm2834, %v2835, %v2836
          %v2838 = vrot.slane %v2636, 1
          %v2839 = vsel %vm2834, %v2836, %v2838
          %v2840 = vrot.slane %v2637, 1
          %v2841 = vsel %vm2834, %v2838, %v2840
          %v2842 = vrot.slane %v2638, 1
          %v2843 = vsel %vm2834, %v2840, %v2842
          %v2865 = vunpack.c.l.b16 %v2815
          %v2866 = vunpack.c.l.b16 %v2816
          %v2867 = vunpack.c.l.b16 %v2817
          %v2868 = vunpack.c.l.b16 %v2818
          %v2869 = vunpack.c.l.b16 %v2819
          %v2870 = vunpack.c.l.b16 %v2820
          %v2871 = vunpack.c.l.b16 %v2821
          %v2872 = vunpack.c.l.b16 %v2822
          %v2873 = vunpack.c.l.b16 %v2823
          %v2874 = vunpack.c.l.b16 %v2824
          %v2875 = vunpack.c.l.b16 %v2825
          %v2876 = vunpack.c.l.b16 %v2826
          %v2877 = vunpack.c.l.b16 %v2827
          %v2878 = vunpack.c.l.b16 %v2828
          %v2879 = vunpack.c.l.b16 %v2829
          %v2880 = vunpack.c.l.b16 %v2830
          %v2881 = vpack.c.b16 %v2866, %v2865
          %v2882 = vpack.c.b16 %v2868, %v2867
          %v2883 = vpack.c.b16 %v2870, %v2869
          %v2884 = vpack.c.b16 %v2872, %v2871
          %v2885 = vpack.c.b16 %v2874, %v2873
          %v2886 = vpack.c.b16 %v2876, %v2875
          %v2887 = vpack.c.b16 %v2878, %v2877
          %v2888 = vpack.c.b16 %v2880, %v2879
          %2897 = vmatprep.subr.bf16.mxu0 0
          %2898 = vmatpush1.bf16.msra.mxu0 %v2888
          %2899 = vmatprep.subr.bf16.mxu0 0
          %2900 = vmatpush1.bf16.msra.mxu0 %v2887
          %2901 = vmatprep.subr.bf16.mxu0 0
          %2902 = vmatpush1.bf16.msra.mxu0 %v2886
          %2903 = vmatprep.subr.bf16.mxu0 0
          %2904 = vmatpush1.bf16.msra.mxu0 %v2885
          %2905 = vmatprep.subr.bf16.mxu0 0
          %2906 = vmatpush1.bf16.msra.mxu0 %v2884
          %2907 = vmatprep.subr.bf16.mxu0 0
          %2908 = vmatpush1.bf16.msra.mxu0 %v2883
          %2909 = vmatprep.subr.bf16.mxu0 0
          %2910 = vmatpush1.bf16.msra.mxu0 %v2882
          %2911 = vmatprep.subr.bf16.mxu0 0
          %2912 = vmatpush1.bf16.msra.mxu0 %v2881
          %2913 = vmatprep.subr.bf16.mxu0 0
          %2914 = vmatpush2.bf16.msra.mxu0 0
          %2915 = vmatprep.subr.bf16.mxu0 0
          %2916 = vmatpush2.bf16.msra.mxu0 0
          %2917 = vmatprep.subr.bf16.mxu0 0
          %2918 = vmatpush2.bf16.msra.mxu0 0
          %2919 = vmatprep.subr.bf16.mxu0 0
          %2920 = vmatpush2.bf16.msra.mxu0 0
          %2921 = vmatprep.subr.bf16.mxu0 0
          %2922 = vmatpush2.bf16.msra.mxu0 0
          %2923 = vmatprep.subr.bf16.mxu0 0
          %2924 = vmatpush2.bf16.msra.mxu0 0
          %2925 = vmatprep.subr.bf16.mxu0 0
          %2926 = vmatpush2.bf16.msra.mxu0 0
          %2927 = vmatprep.subr.bf16.mxu0 0
          %2928 = vmatpush2.bf16.msra.mxu0 0
          %2929 = vmatprep.mubr.bf16.mxu0 0
          %2930 = vmatmul.mubr.bf16.gmra.mxu0 %v2837
          %v2931 = vpop.f32.mrf.mxu0
          %v2932 = vadd.f32 0.0, %v2931
          %v2933 = vpop.f32.mrf.mxu0
          %v2934 = vpop.f32.mrf.mxu0
          %v2935 = vadd.f32 0.0, %v2934
          %v2936 = vpop.f32.mrf.mxu0
          %2937 = vmatprep.mubr.bf16.mxu0 0
          %2938 = vmatmul.mubr.bf16.gmra.mxu0 %v2839
          %v2939 = vpop.f32.mrf.mxu0
          %v2940 = vadd.f32 0.0, %v2939
          %v2941 = vpop.f32.mrf.mxu0
          %v2942 = vpop.f32.mrf.mxu0
          %v2943 = vadd.f32 0.0, %v2942
          %v2944 = vpop.f32.mrf.mxu0
          %2945 = vmatprep.mubr.bf16.mxu0 0
          %2946 = vmatmul.mubr.bf16.gmra.mxu0 %v2841
          %v2947 = vpop.f32.mrf.mxu0
          %v2948 = vadd.f32 0.0, %v2947
          %v2949 = vpop.f32.mrf.mxu0
          %v2950 = vpop.f32.mrf.mxu0
          %v2951 = vadd.f32 0.0, %v2950
          %v2952 = vpop.f32.mrf.mxu0
          %2953 = vmatprep.mubr.bf16.mxu0 0
          %2954 = vmatmul.mubr.bf16.gmra.mxu0 %v2843
          %v2955 = vpop.f32.mrf.mxu0
          %v2956 = vadd.f32 0.0, %v2955
          %v2957 = vpop.f32.mrf.mxu0
          %v2958 = vpop.f32.mrf.mxu0
          %v2959 = vadd.f32 0.0, %v2958
          %v2960 = vpop.f32.mrf.mxu0
          %2961 = vmatprep.mubr.bf16.mxu0 0
          %2962 = vmatmul.mubr.bf16.gmra.mxu0 %v2842
          %v2963 = vpop.f32.mrf.mxu0
          %v2964 = vadd.f32 0.0, %v2963
          %v2965 = vpop.f32.mrf.mxu0
          %v2966 = vpop.f32.mrf.mxu0
          %v2967 = vpop.f32.mrf.mxu0
          %2968 = vdwg.mxu0
          %v2969 = vadd.f32 %v2804, %v2932
          %v2970 = vadd.f32 %v2805, %v2935
          %v2971 = vadd.f32 %v2806, %v2940
          %v2972 = vadd.f32 %v2807, %v2943
          %v2973 = vadd.f32 %v2808, %v2948
          %v2974 = vadd.f32 %v2809, %v2951
          %v2975 = vadd.f32 %v2810, %v2956
          %v2976 = vadd.f32 %v2811, %v2959
          %v2977 = vadd.f32 %v2812, %v2964
          %v2978 = vld [vmem:[#allocation2 + $0x2c] sm:$0x3]
          %s2979 = scalar_lea.vmem %s3, 320
          %v2980 = vld [vmem:[%s2979] sm:$0xf]
          %v2981 = vld [vmem:[%s2979 + $0x4] sm:$0xf]
          %v2982 = vld [vmem:[%s2979 + $0x8] sm:$0xf]
          %v2983 = vld [vmem:[%s2979 + $0xc] sm:$0xf]
          %v2984 = vld [vmem:[%s2979 + $0x10] sm:$0xf]
          %v2985 = vld [vmem:[%s2979 + $0x14] sm:$0xf]
          %v2986 = vld [vmem:[%s2979 + $0x18] sm:$0xf]
          %v2987 = vld [vmem:[%s2979 + $0x1c] sm:$0xf]
          %v2988 = vld [vmem:[%s2979 + $0x20] sm:$0xf]
          %v2989 = vld [vmem:[%s2979 + $0x24] sm:$0xf]
          %v2990 = vld [vmem:[%s2979 + $0x28] sm:$0xf]
          %v2991 = vld [vmem:[%s2979 + $0x2c] sm:$0xf]
          %v2992 = vld [vmem:[%s2979 + $0x30] sm:$0xf]
          %v2993 = vld [vmem:[%s2979 + $0x34] sm:$0xf]
          %v2994 = vld [vmem:[%s2979 + $0x38] sm:$0xf]
          %v2995 = vld [vmem:[%s2979 + $0x3c] sm:$0xf]
          %v2997 = vunpack.c.l.b16 %v2978
          %v2998 = vpack.c.b16 %v2997, %v2632
          %vm2999 = vsmask.f32 6400
          %v3001 = vshrl.u32 %v2833, 16
          %v3003 = vrot.slane %v3001, 1
          %v3004 = vshll.u32 %v2833, 16
          %v3006 = vrot.slane %v3004, 2
          %v3007 = vor.u32 %v3003, %v3006
          %v3008 = vrot.slane %v2652, 1
          %v3009 = vrot.slane %v2648, 2
          %v3010 = vor.u32 %v3008, %v3009
          %v3011 = vsel %vm2999, %v3007, %v3010
          %v3012 = vrot.slane %v2660, 1
          %v3013 = vrot.slane %v2656, 2
          %v3014 = vor.u32 %v3012, %v3013
          %v3015 = vsel %vm2999, %v3010, %v3014
          %v3016 = vrot.slane %v2668, 1
          %v3017 = vrot.slane %v2664, 2
          %v3018 = vor.u32 %v3016, %v3017
          %v3019 = vsel %vm2999, %v3014, %v3018
          %v3021 = vshrl.u32 %v2998, 16
          %v3023 = vrot.slane %v3021, 1
          %v3024 = vshll.u32 %v2998, 16
          %v3026 = vrot.slane %v3024, 2
          %v3027 = vor.u32 %v3023, %v3026
          %v3028 = vsel %vm2999, %v3018, %v3027
          %v3050 = vunpack.c.l.b16 %v2980
          %v3051 = vunpack.c.l.b16 %v2981
          %v3052 = vunpack.c.l.b16 %v2982
          %v3053 = vunpack.c.l.b16 %v2983
          %v3054 = vunpack.c.l.b16 %v2984
          %v3055 = vunpack.c.l.b16 %v2985
          %v3056 = vunpack.c.l.b16 %v2986
          %v3057 = vunpack.c.l.b16 %v2987
          %v3058 = vunpack.c.l.b16 %v2988
          %v3059 = vunpack.c.l.b16 %v2989
          %v3060 = vunpack.c.l.b16 %v2990
          %v3061 = vunpack.c.l.b16 %v2991
          %v3062 = vunpack.c.l.b16 %v2992
          %v3063 = vunpack.c.l.b16 %v2993
          %v3064 = vunpack.c.l.b16 %v2994
          %v3065 = vunpack.c.l.b16 %v2995
          %v3066 = vpack.c.b16 %v3051, %v3050
          %v3067 = vpack.c.b16 %v3053, %v3052
          %v3068 = vpack.c.b16 %v3055, %v3054
          %v3069 = vpack.c.b16 %v3057, %v3056
          %v3070 = vpack.c.b16 %v3059, %v3058
          %v3071 = vpack.c.b16 %v3061, %v3060
          %v3072 = vpack.c.b16 %v3063, %v3062
          %v3073 = vpack.c.b16 %v3065, %v3064
          %3082 = vmatprep.subr.bf16.mxu0 0
          %3083 = vmatpush1.bf16.msra.mxu0 %v3073
          %3084 = vmatprep.subr.bf16.mxu0 0
          %3085 = vmatpush1.bf16.msra.mxu0 %v3072
          %3086 = vmatprep.subr.bf16.mxu0 0
          %3087 = vmatpush1.bf16.msra.mxu0 %v3071
          %3088 = vmatprep.subr.bf16.mxu0 0
          %3089 = vmatpush1.bf16.msra.mxu0 %v3070
          %3090 = vmatprep.subr.bf16.mxu0 0
          %3091 = vmatpush1.bf16.msra.mxu0 %v3069
          %3092 = vmatprep.subr.bf16.mxu0 0
          %3093 = vmatpush1.bf16.msra.mxu0 %v3068
          %3094 = vmatprep.subr.bf16.mxu0 0
          %3095 = vmatpush1.bf16.msra.mxu0 %v3067
          %3096 = vmatprep.subr.bf16.mxu0 0
          %3097 = vmatpush1.bf16.msra.mxu0 %v3066
          %3098 = vmatprep.subr.bf16.mxu0 0
          %3099 = vmatpush2.bf16.msra.mxu0 0
          %3100 = vmatprep.subr.bf16.mxu0 0
          %3101 = vmatpush2.bf16.msra.mxu0 0
          %3102 = vmatprep.subr.bf16.mxu0 0
          %3103 = vmatpush2.bf16.msra.mxu0 0
          %3104 = vmatprep.subr.bf16.mxu0 0
          %3105 = vmatpush2.bf16.msra.mxu0 0
          %3106 = vmatprep.subr.bf16.mxu0 0
          %3107 = vmatpush2.bf16.msra.mxu0 0
          %3108 = vmatprep.subr.bf16.mxu0 0
          %3109 = vmatpush2.bf16.msra.mxu0 0
          %3110 = vmatprep.subr.bf16.mxu0 0
          %3111 = vmatpush2.bf16.msra.mxu0 0
          %3112 = vmatprep.subr.bf16.mxu0 0
          %3113 = vmatpush2.bf16.msra.mxu0 0
          %3114 = vmatprep.mubr.bf16.mxu0 0
          %3115 = vmatmul.mubr.bf16.gmra.mxu0 %v3011
          %v3116 = vpop.f32.mrf.mxu0
          %v3117 = vadd.f32 0.0, %v3116
          %v3118 = vpop.f32.mrf.mxu0
          %v3119 = vpop.f32.mrf.mxu0
          %v3120 = vadd.f32 0.0, %v3119
          %v3121 = vpop.f32.mrf.mxu0
          %3122 = vmatprep.mubr.bf16.mxu0 0
          %3123 = vmatmul.mubr.bf16.gmra.mxu0 %v3015
          %v3124 = vpop.f32.mrf.mxu0
          %v3125 = vadd.f32 0.0, %v3124
          %v3126 = vpop.f32.mrf.mxu0
          %v3127 = vpop.f32.mrf.mxu0
          %v3128 = vadd.f32 0.0, %v3127
          %v3129 = vpop.f32.mrf.mxu0
          %3130 = vmatprep.mubr.bf16.mxu0 0
          %3131 = vmatmul.mubr.bf16.gmra.mxu0 %v3019
          %v3132 = vpop.f32.mrf.mxu0
          %v3133 = vadd.f32 0.0, %v3132
          %v3134 = vpop.f32.mrf.mxu0
          %v3135 = vpop.f32.mrf.mxu0
          %v3136 = vadd.f32 0.0, %v3135
          %v3137 = vpop.f32.mrf.mxu0
          %3138 = vmatprep.mubr.bf16.mxu0 0
          %3139 = vmatmul.mubr.bf16.gmra.mxu0 %v3028
          %v3140 = vpop.f32.mrf.mxu0
          %v3141 = vadd.f32 0.0, %v3140
          %v3142 = vpop.f32.mrf.mxu0
          %v3143 = vpop.f32.mrf.mxu0
          %v3144 = vadd.f32 0.0, %v3143
          %v3145 = vpop.f32.mrf.mxu0
          %3146 = vmatprep.mubr.bf16.mxu0 0
          %3147 = vmatmul.mubr.bf16.gmra.mxu0 %v3027
          %v3148 = vpop.f32.mrf.mxu0
          %v3149 = vadd.f32 0.0, %v3148
          %v3150 = vpop.f32.mrf.mxu0
          %v3151 = vpop.f32.mrf.mxu0
          %v3152 = vpop.f32.mrf.mxu0
          %3153 = vdwg.mxu0
          %v3154 = vadd.f32 %v2969, %v3117
          %v3155 = vadd.f32 %v2970, %v3120
          %v3156 = vadd.f32 %v2971, %v3125
          %v3157 = vadd.f32 %v2972, %v3128
          %v3158 = vadd.f32 %v2973, %v3133
          %v3159 = vadd.f32 %v2974, %v3136
          %v3160 = vadd.f32 %v2975, %v3141
          %v3161 = vadd.f32 %v2976, %v3144
          %v3162 = vadd.f32 %v2977, %v3149
          %v3163 = vld [vmem:[%s4] sm:$0x1]
          %v3165 = vlaneseq
          %v3166 = vshrl.u32 %v3165, 7
          %v3167 = vsub.s32 0, %v3166
          %v3168 = vrot.slane %v3163, %v3167
          %v3170 = vadd.f32 %v3154, %v3168
          %v3171 = vadd.f32 %v3155, %v3168
          %v3172 = vadd.f32 %v3156, %v3168
          %v3173 = vadd.f32 %v3157, %v3168
          %v3174 = vadd.f32 %v3158, %v3168
          %v3175 = vadd.f32 %v3159, %v3168
          %v3176 = vadd.f32 %v3160, %v3168
          %v3177 = vadd.f32 %v3161, %v3168
          %v3178 = vadd.f32 %v3162, %v3168
          %vm3179 = vcmp.ge.f32.partialorder %v3170, 0.0
          %vm3180 = vcmp.ge.f32.partialorder %v3171, 0.0
          %vm3181 = vcmp.ge.f32.partialorder %v3172, 0.0
          %vm3182 = vcmp.ge.f32.partialorder %v3173, 0.0
          %vm3183 = vcmp.ge.f32.partialorder %v3174, 0.0
          %vm3184 = vcmp.ge.f32.partialorder %v3175, 0.0
          %vm3185 = vcmp.ge.f32.partialorder %v3176, 0.0
          %vm3186 = vcmp.ge.f32.partialorder %v3177, 0.0
          %vm3187 = vcmp.ge.f32.partialorder %v3178, 0.0
          %v3188 = vmul.f32 %v3170, 0.01
          %v3189 = vmul.f32 %v3171, 0.01
          %v3190 = vmul.f32 %v3172, 0.01
          %v3191 = vmul.f32 %v3173, 0.01
          %v3192 = vmul.f32 %v3174, 0.01
          %v3193 = vmul.f32 %v3175, 0.01
          %v3194 = vmul.f32 %v3176, 0.01
          %v3195 = vmul.f32 %v3177, 0.01
          %v3196 = vmul.f32 %v3178, 0.01
          %v3197 = vsel %vm3179, %v3170, %v3188
          %v3198 = vsel %vm3180, %v3171, %v3189
          %v3199 = vsel %vm3181, %v3172, %v3190
          %v3200 = vsel %vm3182, %v3173, %v3191
          %v3201 = vsel %vm3183, %v3174, %v3192
          %v3202 = vsel %vm3184, %v3175, %v3193
          %v3203 = vsel %vm3185, %v3176, %v3194
          %v3204 = vsel %vm3186, %v3177, %v3195
          %v3205 = vsel %vm3187, %v3178, %v3196
          %v3206 = vrot.slane %v3197, 4
          %v3207 = vmax.f32 %v3197, %v3206
          %v3208 = vrot.slane %v3207, 2
          %v3209 = vmax.f32 %v3207, %v3208
          %v3210 = vrot.slane %v3209, 1
          %v3211 = vmax.f32 %v3209, %v3210
          %v3212 = vrot.slane %v3198, 4
          %v3213 = vmax.f32 %v3198, %v3212
          %v3214 = vrot.slane %v3213, 2
          %v3215 = vmax.f32 %v3213, %v3214
          %v3216 = vrot.slane %v3215, 1
          %v3217 = vmax.f32 %v3215, %v3216
          %v3218 = vrot.slane %v3199, 4
          %v3219 = vmax.f32 %v3199, %v3218
          %v3220 = vrot.slane %v3219, 2
          %v3221 = vmax.f32 %v3219, %v3220
          %v3222 = vrot.slane %v3221, 1
          %v3223 = vmax.f32 %v3221, %v3222
          %v3224 = vrot.slane %v3200, 4
          %v3225 = vmax.f32 %v3200, %v3224
          %v3226 = vrot.slane %v3225, 2
          %v3227 = vmax.f32 %v3225, %v3226
          %v3228 = vrot.slane %v3227, 1
          %v3229 = vmax.f32 %v3227, %v3228
          %v3230 = vrot.slane %v3201, 4
          %v3231 = vmax.f32 %v3201, %v3230
          %v3232 = vrot.slane %v3231, 2
          %v3233 = vmax.f32 %v3231, %v3232
          %v3234 = vrot.slane %v3233, 1
          %v3235 = vmax.f32 %v3233, %v3234
          %v3236 = vrot.slane %v3202, 4
          %v3237 = vmax.f32 %v3202, %v3236
          %v3238 = vrot.slane %v3237, 2
          %v3239 = vmax.f32 %v3237, %v3238
          %v3240 = vrot.slane %v3239, 1
          %v3241 = vmax.f32 %v3239, %v3240
          %v3242 = vrot.slane %v3203, 4
          %v3243 = vmax.f32 %v3203, %v3242
          %v3244 = vrot.slane %v3243, 2
          %v3245 = vmax.f32 %v3243, %v3244
          %v3246 = vrot.slane %v3245, 1
          %v3247 = vmax.f32 %v3245, %v3246
          %v3248 = vrot.slane %v3204, 4
          %v3249 = vmax.f32 %v3204, %v3248
          %v3250 = vrot.slane %v3249, 2
          %v3251 = vmax.f32 %v3249, %v3250
          %v3252 = vrot.slane %v3251, 1
          %v3253 = vmax.f32 %v3251, %v3252
          %v3254 = vrot.slane %v3205, 4
          %v3255 = vmax.f32 %v3205, %v3254
          %v3256 = vrot.slane %v3255, 2
          %v3257 = vmax.f32 %v3255, %v3256
          %v3258 = vrot.slane %v3257, 1
          %v3259 = vmax.f32 %v3257, %v3258
          %3260 = vst [vmem:[#allocation3] sm:$0xf] 0
          %vm3261 = vcmask 1042432
          %vm3262 = vsmask.f32 2304
          %vm3263 = vmand %vm3261, %vm3262
          %v3264 = vld [vmem:[#allocation3 + $0x4] sm:$0x7]
          %v3265 = vsel %vm3263, 0, %v3264
          %3266 = vst [vmem:[#allocation3 + $0x4] sm:$0x7] %v3265
          %v3267 = vpack.c.bf16 %v3211, %v3211
          %v3268 = vpack.c.bf16 %v3217, %v3217
          %v3269 = vpack.c.bf16 %v3223, %v3223
          %v3270 = vpack.c.bf16 %v3229, %v3229
          %v3271 = vpack.c.bf16 %v3235, %v3235
          %v3272 = vpack.c.bf16 %v3241, %v3241
          %v3273 = vpack.c.bf16 %v3247, %v3247
          %v3274 = vpack.c.bf16 %v3253, %v3253
          %v3275 = vpack.c.bf16 %v3259, %v3259
          %v3285 = vunpack.c.l.b16 %v3267
          %v3286 = vunpack.c.l.b16 %v3268
          %v3287 = vunpack.c.l.b16 %v3269
          %v3288 = vunpack.c.l.b16 %v3270
          %v3289 = vunpack.c.l.b16 %v3271
          %v3290 = vunpack.c.l.b16 %v3272
          %v3291 = vunpack.c.l.b16 %v3273
          %v3292 = vunpack.c.l.b16 %v3274
          %v3293 = vunpack.c.l.b16 %v3275
          %v3294 = vpack.c.b16 %v3285, %v3285
          %v3295 = vpack.c.b16 %v3286, %v3286
          %v3296 = vpack.c.b16 %v3287, %v3287
          %v3297 = vpack.c.b16 %v3288, %v3288
          %v3298 = vpack.c.b16 %v3289, %v3289
          %v3299 = vpack.c.b16 %v3290, %v3290
          %v3300 = vpack.c.b16 %v3291, %v3291
          %v3301 = vpack.c.b16 %v3292, %v3292
          %v3302 = vpack.c.b16 %v3293, %v3293
          %v3303 = vunpack.c.l.b16 %v3294
          %v3304 = vunpack.c.l.b16 %v3295
          %v3305 = vunpack.c.l.b16 %v3296
          %v3306 = vunpack.c.l.b16 %v3297
          %v3307 = vunpack.c.l.b16 %v3298
          %v3308 = vunpack.c.l.b16 %v3299
          %v3309 = vunpack.c.l.b16 %v3300
          %v3310 = vunpack.c.l.b16 %v3301
          %v3311 = vunpack.c.l.b16 %v3302
          %vm3312 = vcmask 1043459
          %v3313 = vsel %vm3312, %v3304, %v3303
          %vm3314 = vcmask 1044484
          %v3315 = vsel %vm3314, %v3305, %v3313
          %vm3316 = vcmask 1045509
          %v3317 = vsel %vm3316, %v3306, %v3315
          %vm3318 = vcmask 1046534
          %v3319 = vsel %vm3318, %v3307, %v3317
          %vm3320 = vcmask 1047559
          %v3321 = vsel %vm3320, %v3308, %v3319
          %vm3322 = vcmask 1041409
          %v3323 = vsel %vm3322, %v3310, %v3309
          %vm3324 = vcmask 1042434
          %v3325 = vsel %vm3324, %v3311, %v3323
          %v3326 = vpack.c.b16 %v3321, %v3321
          %v3327 = vpack.c.b16 %v3325, %v3325
          %3330 = vst [vmem:[#allocation3] sm:$0xe] %v3326
          %vm3331 = vcmask 1041408
          %vm3332 = vsmask.f32 1280
          %vm3333 = vmand %vm3331, %vm3332
          %v3334 = vld [vmem:[#allocation3 + $0x4] sm:$0x3]
          %v3335 = vsel %vm3333, %v3327, %v3334
          %3336 = vst [vmem:[#allocation3 + $0x4] sm:$0x3] %v3335
          %v3337 = vld [vmem:[#allocation3] sm:$0xf]
          %v3338 = vld [vmem:[%s5] sm:$0xff]
          %v3339 = vld [vmem:[%s5 + $0x8] sm:$0xff]
          %v3340 = vld [vmem:[%s5 + $0x10] sm:$0xff]
          %v3341 = vld [vmem:[%s5 + $0x18] sm:$0xff]
          %v3342 = vld [vmem:[%s5 + $0x20] sm:$0xff]
          %v3343 = vld [vmem:[%s5 + $0x28] sm:$0xff]
          %v3344 = vld [vmem:[%s5 + $0x30] sm:$0xff]
          %v3345 = vld [vmem:[%s5 + $0x38] sm:$0xff]
          %v3346 = vld [vmem:[%s5 + $0x40] sm:$0xff]
          %v3347 = vld [vmem:[%s5 + $0x48] sm:$0xff]
          %v3348 = vld [vmem:[%s5 + $0x50] sm:$0xff]
          %v3349 = vld [vmem:[%s5 + $0x58] sm:$0xff]
          %v3350 = vld [vmem:[%s5 + $0x60] sm:$0xff]
          %v3351 = vld [vmem:[%s5 + $0x68] sm:$0xff]
          %v3352 = vld [vmem:[%s5 + $0x70] sm:$0xff]
          %v3353 = vld [vmem:[%s5 + $0x78] sm:$0xff]
          %v3354 = vld [vmem:[#allocation3 + $0x4] sm:$0x1]
          %s3355 = scalar_lea.vmem %s5, 128
          %v3356 = vld [vmem:[%s3355] sm:$0xff]
          %v3357 = vld [vmem:[%s3355 + $0x8] sm:$0xff]
          %v3358 = vld [vmem:[%s3355 + $0x10] sm:$0xff]
          %v3359 = vld [vmem:[%s3355 + $0x18] sm:$0xff]
          %v3360 = vld [vmem:[%s3355 + $0x20] sm:$0xff]
          %v3361 = vld [vmem:[%s3355 + $0x28] sm:$0xff]
          %v3362 = vld [vmem:[%s3355 + $0x30] sm:$0xff]
          %v3363 = vld [vmem:[%s3355 + $0x38] sm:$0xff]
          %v3364 = vld [vmem:[%s3355 + $0x40] sm:$0xff]
          %v3365 = vld [vmem:[%s3355 + $0x48] sm:$0xff]
          %v3366 = vld [vmem:[%s3355 + $0x50] sm:$0xff]
          %v3367 = vld [vmem:[%s3355 + $0x58] sm:$0xff]
          %v3368 = vld [vmem:[%s3355 + $0x60] sm:$0xff]
          %v3369 = vld [vmem:[%s3355 + $0x68] sm:$0xff]
          %v3370 = vld [vmem:[%s3355 + $0x70] sm:$0xff]
          %v3371 = vld [vmem:[%s3355 + $0x78] sm:$0xff]
          %v3374 = vunpack.c.l.b16 %v3337
          %v3375 = vunpack.c.l.b16 %v3354
          %v3376 = vpack.c.b16 %v3375, %v3374
          %v3378 = vshrl.u32 %v3376, 16
          %v3380 = vshll.u32 %v3376, 16
          %v3382 = vrot.slane %v3380, 1
          %v3383 = vor.u32 %v3378, %v3382
          %v3401 = vunpack.c.l.b16 %v3356
          %v3402 = vunpack.c.h.b16 %v3356
          %v3403 = vunpack.c.l.b16 %v3357
          %v3404 = vunpack.c.h.b16 %v3357
          %v3405 = vunpack.c.l.b16 %v3358
          %v3406 = vunpack.c.h.b16 %v3358
          %v3407 = vunpack.c.l.b16 %v3359
          %v3408 = vunpack.c.h.b16 %v3359
          %v3409 = vunpack.c.l.b16 %v3360
          %v3410 = vunpack.c.h.b16 %v3360
          %v3411 = vunpack.c.l.b16 %v3361
          %v3412 = vunpack.c.h.b16 %v3361
          %v3413 = vunpack.c.l.b16 %v3362
          %v3414 = vunpack.c.h.b16 %v3362
          %v3415 = vunpack.c.l.b16 %v3363
          %v3416 = vunpack.c.h.b16 %v3363
          %v3417 = vunpack.c.l.b16 %v3364
          %v3418 = vunpack.c.h.b16 %v3364
          %v3419 = vunpack.c.l.b16 %v3365
          %v3420 = vunpack.c.h.b16 %v3365
          %v3421 = vunpack.c.l.b16 %v3366
          %v3422 = vunpack.c.h.b16 %v3366
          %v3423 = vunpack.c.l.b16 %v3367
          %v3424 = vunpack.c.h.b16 %v3367
          %v3425 = vunpack.c.l.b16 %v3368
          %v3426 = vunpack.c.h.b16 %v3368
          %v3427 = vunpack.c.l.b16 %v3369
          %v3428 = vunpack.c.h.b16 %v3369
          %v3429 = vunpack.c.l.b16 %v3370
          %v3430 = vunpack.c.h.b16 %v3370
          %v3431 = vunpack.c.l.b16 %v3371
          %v3432 = vunpack.c.h.b16 %v3371
          %v3433 = vpack.c.b16 %v3403, %v3401
          %v3434 = vpack.c.b16 %v3404, %v3402
          %v3435 = vpack.c.b16 %v3407, %v3405
          %v3436 = vpack.c.b16 %v3408, %v3406
          %v3437 = vpack.c.b16 %v3411, %v3409
          %v3438 = vpack.c.b16 %v3412, %v3410
          %v3439 = vpack.c.b16 %v3415, %v3413
          %v3440 = vpack.c.b16 %v3416, %v3414
          %v3441 = vpack.c.b16 %v3419, %v3417
          %v3442 = vpack.c.b16 %v3420, %v3418
          %v3443 = vpack.c.b16 %v3423, %v3421
          %v3444 = vpack.c.b16 %v3424, %v3422
          %v3445 = vpack.c.b16 %v3427, %v3425
          %v3446 = vpack.c.b16 %v3428, %v3426
          %v3447 = vpack.c.b16 %v3431, %v3429
          %v3448 = vpack.c.b16 %v3432, %v3430
          %3465 = vmatprep.subr.bf16.mxu0 %v3448
          %3466 = vmatpush1.bf16.msra.mxu0 %v3447
          %3467 = vmatprep.subr.bf16.mxu0 %v3446
          %3468 = vmatpush1.bf16.msra.mxu0 %v3445
          %3469 = vmatprep.subr.bf16.mxu0 %v3444
          %3470 = vmatpush1.bf16.msra.mxu0 %v3443
          %3471 = vmatprep.subr.bf16.mxu0 %v3442
          %3472 = vmatpush1.bf16.msra.mxu0 %v3441
          %3473 = vmatprep.subr.bf16.mxu0 %v3440
          %3474 = vmatpush1.bf16.msra.mxu0 %v3439
          %3475 = vmatprep.subr.bf16.mxu0 %v3438
          %3476 = vmatpush1.bf16.msra.mxu0 %v3437
          %3477 = vmatprep.subr.bf16.mxu0 %v3436
          %3478 = vmatpush1.bf16.msra.mxu0 %v3435
          %3479 = vmatprep.subr.bf16.mxu0 %v3434
          %3480 = vmatpush1.bf16.msra.mxu0 %v3433
          %3481 = vmatprep.subr.bf16.mxu0 0
          %3482 = vmatpush2.bf16.msra.mxu0 0
          %3483 = vmatprep.subr.bf16.mxu0 0
          %3484 = vmatpush2.bf16.msra.mxu0 0
          %3485 = vmatprep.subr.bf16.mxu0 0
          %3486 = vmatpush2.bf16.msra.mxu0 0
          %3487 = vmatprep.subr.bf16.mxu0 0
          %3488 = vmatpush2.bf16.msra.mxu0 0
          %3489 = vmatprep.subr.bf16.mxu0 0
          %3490 = vmatpush2.bf16.msra.mxu0 0
          %3491 = vmatprep.subr.bf16.mxu0 0
          %3492 = vmatpush2.bf16.msra.mxu0 0
          %3493 = vmatprep.subr.bf16.mxu0 0
          %3494 = vmatpush2.bf16.msra.mxu0 0
          %3495 = vmatprep.subr.bf16.mxu0 0
          %3496 = vmatpush2.bf16.msra.mxu0 0
          %3497 = vmatprep.mubr.bf16.mxu0 0
          %3498 = vmatmul.mubr.bf16.gmra.mxu0 %v3383
          %v3499 = vpop.f32.mrf.mxu0
          %v3500 = vadd.f32 0.0, %v3499
          %v3501 = vpop.f32.mrf.mxu0
          %v3502 = vadd.f32 0.0, %v3501
          %v3503 = vpop.f32.mrf.mxu0
          %v3504 = vpop.f32.mrf.mxu0
          %3505 = vdwg.mxu0
          %v3522 = vunpack.c.l.b16 %v3338
          %v3523 = vunpack.c.h.b16 %v3338
          %v3524 = vunpack.c.l.b16 %v3339
          %v3525 = vunpack.c.h.b16 %v3339
          %v3526 = vunpack.c.l.b16 %v3340
          %v3527 = vunpack.c.h.b16 %v3340
          %v3528 = vunpack.c.l.b16 %v3341
          %v3529 = vunpack.c.h.b16 %v3341
          %v3530 = vunpack.c.l.b16 %v3342
          %v3531 = vunpack.c.h.b16 %v3342
          %v3532 = vunpack.c.l.b16 %v3343
          %v3533 = vunpack.c.h.b16 %v3343
          %v3534 = vunpack.c.l.b16 %v3344
          %v3535 = vunpack.c.h.b16 %v3344
          %v3536 = vunpack.c.l.b16 %v3345
          %v3537 = vunpack.c.h.b16 %v3345
          %v3538 = vunpack.c.l.b16 %v3346
          %v3539 = vunpack.c.h.b16 %v3346
          %v3540 = vunpack.c.l.b16 %v3347
          %v3541 = vunpack.c.h.b16 %v3347
          %v3542 = vunpack.c.l.b16 %v3348
          %v3543 = vunpack.c.h.b16 %v3348
          %v3544 = vunpack.c.l.b16 %v3349
          %v3545 = vunpack.c.h.b16 %v3349
          %v3546 = vunpack.c.l.b16 %v3350
          %v3547 = vunpack.c.h.b16 %v3350
          %v3548 = vunpack.c.l.b16 %v3351
          %v3549 = vunpack.c.h.b16 %v3351
          %v3550 = vunpack.c.l.b16 %v3352
          %v3551 = vunpack.c.h.b16 %v3352
          %v3552 = vunpack.c.l.b16 %v3353
          %v3553 = vunpack.c.h.b16 %v3353
          %v3554 = vpack.c.b16 %v3524, %v3522
          %v3555 = vpack.c.b16 %v3525, %v3523
          %v3556 = vpack.c.b16 %v3528, %v3526
          %v3557 = vpack.c.b16 %v3529, %v3527
          %v3558 = vpack.c.b16 %v3532, %v3530
          %v3559 = vpack.c.b16 %v3533, %v3531
          %v3560 = vpack.c.b16 %v3536, %v3534
          %v3561 = vpack.c.b16 %v3537, %v3535
          %v3562 = vpack.c.b16 %v3540, %v3538
          %v3563 = vpack.c.b16 %v3541, %v3539
          %v3564 = vpack.c.b16 %v3544, %v3542
          %v3565 = vpack.c.b16 %v3545, %v3543
          %v3566 = vpack.c.b16 %v3548, %v3546
          %v3567 = vpack.c.b16 %v3549, %v3547
          %v3568 = vpack.c.b16 %v3552, %v3550
          %v3569 = vpack.c.b16 %v3553, %v3551
          %3586 = vmatprep.subr.bf16.mxu0 %v3569
          %3587 = vmatpush1.bf16.msra.mxu0 %v3568
          %3588 = vmatprep.subr.bf16.mxu0 %v3567
          %3589 = vmatpush1.bf16.msra.mxu0 %v3566
          %3590 = vmatprep.subr.bf16.mxu0 %v3565
          %3591 = vmatpush1.bf16.msra.mxu0 %v3564
          %3592 = vmatprep.subr.bf16.mxu0 %v3563
          %3593 = vmatpush1.bf16.msra.mxu0 %v3562
          %3594 = vmatprep.subr.bf16.mxu0 %v3561
          %3595 = vmatpush1.bf16.msra.mxu0 %v3560
          %3596 = vmatprep.subr.bf16.mxu0 %v3559
          %3597 = vmatpush1.bf16.msra.mxu0 %v3558
          %3598 = vmatprep.subr.bf16.mxu0 %v3557
          %3599 = vmatpush1.bf16.msra.mxu0 %v3556
          %3600 = vmatprep.subr.bf16.mxu0 %v3555
          %3601 = vmatpush1.bf16.msra.mxu0 %v3554
          %3602 = vmatprep.subr.bf16.mxu0 0
          %3603 = vmatpush2.bf16.msra.mxu0 0
          %3604 = vmatprep.subr.bf16.mxu0 0
          %3605 = vmatpush2.bf16.msra.mxu0 0
          %3606 = vmatprep.subr.bf16.mxu0 0
          %3607 = vmatpush2.bf16.msra.mxu0 0
          %3608 = vmatprep.subr.bf16.mxu0 0
          %3609 = vmatpush2.bf16.msra.mxu0 0
          %3610 = vmatprep.subr.bf16.mxu0 0
          %3611 = vmatpush2.bf16.msra.mxu0 0
          %3612 = vmatprep.subr.bf16.mxu0 0
          %3613 = vmatpush2.bf16.msra.mxu0 0
          %3614 = vmatprep.subr.bf16.mxu0 0
          %3615 = vmatpush2.bf16.msra.mxu0 0
          %3616 = vmatprep.subr.bf16.mxu0 0
          %3617 = vmatpush2.bf16.msra.mxu0 0
          %3618 = vmatprep.mubr.bf16.mxu0 0
          %3619 = vmatmul.mubr.bf16.gmra.mxu0 %v3337
          %v3620 = vpop.f32.mrf.mxu0
          %v3621 = vadd.f32 %v3500, %v3620
          %v3622 = vpop.f32.mrf.mxu0
          %v3623 = vadd.f32 %v3502, %v3622
          %v3624 = vpop.f32.mrf.mxu0
          %v3625 = vpop.f32.mrf.mxu0
          %3626 = vdwg.mxu0
          %v3627 = vld [vmem:[#allocation3] sm:$0xe]
          %s3628 = scalar_lea.vmem %s5, 256
          %v3629 = vld [vmem:[%s3628] sm:$0xff]
          %v3630 = vld [vmem:[%s3628 + $0x8] sm:$0xff]
          %v3631 = vld [vmem:[%s3628 + $0x10] sm:$0xff]
          %v3632 = vld [vmem:[%s3628 + $0x18] sm:$0xff]
          %v3633 = vld [vmem:[%s3628 + $0x20] sm:$0xff]
          %v3634 = vld [vmem:[%s3628 + $0x28] sm:$0xff]
          %v3635 = vld [vmem:[%s3628 + $0x30] sm:$0xff]
          %v3636 = vld [vmem:[%s3628 + $0x38] sm:$0xff]
          %v3637 = vld [vmem:[%s3628 + $0x40] sm:$0xff]
          %v3638 = vld [vmem:[%s3628 + $0x48] sm:$0xff]
          %v3639 = vld [vmem:[%s3628 + $0x50] sm:$0xff]
          %v3640 = vld [vmem:[%s3628 + $0x58] sm:$0xff]
          %v3641 = vld [vmem:[%s3628 + $0x60] sm:$0xff]
          %v3642 = vld [vmem:[%s3628 + $0x68] sm:$0xff]
          %v3643 = vld [vmem:[%s3628 + $0x70] sm:$0xff]
          %v3644 = vld [vmem:[%s3628 + $0x78] sm:$0xff]
          %v3646 = vunpack.c.l.b16 %v3627
          %v3647 = vpack.c.b16 %v3375, %v3646
          %v3648 = vrot.slane %v3647, 1
          %v3666 = vunpack.c.l.b16 %v3629
          %v3667 = vunpack.c.h.b16 %v3629
          %v3668 = vunpack.c.l.b16 %v3630
          %v3669 = vunpack.c.h.b16 %v3630
          %v3670 = vunpack.c.l.b16 %v3631
          %v3671 = vunpack.c.h.b16 %v3631
          %v3672 = vunpack.c.l.b16 %v3632
          %v3673 = vunpack.c.h.b16 %v3632
          %v3674 = vunpack.c.l.b16 %v3633
          %v3675 = vunpack.c.h.b16 %v3633
          %v3676 = vunpack.c.l.b16 %v3634
          %v3677 = vunpack.c.h.b16 %v3634
          %v3678 = vunpack.c.l.b16 %v3635
          %v3679 = vunpack.c.h.b16 %v3635
          %v3680 = vunpack.c.l.b16 %v3636
          %v3681 = vunpack.c.h.b16 %v3636
          %v3682 = vunpack.c.l.b16 %v3637
          %v3683 = vunpack.c.h.b16 %v3637
          %v3684 = vunpack.c.l.b16 %v3638
          %v3685 = vunpack.c.h.b16 %v3638
          %v3686 = vunpack.c.l.b16 %v3639
          %v3687 = vunpack.c.h.b16 %v3639
          %v3688 = vunpack.c.l.b16 %v3640
          %v3689 = vunpack.c.h.b16 %v3640
          %v3690 = vunpack.c.l.b16 %v3641
          %v3691 = vunpack.c.h.b16 %v3641
          %v3692 = vunpack.c.l.b16 %v3642
          %v3693 = vunpack.c.h.b16 %v3642
          %v3694 = vunpack.c.l.b16 %v3643
          %v3695 = vunpack.c.h.b16 %v3643
          %v3696 = vunpack.c.l.b16 %v3644
          %v3697 = vunpack.c.h.b16 %v3644
          %v3698 = vpack.c.b16 %v3668, %v3666
          %v3699 = vpack.c.b16 %v3669, %v3667
          %v3700 = vpack.c.b16 %v3672, %v3670
          %v3701 = vpack.c.b16 %v3673, %v3671
          %v3702 = vpack.c.b16 %v3676, %v3674
          %v3703 = vpack.c.b16 %v3677, %v3675
          %v3704 = vpack.c.b16 %v3680, %v3678
          %v3705 = vpack.c.b16 %v3681, %v3679
          %v3706 = vpack.c.b16 %v3684, %v3682
          %v3707 = vpack.c.b16 %v3685, %v3683
          %v3708 = vpack.c.b16 %v3688, %v3686
          %v3709 = vpack.c.b16 %v3689, %v3687
          %v3710 = vpack.c.b16 %v3692, %v3690
          %v3711 = vpack.c.b16 %v3693, %v3691
          %v3712 = vpack.c.b16 %v3696, %v3694
          %v3713 = vpack.c.b16 %v3697, %v3695
          %3730 = vmatprep.subr.bf16.mxu0 %v3713
          %3731 = vmatpush1.bf16.msra.mxu0 %v3712
          %3732 = vmatprep.subr.bf16.mxu0 %v3711
          %3733 = vmatpush1.bf16.msra.mxu0 %v3710
          %3734 = vmatprep.subr.bf16.mxu0 %v3709
          %3735 = vmatpush1.bf16.msra.mxu0 %v3708
          %3736 = vmatprep.subr.bf16.mxu0 %v3707
          %3737 = vmatpush1.bf16.msra.mxu0 %v3706
          %3738 = vmatprep.subr.bf16.mxu0 %v3705
          %3739 = vmatpush1.bf16.msra.mxu0 %v3704
          %3740 = vmatprep.subr.bf16.mxu0 %v3703
          %3741 = vmatpush1.bf16.msra.mxu0 %v3702
          %3742 = vmatprep.subr.bf16.mxu0 %v3701
          %3743 = vmatpush1.bf16.msra.mxu0 %v3700
          %3744 = vmatprep.subr.bf16.mxu0 %v3699
          %3745 = vmatpush1.bf16.msra.mxu0 %v3698
          %3746 = vmatprep.subr.bf16.mxu0 0
          %3747 = vmatpush2.bf16.msra.mxu0 0
          %3748 = vmatprep.subr.bf16.mxu0 0
          %3749 = vmatpush2.bf16.msra.mxu0 0
          %3750 = vmatprep.subr.bf16.mxu0 0
          %3751 = vmatpush2.bf16.msra.mxu0 0
          %3752 = vmatprep.subr.bf16.mxu0 0
          %3753 = vmatpush2.bf16.msra.mxu0 0
          %3754 = vmatprep.subr.bf16.mxu0 0
          %3755 = vmatpush2.bf16.msra.mxu0 0
          %3756 = vmatprep.subr.bf16.mxu0 0
          %3757 = vmatpush2.bf16.msra.mxu0 0
          %3758 = vmatprep.subr.bf16.mxu0 0
          %3759 = vmatpush2.bf16.msra.mxu0 0
          %3760 = vmatprep.subr.bf16.mxu0 0
          %3761 = vmatpush2.bf16.msra.mxu0 0
          %3762 = vmatprep.mubr.bf16.mxu0 0
          %3763 = vmatmul.mubr.bf16.gmra.mxu0 %v3648
          %v3764 = vpop.f32.mrf.mxu0
          %v3765 = vadd.f32 0.0, %v3764
          %v3766 = vpop.f32.mrf.mxu0
          %v3767 = vadd.f32 0.0, %v3766
          %v3768 = vpop.f32.mrf.mxu0
          %v3769 = vpop.f32.mrf.mxu0
          %3770 = vdwg.mxu0
          %v3771 = vadd.f32 %v3621, %v3765
          %v3772 = vadd.f32 %v3623, %v3767
          %v3773 = vld [vmem:[#allocation3 + $0x4] sm:$0x3]
          %s3774 = scalar_lea.vmem %s5, 384
          %v3775 = vld [vmem:[%s3774] sm:$0xff]
          %v3776 = vld [vmem:[%s3774 + $0x8] sm:$0xff]
          %v3777 = vld [vmem:[%s3774 + $0x10] sm:$0xff]
          %v3778 = vld [vmem:[%s3774 + $0x18] sm:$0xff]
          %v3779 = vld [vmem:[%s3774 + $0x20] sm:$0xff]
          %v3780 = vld [vmem:[%s3774 + $0x28] sm:$0xff]
          %v3781 = vld [vmem:[%s3774 + $0x30] sm:$0xff]
          %v3782 = vld [vmem:[%s3774 + $0x38] sm:$0xff]
          %v3783 = vld [vmem:[%s3774 + $0x40] sm:$0xff]
          %v3784 = vld [vmem:[%s3774 + $0x48] sm:$0xff]
          %v3785 = vld [vmem:[%s3774 + $0x50] sm:$0xff]
          %v3786 = vld [vmem:[%s3774 + $0x58] sm:$0xff]
          %v3787 = vld [vmem:[%s3774 + $0x60] sm:$0xff]
          %v3788 = vld [vmem:[%s3774 + $0x68] sm:$0xff]
          %v3789 = vld [vmem:[%s3774 + $0x70] sm:$0xff]
          %v3790 = vld [vmem:[%s3774 + $0x78] sm:$0xff]
          %v3792 = vunpack.c.l.b16 %v3773
          %v3793 = vpack.c.b16 %v3792, %v3646
          %v3795 = vshrl.u32 %v3793, 16
          %v3797 = vrot.slane %v3795, 1
          %v3798 = vshll.u32 %v3793, 16
          %v3800 = vrot.slane %v3798, 2
          %v3801 = vor.u32 %v3797, %v3800
          %v3819 = vunpack.c.l.b16 %v3775
          %v3820 = vunpack.c.h.b16 %v3775
          %v3821 = vunpack.c.l.b16 %v3776
          %v3822 = vunpack.c.h.b16 %v3776
          %v3823 = vunpack.c.l.b16 %v3777
          %v3824 = vunpack.c.h.b16 %v3777
          %v3825 = vunpack.c.l.b16 %v3778
          %v3826 = vunpack.c.h.b16 %v3778
          %v3827 = vunpack.c.l.b16 %v3779
          %v3828 = vunpack.c.h.b16 %v3779
          %v3829 = vunpack.c.l.b16 %v3780
          %v3830 = vunpack.c.h.b16 %v3780
          %v3831 = vunpack.c.l.b16 %v3781
          %v3832 = vunpack.c.h.b16 %v3781
          %v3833 = vunpack.c.l.b16 %v3782
          %v3834 = vunpack.c.h.b16 %v3782
          %v3835 = vunpack.c.l.b16 %v3783
          %v3836 = vunpack.c.h.b16 %v3783
          %v3837 = vunpack.c.l.b16 %v3784
          %v3838 = vunpack.c.h.b16 %v3784
          %v3839 = vunpack.c.l.b16 %v3785
          %v3840 = vunpack.c.h.b16 %v3785
          %v3841 = vunpack.c.l.b16 %v3786
          %v3842 = vunpack.c.h.b16 %v3786
          %v3843 = vunpack.c.l.b16 %v3787
          %v3844 = vunpack.c.h.b16 %v3787
          %v3845 = vunpack.c.l.b16 %v3788
          %v3846 = vunpack.c.h.b16 %v3788
          %v3847 = vunpack.c.l.b16 %v3789
          %v3848 = vunpack.c.h.b16 %v3789
          %v3849 = vunpack.c.l.b16 %v3790
          %v3850 = vunpack.c.h.b16 %v3790
          %v3851 = vpack.c.b16 %v3821, %v3819
          %v3852 = vpack.c.b16 %v3822, %v3820
          %v3853 = vpack.c.b16 %v3825, %v3823
          %v3854 = vpack.c.b16 %v3826, %v3824
          %v3855 = vpack.c.b16 %v3829, %v3827
          %v3856 = vpack.c.b16 %v3830, %v3828
          %v3857 = vpack.c.b16 %v3833, %v3831
          %v3858 = vpack.c.b16 %v3834, %v3832
          %v3859 = vpack.c.b16 %v3837, %v3835
          %v3860 = vpack.c.b16 %v3838, %v3836
          %v3861 = vpack.c.b16 %v3841, %v3839
          %v3862 = vpack.c.b16 %v3842, %v3840
          %v3863 = vpack.c.b16 %v3845, %v3843
          %v3864 = vpack.c.b16 %v3846, %v3844
          %v3865 = vpack.c.b16 %v3849, %v3847
          %v3866 = vpack.c.b16 %v3850, %v3848
          %3883 = vmatprep.subr.bf16.mxu0 %v3866
          %3884 = vmatpush1.bf16.msra.mxu0 %v3865
          %3885 = vmatprep.subr.bf16.mxu0 %v3864
          %3886 = vmatpush1.bf16.msra.mxu0 %v3863
          %3887 = vmatprep.subr.bf16.mxu0 %v3862
          %3888 = vmatpush1.bf16.msra.mxu0 %v3861
          %3889 = vmatprep.subr.bf16.mxu0 %v3860
          %3890 = vmatpush1.bf16.msra.mxu0 %v3859
          %3891 = vmatprep.subr.bf16.mxu0 %v3858
          %3892 = vmatpush1.bf16.msra.mxu0 %v3857
          %3893 = vmatprep.subr.bf16.mxu0 %v3856
          %3894 = vmatpush1.bf16.msra.mxu0 %v3855
          %3895 = vmatprep.subr.bf16.mxu0 %v3854
          %3896 = vmatpush1.bf16.msra.mxu0 %v3853
          %3897 = vmatprep.subr.bf16.mxu0 %v3852
          %3898 = vmatpush1.bf16.msra.mxu0 %v3851
          %3899 = vmatprep.subr.bf16.mxu0 0
          %3900 = vmatpush2.bf16.msra.mxu0 0
          %3901 = vmatprep.subr.bf16.mxu0 0
          %3902 = vmatpush2.bf16.msra.mxu0 0
          %3903 = vmatprep.subr.bf16.mxu0 0
          %3904 = vmatpush2.bf16.msra.mxu0 0
          %3905 = vmatprep.subr.bf16.mxu0 0
          %3906 = vmatpush2.bf16.msra.mxu0 0
          %3907 = vmatprep.subr.bf16.mxu0 0
          %3908 = vmatpush2.bf16.msra.mxu0 0
          %3909 = vmatprep.subr.bf16.mxu0 0
          %3910 = vmatpush2.bf16.msra.mxu0 0
          %3911 = vmatprep.subr.bf16.mxu0 0
          %3912 = vmatpush2.bf16.msra.mxu0 0
          %3913 = vmatprep.subr.bf16.mxu0 0
          %3914 = vmatpush2.bf16.msra.mxu0 0
          %3915 = vmatprep.mubr.bf16.mxu0 0
          %3916 = vmatmul.mubr.bf16.gmra.mxu0 %v3801
          %v3917 = vpop.f32.mrf.mxu0
          %v3918 = vadd.f32 0.0, %v3917
          %v3919 = vpop.f32.mrf.mxu0
          %v3920 = vadd.f32 0.0, %v3919
          %v3921 = vpop.f32.mrf.mxu0
          %v3922 = vpop.f32.mrf.mxu0
          %3923 = vdwg.mxu0
          %v3924 = vadd.f32 %v3771, %v3918
          %v3925 = vadd.f32 %v3772, %v3920
          %v3926 = vld [vmem:[#allocation3] sm:$0xc]
          %s3927 = scalar_lea.vmem %s5, 512
          %v3928 = vld [vmem:[%s3927] sm:$0xff]
          %v3929 = vld [vmem:[%s3927 + $0x8] sm:$0xff]
          %v3930 = vld [vmem:[%s3927 + $0x10] sm:$0xff]
          %v3931 = vld [vmem:[%s3927 + $0x18] sm:$0xff]
          %v3932 = vld [vmem:[%s3927 + $0x20] sm:$0xff]
          %v3933 = vld [vmem:[%s3927 + $0x28] sm:$0xff]
          %v3934 = vld [vmem:[%s3927 + $0x30] sm:$0xff]
          %v3935 = vld [vmem:[%s3927 + $0x38] sm:$0xff]
          %v3936 = vld [vmem:[%s3927 + $0x40] sm:$0xff]
          %v3937 = vld [vmem:[%s3927 + $0x48] sm:$0xff]
          %v3938 = vld [vmem:[%s3927 + $0x50] sm:$0xff]
          %v3939 = vld [vmem:[%s3927 + $0x58] sm:$0xff]
          %v3940 = vld [vmem:[%s3927 + $0x60] sm:$0xff]
          %v3941 = vld [vmem:[%s3927 + $0x68] sm:$0xff]
          %v3942 = vld [vmem:[%s3927 + $0x70] sm:$0xff]
          %v3943 = vld [vmem:[%s3927 + $0x78] sm:$0xff]
          %v3945 = vunpack.c.l.b16 %v3926
          %v3946 = vpack.c.b16 %v3792, %v3945
          %v3947 = vrot.slane %v3946, 2
          %v3965 = vunpack.c.l.b16 %v3928
          %v3966 = vunpack.c.h.b16 %v3928
          %v3967 = vunpack.c.l.b16 %v3929
          %v3968 = vunpack.c.h.b16 %v3929
          %v3969 = vunpack.c.l.b16 %v3930
          %v3970 = vunpack.c.h.b16 %v3930
          %v3971 = vunpack.c.l.b16 %v3931
          %v3972 = vunpack.c.h.b16 %v3931
          %v3973 = vunpack.c.l.b16 %v3932
          %v3974 = vunpack.c.h.b16 %v3932
          %v3975 = vunpack.c.l.b16 %v3933
          %v3976 = vunpack.c.h.b16 %v3933
          %v3977 = vunpack.c.l.b16 %v3934
          %v3978 = vunpack.c.h.b16 %v3934
          %v3979 = vunpack.c.l.b16 %v3935
          %v3980 = vunpack.c.h.b16 %v3935
          %v3981 = vunpack.c.l.b16 %v3936
          %v3982 = vunpack.c.h.b16 %v3936
          %v3983 = vunpack.c.l.b16 %v3937
          %v3984 = vunpack.c.h.b16 %v3937
          %v3985 = vunpack.c.l.b16 %v3938
          %v3986 = vunpack.c.h.b16 %v3938
          %v3987 = vunpack.c.l.b16 %v3939
          %v3988 = vunpack.c.h.b16 %v3939
          %v3989 = vunpack.c.l.b16 %v3940
          %v3990 = vunpack.c.h.b16 %v3940
          %v3991 = vunpack.c.l.b16 %v3941
          %v3992 = vunpack.c.h.b16 %v3941
          %v3993 = vunpack.c.l.b16 %v3942
          %v3994 = vunpack.c.h.b16 %v3942
          %v3995 = vunpack.c.l.b16 %v3943
          %v3996 = vunpack.c.h.b16 %v3943
          %v3997 = vpack.c.b16 %v3967, %v3965
          %v3998 = vpack.c.b16 %v3968, %v3966
          %v3999 = vpack.c.b16 %v3971, %v3969
          %v4000 = vpack.c.b16 %v3972, %v3970
          %v4001 = vpack.c.b16 %v3975, %v3973
          %v4002 = vpack.c.b16 %v3976, %v3974
          %v4003 = vpack.c.b16 %v3979, %v3977
          %v4004 = vpack.c.b16 %v3980, %v3978
          %v4005 = vpack.c.b16 %v3983, %v3981
          %v4006 = vpack.c.b16 %v3984, %v3982
          %v4007 = vpack.c.b16 %v3987, %v3985
          %v4008 = vpack.c.b16 %v3988, %v3986
          %v4009 = vpack.c.b16 %v3991, %v3989
          %v4010 = vpack.c.b16 %v3992, %v3990
          %v4011 = vpack.c.b16 %v3995, %v3993
          %v4012 = vpack.c.b16 %v3996, %v3994
          %4029 = vmatprep.subr.bf16.mxu0 %v4012
          %4030 = vmatpush1.bf16.msra.mxu0 %v4011
          %4031 = vmatprep.subr.bf16.mxu0 %v4010
          %4032 = vmatpush1.bf16.msra.mxu0 %v4009
          %4033 = vmatprep.subr.bf16.mxu0 %v4008
          %4034 = vmatpush1.bf16.msra.mxu0 %v4007
          %4035 = vmatprep.subr.bf16.mxu0 %v4006
          %4036 = vmatpush1.bf16.msra.mxu0 %v4005
          %4037 = vmatprep.subr.bf16.mxu0 %v4004
          %4038 = vmatpush1.bf16.msra.mxu0 %v4003
          %4039 = vmatprep.subr.bf16.mxu0 %v4002
          %4040 = vmatpush1.bf16.msra.mxu0 %v4001
          %4041 = vmatprep.subr.bf16.mxu0 %v4000
          %4042 = vmatpush1.bf16.msra.mxu0 %v3999
          %4043 = vmatprep.subr.bf16.mxu0 %v3998
          %4044 = vmatpush1.bf16.msra.mxu0 %v3997
          %4045 = vmatprep.subr.bf16.mxu0 0
          %4046 = vmatpush2.bf16.msra.mxu0 0
          %4047 = vmatprep.subr.bf16.mxu0 0
          %4048 = vmatpush2.bf16.msra.mxu0 0
          %4049 = vmatprep.subr.bf16.mxu0 0
          %4050 = vmatpush2.bf16.msra.mxu0 0
          %4051 = vmatprep.subr.bf16.mxu0 0
          %4052 = vmatpush2.bf16.msra.mxu0 0
          %4053 = vmatprep.subr.bf16.mxu0 0
          %4054 = vmatpush2.bf16.msra.mxu0 0
          %4055 = vmatprep.subr.bf16.mxu0 0
          %4056 = vmatpush2.bf16.msra.mxu0 0
          %4057 = vmatprep.subr.bf16.mxu0 0
          %4058 = vmatpush2.bf16.msra.mxu0 0
          %4059 = vmatprep.subr.bf16.mxu0 0
          %4060 = vmatpush2.bf16.msra.mxu0 0
          %4061 = vmatprep.mubr.bf16.mxu0 0
          %4062 = vmatmul.mubr.bf16.gmra.mxu0 %v3947
          %v4063 = vpop.f32.mrf.mxu0
          %v4064 = vadd.f32 0.0, %v4063
          %v4065 = vpop.f32.mrf.mxu0
          %v4066 = vadd.f32 0.0, %v4065
          %v4067 = vpop.f32.mrf.mxu0
          %v4068 = vpop.f32.mrf.mxu0
          %4069 = vdwg.mxu0
          %v4070 = vadd.f32 %v3924, %v4064
          %v4071 = vadd.f32 %v3925, %v4066
          %v4072 = vld [vmem:[#allocation3 + $0x4] sm:$0x7]
          %s4073 = scalar_lea.vmem %s5, 640
          %v4074 = vld [vmem:[%s4073] sm:$0xff]
          %v4075 = vld [vmem:[%s4073 + $0x8] sm:$0xff]
          %v4076 = vld [vmem:[%s4073 + $0x10] sm:$0xff]
          %v4077 = vld [vmem:[%s4073 + $0x18] sm:$0xff]
          %v4078 = vld [vmem:[%s4073 + $0x20] sm:$0xff]
          %v4079 = vld [vmem:[%s4073 + $0x28] sm:$0xff]
          %v4080 = vld [vmem:[%s4073 + $0x30] sm:$0xff]
          %v4081 = vld [vmem:[%s4073 + $0x38] sm:$0xff]
          %v4082 = vld [vmem:[%s4073 + $0x40] sm:$0xff]
          %v4083 = vld [vmem:[%s4073 + $0x48] sm:$0xff]
          %v4084 = vld [vmem:[%s4073 + $0x50] sm:$0xff]
          %v4085 = vld [vmem:[%s4073 + $0x58] sm:$0xff]
          %v4086 = vld [vmem:[%s4073 + $0x60] sm:$0xff]
          %v4087 = vld [vmem:[%s4073 + $0x68] sm:$0xff]
          %v4088 = vld [vmem:[%s4073 + $0x70] sm:$0xff]
          %v4089 = vld [vmem:[%s4073 + $0x78] sm:$0xff]
          %v4091 = vunpack.c.l.b16 %v4072
          %v4092 = vpack.c.b16 %v4091, %v3945
          %v4094 = vshrl.u32 %v4092, 16
          %v4096 = vrot.slane %v4094, 2
          %v4097 = vshll.u32 %v4092, 16
          %v4099 = vrot.slane %v4097, 3
          %v4100 = vor.u32 %v4096, %v4099
          %v4118 = vunpack.c.l.b16 %v4074
          %v4119 = vunpack.c.h.b16 %v4074
          %v4120 = vunpack.c.l.b16 %v4075
          %v4121 = vunpack.c.h.b16 %v4075
          %v4122 = vunpack.c.l.b16 %v4076
          %v4123 = vunpack.c.h.b16 %v4076
          %v4124 = vunpack.c.l.b16 %v4077
          %v4125 = vunpack.c.h.b16 %v4077
          %v4126 = vunpack.c.l.b16 %v4078
          %v4127 = vunpack.c.h.b16 %v4078
          %v4128 = vunpack.c.l.b16 %v4079
          %v4129 = vunpack.c.h.b16 %v4079
          %v4130 = vunpack.c.l.b16 %v4080
          %v4131 = vunpack.c.h.b16 %v4080
          %v4132 = vunpack.c.l.b16 %v4081
          %v4133 = vunpack.c.h.b16 %v4081
          %v4134 = vunpack.c.l.b16 %v4082
          %v4135 = vunpack.c.h.b16 %v4082
          %v4136 = vunpack.c.l.b16 %v4083
          %v4137 = vunpack.c.h.b16 %v4083
          %v4138 = vunpack.c.l.b16 %v4084
          %v4139 = vunpack.c.h.b16 %v4084
          %v4140 = vunpack.c.l.b16 %v4085
          %v4141 = vunpack.c.h.b16 %v4085
          %v4142 = vunpack.c.l.b16 %v4086
          %v4143 = vunpack.c.h.b16 %v4086
          %v4144 = vunpack.c.l.b16 %v4087
          %v4145 = vunpack.c.h.b16 %v4087
          %v4146 = vunpack.c.l.b16 %v4088
          %v4147 = vunpack.c.h.b16 %v4088
          %v4148 = vunpack.c.l.b16 %v4089
          %v4149 = vunpack.c.h.b16 %v4089
          %v4150 = vpack.c.b16 %v4120, %v4118
          %v4151 = vpack.c.b16 %v4121, %v4119
          %v4152 = vpack.c.b16 %v4124, %v4122
          %v4153 = vpack.c.b16 %v4125, %v4123
          %v4154 = vpack.c.b16 %v4128, %v4126
          %v4155 = vpack.c.b16 %v4129, %v4127
          %v4156 = vpack.c.b16 %v4132, %v4130
          %v4157 = vpack.c.b16 %v4133, %v4131
          %v4158 = vpack.c.b16 %v4136, %v4134
          %v4159 = vpack.c.b16 %v4137, %v4135
          %v4160 = vpack.c.b16 %v4140, %v4138
          %v4161 = vpack.c.b16 %v4141, %v4139
          %v4162 = vpack.c.b16 %v4144, %v4142
          %v4163 = vpack.c.b16 %v4145, %v4143
          %v4164 = vpack.c.b16 %v4148, %v4146
          %v4165 = vpack.c.b16 %v4149, %v4147
          %4182 = vmatprep.subr.bf16.mxu0 %v4165
          %4183 = vmatpush1.bf16.msra.mxu0 %v4164
          %4184 = vmatprep.subr.bf16.mxu0 %v4163
          %4185 = vmatpush1.bf16.msra.mxu0 %v4162
          %4186 = vmatprep.subr.bf16.mxu0 %v4161
          %4187 = vmatpush1.bf16.msra.mxu0 %v4160
          %4188 = vmatprep.subr.bf16.mxu0 %v4159
          %4189 = vmatpush1.bf16.msra.mxu0 %v4158
          %4190 = vmatprep.subr.bf16.mxu0 %v4157
          %4191 = vmatpush1.bf16.msra.mxu0 %v4156
          %4192 = vmatprep.subr.bf16.mxu0 %v4155
          %4193 = vmatpush1.bf16.msra.mxu0 %v4154
          %4194 = vmatprep.subr.bf16.mxu0 %v4153
          %4195 = vmatpush1.bf16.msra.mxu0 %v4152
          %4196 = vmatprep.subr.bf16.mxu0 %v4151
          %4197 = vmatpush1.bf16.msra.mxu0 %v4150
          %4198 = vmatprep.subr.bf16.mxu0 0
          %4199 = vmatpush2.bf16.msra.mxu0 0
          %4200 = vmatprep.subr.bf16.mxu0 0
          %4201 = vmatpush2.bf16.msra.mxu0 0
          %4202 = vmatprep.subr.bf16.mxu0 0
          %4203 = vmatpush2.bf16.msra.mxu0 0
          %4204 = vmatprep.subr.bf16.mxu0 0
          %4205 = vmatpush2.bf16.msra.mxu0 0
          %4206 = vmatprep.subr.bf16.mxu0 0
          %4207 = vmatpush2.bf16.msra.mxu0 0
          %4208 = vmatprep.subr.bf16.mxu0 0
          %4209 = vmatpush2.bf16.msra.mxu0 0
          %4210 = vmatprep.subr.bf16.mxu0 0
          %4211 = vmatpush2.bf16.msra.mxu0 0
          %4212 = vmatprep.subr.bf16.mxu0 0
          %4213 = vmatpush2.bf16.msra.mxu0 0
          %4214 = vmatprep.mubr.bf16.mxu0 0
          %4215 = vmatmul.mubr.bf16.gmra.mxu0 %v4100
          %v4216 = vpop.f32.mrf.mxu0
          %v4217 = vadd.f32 0.0, %v4216
          %v4218 = vpop.f32.mrf.mxu0
          %v4219 = vadd.f32 0.0, %v4218
          %v4220 = vpop.f32.mrf.mxu0
          %v4221 = vpop.f32.mrf.mxu0
          %4222 = vdwg.mxu0
          %v4223 = vadd.f32 %v4070, %v4217
          %v4224 = vadd.f32 %v4071, %v4219
          %v4225 = vld [vmem:[%s6] sm:$0x3]
          %v4227 = vlaneseq
          %v4228 = vshrl.u32 %v4227, 7
          %v4229 = vsub.s32 0, %v4228
          %v4230 = vrot.slane %v4225, %v4229
          %v4231 = vlaneseq
          %v4232 = vshrl.u32 %v4231, 7
          %v4233 = vsub.s32 1, %v4232
          %v4234 = vrot.slane %v4225, %v4233
          %v4237 = vadd.f32 %v4223, %v4230
          %v4238 = vadd.f32 %v4224, %v4234
          %vm4239 = vcmp.ge.f32.partialorder %v4237, 0.0
          %vm4240 = vcmp.ge.f32.partialorder %v4238, 0.0
          %v4241 = vmul.f32 %v4237, 0.01
          %v4242 = vmul.f32 %v4238, 0.01
          %v4243 = vsel %vm4239, %v4237, %v4241
          %v4244 = vsel %vm4240, %v4238, %v4242
          %v4245 = vrot.slane %v4243, 4
          %v4246 = vmax.f32 %v4243, %v4245
          %v4247 = vrot.slane %v4246, 2
          %v4248 = vmax.f32 %v4246, %v4247
          %v4249 = vrot.slane %v4248, 1
          %v4250 = vmax.f32 %v4248, %v4249
          %v4251 = vrot.slane %v4244, 4
          %v4252 = vmax.f32 %v4244, %v4251
          %v4253 = vrot.slane %v4252, 2
          %v4254 = vmax.f32 %v4252, %v4253
          %v4255 = vrot.slane %v4254, 1
          %v4256 = vmax.f32 %v4254, %v4255
          %v4259 = vcombine.low %v4250, %v4256
          %v4261 = vunpack.c.l.s4 1966171168
          %v4262 = vunpack.c.0.s8 %v4261
          %v4263 = vlaneseq
          %v4264 = vshrl.u32 %v4263, 7
          %v4265 = vsub.s32 %v4262, %v4264
          %v4266 = vrot.slane %v4259, %v4265
          %v4268 = vunpack.c.l.s4 1966171168
          %v4269 = vunpack.c.0.s8 %v4268
          %v4270 = vlaneseq
          %v4271 = vshrl.u32 %v4270, 7
          %v4272 = vsub.s32 %v4269, %v4271
          %v4273 = vrot.slane %v4266, %v4272
          %v4275 = vlaneseq
          %vm4276 = vcmp.ge.s32.totalorder %v4275, 0
          %vm4277 = vcmp.lt.s32.totalorder %v4275, 256
          %vm4278 = vmand %vm4276, %vm4277
          %4279 = vst.msk [vmem:[%s294] sm:$0x3] %vm4278, %v4273
        $region56: #{audio_model_forward.1} parent=47 // pred_fallthru
          _
        %s4280 = sand.u32 %s197, 1
        %s4281 = scalar_lea.sflag [#allocation5], %s4280
        %s4282 = sand.u32 %s197, 1
        %s4283 = smul.addr %s4282, 2
        %s4284 = scalar_lea.vmem [#allocation4], %s4283
        // Predicated region
        $region57: #{audio_model_forward.1} parent=47 // pred_check
          %p4285 = pneg %p207
        $region58: #{audio_model_forward.1} parent=47 // pred_check_branch
          %4287 = sbr.rel (%p4285) target = $region60
        $region59: #{audio_model_forward.1} parent=47 // pred_region
          %s4289 = ssub.s32 32, 32
          %4290 = vsyncadd %s4281, %s4289
          %s4291 = smul.addr %s25, 2
          %s4292 = smul.addr %s4291, 16
          %s4293 = scalar_lea.hbm %s7, %s4292
          %s4295 = sshll.u32 %s4284, 4
          %s4296 = int_to_ptr.vmem [resolvable:$true] %s4295
          %4298 = dma.vmem_to_hbm [thread:$0]  %s4296, 32, %s4293, %s4281
        $region60: #{audio_model_forward.1} parent=47 // pred_fallthru
          _
      $region48: #{audio_model_forward.1} parent=5 // pred_fallthru
        _
      %p4299 = scmp.le.s32.totalorder 2, %s16
      // Predicated region
      $region61: #{audio_model_forward.1} parent=5 // pred_check
        %p4300 = pneg %p4299
      $region62: #{audio_model_forward.1} parent=5 // pred_check_branch
        %4302 = sbr.rel (%p4300) target = $region64
      $region63: #{audio_model_forward.1} parent=5 // pred_region
        %s4303 = ssub.s32 %s16, 2
        // Predicated region
        $region65: #{audio_model_forward.1} parent=63 // pred_check
          %p4304 = pneg %p213
        $region66: #{audio_model_forward.1} parent=63 // pred_check_branch
          %4306 = sbr.rel (%p4304) target = $region68
        $region67: #{audio_model_forward.1} parent=63 // pred_region
          %s4307 = sand.u32 %s198, 1
          %s4308 = scalar_lea.sflag [#allocation5], %s4307
          %s4309 = sand.u32 %s198, 1
          %s4310 = smul.addr %s4309, 2
          %s4311 = scalar_lea.vmem [#allocation4], %s4310
          %4312 = dma.done %s4308, 32
        $region68: #{audio_model_forward.1} parent=63 // pred_fallthru
          _
      $region64: #{audio_model_forward.1} parent=5 // pred_fallthru
        _
    $region6: #{audio_model_forward.1} parent=1 // loop_footer
      %s20 = sadd.s32 1, %s16
    $region7: #{audio_model_forward.1} parent=1 // loop_footer_branch
      %15 = sbr.rel target = $region3
    $region8: #{audio_model_forward.1} parent=1 // loop_exit
      _
    %4313 = vsyncpa [#allocation5], 1
    %s4314 = scalar_lea.sflag [#allocation5], 1
    %4315 = vsyncpa %s4314, 1

</llo_original>
